<compile_context>
chip_gen: v7x
topology: tpu7x:2x2x1
jax: 0.10.0
libtpu: 0.0.40
codegen_flags: <defaults>
</compile_context>

<pallas_src>
import jax
import jax.numpy as jnp
from jax import lax
from jax.experimental import pallas as pl
from jax.experimental.pallas import tpu as pltpu


def _round_up(x, m):
    return ((x + m - 1) // m) * m


def _largest_tile(dim, cap, unit=128):
    """Largest multiple-of-`unit` divisor of `dim` that is <= cap (dim % unit == 0)."""
    if dim <= cap:
        return dim
    t = (cap // unit) * unit
    while dim % t:
        t -= unit
    return t


def _gelu_tanh(x):
    # tanh-form GELU: a handful of VPU ops + one EUP tanh (separate issue slot).
    c = 0.7978845608028654  # sqrt(2/pi)
    return 0.5 * x * (1.0 + jnp.tanh(c * (x + 0.044715 * x * x * x)))


# -----------------------------------------------------------------------------
# Fused kernel:  o = GELU(x*scale + shift) @ W + b   (+ optional column stats)
#   scale = gamma * rsqrt(var + eps), shift = beta - mean * scale  (BN folded)
# -----------------------------------------------------------------------------
def _make_kernel(*, fuse_prologue, compute_stats, out_dtype, tm, m_valid, needs_mask):
    def kernel(*refs):
        if fuse_prologue:
            x_ref, w_ref, b_ref, scale_ref, shift_ref = refs[:5]
            refs = refs[5:]
        else:
            x_ref, w_ref, b_ref = refs[:3]
            refs = refs[3:]
        if compute_stats:
            o_ref, sum_ref, sq_ref, acc_ref = refs
        else:
            o_ref, acc_ref = refs

        k = pl.program_id(2)

        @pl.when(k == 0)
        def _init():
            acc_ref[...] = jnp.zeros_like(acc_ref)

        x = x_ref[...]                                     # (tm, tk) bf16
        if fuse_prologue:
            xf = x.astype(jnp.float32)
            xf = xf * scale_ref[...] + shift_ref[...]      # folded BN affine
            x = _gelu_tanh(xf).astype(jnp.bfloat16)

        # bf16 MXU inputs, f32 accumulation in VMEM scratch.
        acc_ref[...] += jnp.dot(x, w_ref[...], preferred_element_type=jnp.float32)

        @pl.when(k == pl.num_programs(2) - 1)
        def _fin():
            y = acc_ref[...] + b_ref[...]                  # f32 (tm, tn)
            o_ref[...] = y.astype(out_dtype)
            if compute_stats:
                if needs_mask:
                    row = (lax.broadcasted_iota(jnp.int32, y.shape, 0)
                           + pl.program_id(0) * tm)
                    y = jnp.where(row < m_valid, y, 0.0)
                colsum = jnp.sum(y, axis=0, keepdims=True)       # (1, tn)
                colsq = jnp.sum(y * y, axis=0, keepdims=True)
                sub = lax.broadcasted_iota(jnp.int32, (8, y.shape[1]), 0)
                sum_ref[...] = jnp.where(sub == 0, colsum, 0.0)  # row 0 holds sum
                sq_ref[...] = jnp.where(sub == 0, colsq, 0.0)

    return kernel


def fused_linear(x, w, b, scale=None, shift=None, *, compute_stats=False,
                 out_dtype=jnp.bfloat16):
    """y = GELU(x*scale + shift) @ w + b  (prologue skipped if scale is None).

    x: (M, K); w: (Kp, Np) bf16, pre-padded (Kp >= K, Kp/Np multiples of 128);
    b: (Np,) f32; scale/shift: length-K' (<= Kp) per-column affine.
    If compute_stats, also returns per-column sum and sum-of-squares of the
    f32 output (for fused BatchNorm statistics), each of shape (Np,).
    """
    M, K = x.shape
    Kp, Np = w.shape
    assert Kp >= K and Kp % 128 == 0 and Np % 128 == 0 and b.shape == (Np,)
    fuse = scale is not None

    # Tile selection.
    tn = _largest_tile(Np, 4096, 128)                       # gn == 1 for typical sizes
    tk = (_largest_tile(Kp, 512, 256) if Kp % 256 == 0
          else _largest_tile(Kp, 512, 128))
    tm = max(16, min(256, _round_up(pl.cdiv(max(M, 1), 2), 16)))  # >=2 M-tiles (v7x)

    gm, gn, gk = pl.cdiv(M, tm), Np // tn, Kp // tk
    Mp = gm * tm

    x = x.astype(jnp.bfloat16)                              # cast outside the kernel
    if (Mp, Kp) != (M, K):
        x = jnp.pad(x, ((0, Mp - M), (0, Kp - K)))
    b2 = b.reshape(1, Np).astype(jnp.float32)

    inputs = [x, w, b2]
    in_specs = [
        pl.BlockSpec((tm, tk), lambda i, j, k: (i, k)),     # x (bf16)
        pl.BlockSpec((tk, tn), lambda i, j, k: (k, j)),     # w (bf16, pre-padded)
        pl.BlockSpec((1, tn), lambda i, j, k: (0, j)),      # bias
    ]
    if fuse:
        scale = jnp.asarray(scale, jnp.float32).reshape(1, -1)
        shift = jnp.asarray(shift, jnp.float32).reshape(1, -1)
        kk = scale.shape[1]
        if kk != Kp:
            # Padded K columns get scale = shift = 0 -> GELU(0) = 0 -> no contribution.
            scale = jnp.pad(scale, ((0, 0), (0, Kp - kk)))
            shift = jnp.pad(shift, ((0, 0), (0, Kp - kk)))
        inputs += [scale, shift]
        in_specs += [pl.BlockSpec((1, tk), lambda i, j, k: (0, k)),
                     pl.BlockSpec((1, tk), lambda i, j, k: (0, k))]

    out_shape = [jax.ShapeDtypeStruct((Mp, Np), out_dtype)]
    out_specs = [pl.BlockSpec((tm, tn), lambda i, j, k: (i, j))]
    if compute_stats:
        out_shape += [jax.ShapeDtypeStruct((gm * 8, Np), jnp.float32)] * 2
        out_specs += [pl.BlockSpec((8, tn), lambda i, j, k: (i, j))] * 2

    # VMEM budget: double-buffered inputs/outputs + f32 accumulator, 2x headroom,
    # capped at v7x's 64 MiB per-TensorCore VMEM.
    out_bytes = jnp.dtype(out_dtype).itemsize
    est = (2 * tm * tk * 2 + 2 * tk * tn * 2 + 2 * tn * 4
           + (4 * tk * 4 if fuse else 0)
           + 2 * tm * tn * out_bytes
           + (4 * 8 * tn * 4 if compute_stats else 0)
           + tm * tn * 4)
    vmem_limit = int(min(max(2 * est, 32 * 1024 * 1024), 64 * 1024 * 1024))

    kernel = _make_kernel(fuse_prologue=fuse, compute_stats=compute_stats,
                          out_dtype=out_dtype, tm=tm, m_valid=M,
                          needs_mask=(Mp != M))

    outs = pl.pallas_call(
        kernel,
        out_shape=out_shape,
        grid_spec=pltpu.PrefetchScalarGridSpec(
            num_scalar_prefetch=0,
            grid=(gm, gn, gk),
            in_specs=in_specs,
            out_specs=out_specs,
            scratch_shapes=[pltpu.VMEM((tm, tn), jnp.float32)],
        ),
        compiler_params=pltpu.CompilerParams(
            dimension_semantics=("parallel", "parallel", "arbitrary"),
            vmem_limit_bytes=vmem_limit),
    )(*inputs)

    if compute_stats:
        y, s1, s2 = outs
    else:
        (y,) = outs
    if Mp != M:
        y = y[:M]
    if compute_stats:
        return y, jnp.sum(s1, axis=0), jnp.sum(s2, axis=0)   # tiny (gm*8, Np) reduce
    return y


# -----------------------------------------------------------------------------
# DINOHead parameters / forward
# -----------------------------------------------------------------------------
def init_dinohead(key, in_dim, use_bn=True, nlayers=3, hidden_dim=4096,
                  bottleneck_dim=256):
    nlayers = max(nlayers, 1)
    if nlayers == 1:
        dims = [(in_dim, bottleneck_dim)]
    else:
        dims = ([(in_dim, hidden_dim)]
                + [(hidden_dim, hidden_dim)] * (nlayers - 2)
                + [(hidden_dim, bottleneck_dim)])
    keys = jax.random.split(key, len(dims))
    layers = []
    for kk, (din, dout) in zip(keys, dims):
        # TODO(synk): trunc_normal_(std=0.02) approximated by a scaled normal.
        w = 0.02 * jax.random.normal(kk, (din, dout), dtype=jnp.float32)
        # Pre-cast to bf16 and pre-pad to the tile grid ONCE at init.
        din_p, dout_p = _round_up(din, 256), _round_up(dout, 128)
        w_p = jnp.zeros((din_p, dout_p), jnp.bfloat16).at[:din, :dout].set(
            w.astype(jnp.bfloat16))
        b_p = jnp.zeros((dout_p,), jnp.float32)
        layers.append({"w": w_p, "b": b_p, "din": din, "dout": dout})
    bn = []
    if use_bn:
        for (_, dout) in dims[:-1]:
            bn.append({"gamma": jnp.ones((dout,), jnp.float32),
                       "beta": jnp.zeros((dout,), jnp.float32)})
    return {"layers": layers, "bn": bn}


def dinohead_forward(params, x, use_bn=True, eps=1e-5):
    layers, bn = params["layers"], params["bn"]
    n = len(layers)
    M = x.shape[0]
    h = x
    colsum = colsq = None
    for i, layer in enumerate(layers):
        last = (i == n - 1)
        if i == 0:
            scale = shift = None                    # first Linear: no prologue
        else:
            dprev = layers[i - 1]["dout"]
            if use_bn:
                # Finish the fused in-kernel partial stats (training-mode,
                # biased variance, as PyTorch BN normalization).
                mean = colsum[:dprev] / M
                var = jnp.maximum(colsq[:dprev] / M - mean * mean, 0.0)
                g, be = bn[i - 1]["gamma"], bn[i - 1]["beta"]
                scale = g * lax.rsqrt(var + eps)
                shift = be - mean * scale
                # TODO(synk): running_mean/running_var buffers are not tracked.
            else:
                scale = jnp.ones((dprev,), jnp.float32)   # GELU only
                shift = jnp.zeros((dprev,), jnp.float32)
        want_stats = use_bn and not last
        res = fused_linear(h, layer["w"], layer["b"], scale=scale, shift=shift,
                           compute_stats=want_stats,
                           out_dtype=jnp.float32 if last else jnp.bfloat16)
        if want_stats:
            h, colsum, colsq = res
        else:
            h = res
    return h[:, :layers[-1]["dout"]]


def dinohead_reference(params, x, use_bn=True, eps=1e-5):
    """Pure-JAX f32 reference (exact erf GELU, matching nn.GELU) for validation."""
    layers, bn = params["layers"], params["bn"]
    h = x
    for i, layer in enumerate(layers):
        din, dout = layer["din"], layer["dout"]
        w = layer["w"][:din, :dout].astype(jnp.float32)
        b = layer["b"][:dout]
        if i > 0:
            if use_bn:
                mean = jnp.mean(h, axis=0, keepdims=True)
                var = jnp.var(h, axis=0, keepdims=True)
                h = ((h - mean) * lax.rsqrt(var + eps) * bn[i - 1]["gamma"]
                     + bn[i - 1]["beta"])
            h = jax.nn.gelu(h, approximate=False)
        h = h @ w + b
    return h


# -----------------------------------------------------------------------------
if __name__ == "__main__":
    # Small-but-lane-dense shapes; exercises K-accumulation (gk=2), 2 M-tiles,
    # the fused BN-stats outputs and the bf16 intermediate path.
    cfg = dict(in_dim=384, hidden_dim=1024, bottleneck_dim=256,
               nlayers=3, use_bn=True)
    M = 256  # batch of feature vectors

    key = jax.random.PRNGKey(0)
    kp, kx = jax.random.split(key)
    params = init_dinohead(kp, cfg["in_dim"], use_bn=cfg["use_bn"],
                           nlayers=cfg["nlayers"], hidden_dim=cfg["hidden_dim"],
                           bottleneck_dim=cfg["bottleneck_dim"])
    x = jax.random.normal(kx, (M, cfg["in_dim"]), dtype=jnp.float32)

    out = jax.block_until_ready(dinohead_forward(params, x, use_bn=cfg["use_bn"]))
    ref = jax.block_until_ready(dinohead_reference(params, x, use_bn=cfg["use_bn"]))

    assert out.shape == (M, cfg["bottleneck_dim"])
    assert bool(jnp.all(jnp.isfinite(out)))
    max_err = float(jnp.max(jnp.abs(out - ref)))
    ref_scale = float(jnp.max(jnp.abs(ref))) + 1e-6
    # Loose tolerance: bf16 MXU inputs + bf16 intermediates + tanh GELU.
    assert max_err / ref_scale < 0.1, f"mismatch: {max_err} vs scale {ref_scale}"
    print("KERNEL_OK")
</pallas_src>

<mosaic_0001>
module attributes {stable_mosaic.version = 11 : i64} {
  func.func @kernel(%arg0: i32, %arg1: i32, %arg2: i32, %arg3: memref<128x512xbf16, #tpu.memory_space<vmem>>, %arg4: memref<512x1024xbf16, #tpu.memory_space<vmem>>, %arg5: memref<1x1024xf32, #tpu.memory_space<vmem>>, %arg6: memref<128x1024xbf16, #tpu.memory_space<vmem>>, %arg7: memref<8x1024xf32, #tpu.memory_space<vmem>>, %arg8: memref<8x1024xf32, #tpu.memory_space<vmem>>, %arg9: memref<128x1024xf32, #tpu.memory_space<vmem>>) attributes {dimension_semantics = [#tpu.dimension_semantics<parallel>, #tpu.dimension_semantics<parallel>, #tpu.dimension_semantics<arbitrary>], iteration_bounds = array<i64: 2, 1, 1>, scalar_prefetch = 0 : i64, scratch_operands = 1 : i64, tpu.core_type = #tpu.core_type<tc>, window_params = [{transform_indices = @transform_0, window_bounds = array<i64: 128, 512>}, {transform_indices = @transform_1, window_bounds = array<i64: 512, 1024>}, {transform_indices = @transform_2, window_bounds = array<i64: 1, 1024>}, {transform_indices = @transform_3, window_bounds = array<i64: 128, 1024>}, {transform_indices = @transform_4, window_bounds = array<i64: 8, 1024>}, {transform_indices = @transform_5, window_bounds = array<i64: 8, 1024>}]} {
    %c0_i32 = arith.constant 0 : i32
    %0 = arith.cmpi eq, %arg2, %c0_i32 : i32
    %1 = arith.extui %0 : i1 to i32
    %c0_i32_0 = arith.constant 0 : i32
    %2 = arith.cmpi ne, %1, %c0_i32_0 : i32
    scf.if %2 {
      %cst_10 = arith.constant 0.000000e+00 : f32
      %12 = vector.broadcast %cst_10 : f32 to vector<128x1024xf32>
      %c0_11 = arith.constant 0 : index
      %c0_12 = arith.constant 0 : index
      %13 = vector.load %arg9[%c0_11, %c0_12] : memref<128x1024xf32, #tpu.memory_space<vmem>>, vector<128x1024xf32>
      tpu.vector_store %arg9[%c0_11, %c0_12], %12 {strides = array<i32>} : memref<128x1024xf32, #tpu.memory_space<vmem>>, vector<128x1024xf32>,
    } else {
    }
    %c0 = arith.constant 0 : index
    %c0_1 = arith.constant 0 : index
    %3 = vector.load %arg3[%c0, %c0_1] : memref<128x512xbf16, #tpu.memory_space<vmem>>, vector<128x512xbf16>
    %c0_2 = arith.constant 0 : index
    %c0_3 = arith.constant 0 : index
    %4 = vector.load %arg9[%c0_2, %c0_3] : memref<128x1024xf32, #tpu.memory_space<vmem>>, vector<128x1024xf32>
    %c0_4 = arith.constant 0 : index
    %c0_5 = arith.constant 0 : index
    %5 = vector.load %arg4[%c0_4, %c0_5] : memref<512x1024xbf16, #tpu.memory_space<vmem>>, vector<512x1024xbf16>
    %cst = arith.constant dense<0.000000e+00> : vector<128x1024xf32>
    %6 = tpu.matmul %3, %5, %cst {dimension_numbers = #tpu.dot_dimension_numbers<[1], [0], [0], [1], [0, 0, 1, 1], [], []>} : vector<128x512xbf16>, vector<512x1024xbf16>, vector<128x1024xf32> -> vector<128x1024xf32>
    %7 = arith.addf %4, %6 : vector<128x1024xf32>
    %c0_6 = arith.constant 0 : index
    %c0_7 = arith.constant 0 : index
    %8 = vector.load %arg9[%c0_6, %c0_7] : memref<128x1024xf32, #tpu.memory_space<vmem>>, vector<128x1024xf32>
    tpu.vector_store %arg9[%c0_6, %c0_7], %7 {strides = array<i32>} : memref<128x1024xf32, #tpu.memory_space<vmem>>, vector<128x1024xf32>,
    %c0_i32_8 = arith.constant 0 : i32
    %9 = arith.cmpi eq, %arg2, %c0_i32_8 : i32
    %10 = arith.extui %9 : i1 to i32
    %c0_i32_9 = arith.constant 0 : i32
    %11 = arith.cmpi ne, %10, %c0_i32_9 : i32
    scf.if %11 {
      %c0_10 = arith.constant 0 : index
      %c0_11 = arith.constant 0 : index
      %12 = vector.load %arg9[%c0_10, %c0_11] : memref<128x1024xf32, #tpu.memory_space<vmem>>, vector<128x1024xf32>
      %c0_12 = arith.constant 0 : index
      %c0_13 = arith.constant 0 : index
      %13 = vector.load %arg5[%c0_12, %c0_13] : memref<1x1024xf32, #tpu.memory_space<vmem>>, vector<1x1024xf32>
      %14 = vector.broadcast %13 : vector<1x1024xf32> to vector<128x1024xf32>
      %15 = arith.addf %12, %14 : vector<128x1024xf32>
      %16 = arith.truncf %15 : vector<128x1024xf32> to vector<128x1024xbf16>
      %c0_14 = arith.constant 0 : index
      %c0_15 = arith.constant 0 : index
      %17 = vector.load %arg6[%c0_14, %c0_15] : memref<128x1024xbf16, #tpu.memory_space<vmem>>, vector<128x1024xbf16>
      tpu.vector_store %arg6[%c0_14, %c0_15], %16 {strides = array<i32>} : memref<128x1024xbf16, #tpu.memory_space<vmem>>, vector<128x1024xbf16>,
      %cst_16 = arith.constant dense<0.000000e+00> : vector<1024xf32>
      %18 = vector.multi_reduction <add>, %15, %cst_16 [0] : vector<128x1024xf32> to vector<1024xf32>
      %19 = vector.shape_cast %18 : vector<1024xf32> to vector<1x1024xf32>
      %20 = arith.mulf %15, %15 : vector<128x1024xf32>
      %cst_17 = arith.constant dense<0.000000e+00> : vector<1024xf32>
      %21 = vector.multi_reduction <add>, %20, %cst_17 [0] : vector<128x1024xf32> to vector<1024xf32>
      %22 = vector.shape_cast %21 : vector<1024xf32> to vector<1x1024xf32>
      %23 = tpu.iota {dimensions = array<i32: 0>} : vector<8x1024xi32>
      %c0_i32_18 = arith.constant 0 : i32
      %24 = vector.broadcast %c0_i32_18 : i32 to vector<8x1024xi32>
      %25 = arith.cmpi eq, %23, %24 : vector<8x1024xi32>
      %cst_19 = arith.constant 0.000000e+00 : f32
      %26 = vector.shape_cast %19 : vector<1x1024xf32> to vector<1x1024xf32>
      %27 = vector.broadcast %26 : vector<1x1024xf32> to vector<8x1024xf32>
      %28 = vector.broadcast %cst_19 : f32 to vector<8x1024xf32>
      %29 = arith.select %25, %27, %28 : vector<8x1024xi1>, vector<8x1024xf32>
      %c0_20 = arith.constant 0 : index
      %c0_21 = arith.constant 0 : index
      %30 = vector.load %arg7[%c0_20, %c0_21] : memref<8x1024xf32, #tpu.memory_space<vmem>>, vector<8x1024xf32>
      tpu.vector_store %arg7[%c0_20, %c0_21], %29 {strides = array<i32>} : memref<8x1024xf32, #tpu.memory_space<vmem>>, vector<8x1024xf32>,
      %c0_i32_22 = arith.constant 0 : i32
      %31 = vector.broadcast %c0_i32_22 : i32 to vector<8x1024xi32>
      %32 = arith.cmpi eq, %23, %31 : vector<8x1024xi32>
      %cst_23 = arith.constant 0.000000e+00 : f32
      %33 = vector.shape_cast %22 : vector<1x1024xf32> to vector<1x1024xf32>
      %34 = vector.broadcast %33 : vector<1x1024xf32> to vector<8x1024xf32>
      %35 = vector.broadcast %cst_23 : f32 to vector<8x1024xf32>
      %36 = arith.select %32, %34, %35 : vector<8x1024xi1>, vector<8x1024xf32>
      %c0_24 = arith.constant 0 : index
      %c0_25 = arith.constant 0 : index
      %37 = vector.load %arg8[%c0_24, %c0_25] : memref<8x1024xf32, #tpu.memory_space<vmem>>, vector<8x1024xf32>
      tpu.vector_store %arg8[%c0_24, %c0_25], %36 {strides = array<i32>} : memref<8x1024xf32, #tpu.memory_space<vmem>>, vector<8x1024xf32>,
    } else {
    }
    return
  }
  func.func @transform_0(%arg0: i32, %arg1: i32, %arg2: i32) -> (i32, i32) {
    %c0_i32 = arith.constant 0 : i32
    return %arg0, %arg2 : i32, i32
  }
  func.func @transform_1(%arg0: i32, %arg1: i32, %arg2: i32) -> (i32, i32) {
    %c0_i32 = arith.constant 0 : i32
    return %arg2, %arg1 : i32, i32
  }
  func.func @transform_2(%arg0: i32, %arg1: i32, %arg2: i32) -> (i32, i32) {
    %c0_i32 = arith.constant 0 : i32
    %c0_i32_0 = arith.constant 0 : i32
    return %c0_i32, %arg1 : i32, i32
  }
  func.func @transform_3(%arg0: i32, %arg1: i32, %arg2: i32) -> (i32, i32) {
    %c0_i32 = arith.constant 0 : i32
    return %arg0, %arg1 : i32, i32
  }
  func.func @transform_4(%arg0: i32, %arg1: i32, %arg2: i32) -> (i32, i32) {
    %c0_i32 = arith.constant 0 : i32
    return %arg0, %arg1 : i32, i32
  }
  func.func @transform_5(%arg0: i32, %arg1: i32, %arg2: i32) -> (i32, i32) {
    %c0_i32 = arith.constant 0 : i32
    return %arg0, %arg1 : i32, i32
  }
}

</mosaic_0001>

<llo_original>
// kernel: tpu_custom_call.1
$region0: #{tpu_custom_call.1}
  #allocation0 [shape = 'u32[]', space=smem, size = 0x4, offset = 0x4, fixed_abs, tag = 'smem constant byte address 0x4 - core index']
  #allocation1 [shape = 'u32[144,128]{1,0:T(1,128)}', space=vmem, size = 0x12000, scoped, tag = 'internal scratch']
  #allocation2 [shape = 'f32[128,1024]{1,0:T(8,128)}', space=vmem, size = 0x80000, scoped, tag = 'scratch operand']
  %s0 = inlined_call_operand.hbm [shape: bf16[256,512], index: 0, kind: input, shape index: {}]
  %s1 = inlined_call_operand.hbm [shape: bf16[512,1024], index: 1, kind: input, shape index: {}]
  %s2 = inlined_call_operand.hbm [shape: f32[1,1024], index: 2, kind: input, shape index: {}]
  %s3 = inlined_call_operand.hbm [shape: bf16[256,1024], index: 3, kind: output, shape index: {0}]
  %s4 = inlined_call_operand.hbm [shape: f32[16,1024], index: 4, kind: output, shape index: {1}]
  %s5 = inlined_call_operand.hbm [shape: f32[16,1024], index: 5, kind: output, shape index: {2}]
  %6 = xla_tuple %s3, %s4, %s5
  %s7 = sld [smem:[#allocation0]]
  $region81: #{tpu_custom_call.1} parent=0
    _
  %s9 = ssub.s32 1, %s7
  %s10 = scalar_select 0, %s9, %s7
  $region1: #{tpu_custom_call.1} parent=0
    #allocation3 [shape = 'u8[262144]{0}', space=vmem, size = 0x40000, scoped, tag = 'input window, operand 0']
    #allocation4 [shape = 's32[2]{0}', space=sflag, size = 0x8, scoped, tag = 'scoped memory for tpu_custom_call.1']
    #allocation5 [shape = 's32[2]{0}', space=sflag, size = 0x8, scoped, tag = 'scoped memory for tpu_custom_call.1']
    #allocation6 [shape = 'u8[1048576]{0}', space=vmem, size = 0x100000, scoped, tag = 'input window, operand 1, single buffered']
    #allocation7 [shape = 's32[1]{0}', space=sflag, size = 0x4, scoped, tag = 'scoped memory for tpu_custom_call.1']
    #allocation8 [shape = 'u8[4096]{0}', space=vmem, size = 0x1000, scoped, tag = 'input window, operand 2, single buffered']
    #allocation9 [shape = 'u8[524288]{0}', space=vmem, size = 0x80000, scoped, tag = 'output window, operand 0']
    #allocation10 [shape = 'u8[65536]{0}', space=vmem, size = 0x10000, scoped, tag = 'output window, operand 1']
    #allocation11 [shape = 's32[2]{0}', space=sflag, size = 0x8, scoped, tag = 'scoped memory for tpu_custom_call.1']
    #allocation12 [shape = 'u8[65536]{0}', space=vmem, size = 0x10000, scoped, tag = 'output window, operand 2']
    %11 = vsyncpa [#allocation4], 0
    %s12 = scalar_lea.sflag [#allocation4], 1
    %13 = vsyncpa %s12, 0
    %14 = vsyncpa [#allocation7], 0
    %15 = vsyncpa [#allocation5], 0
    %s16 = scalar_lea.sflag [#allocation5], 1
    %17 = vsyncpa %s16, 0
    %18 = vsyncpa [#allocation11], 0
    %s19 = scalar_lea.sflag [#allocation11], 1
    %20 = vsyncpa %s19, 0
    loop: start=0, step=1, limit=4
    $region2: #{tpu_custom_call.1} parent=1 // loop_pre_header
      _
    $region3: #{tpu_custom_call.1} parent=1 // loop_header
      %s22 = sphi 0, %s26
      %p23 = scmp.ge.s32.totalorder %s22, 4
      %s29 = sphi 0, %s48
      %s30 = sphi 0, %s44
      %s31 = sphi 0, %s40
      %s32 = sphi 0, %s29
      %s33 = sphi 0, %s30
      %s34 = sphi 0, %s31
      %s35 = sphi 0, %s32
      %s36 = sphi 0, %s33
      %s37 = sphi 0, %s34
      %s53 = sphi 0, %s55
      %s56 = sphi 0, %s53
      %s57 = sphi 0, %s56
      %s73 = sphi 0, %s57
      %s81 = sphi 0, %s83
      %s84 = sphi 0, %s81
      %s85 = sphi 0, %s84
      %s101 = sphi 0, %s85
      %s107 = sphi 0, %s109
      %s110 = sphi 0, %s107
      %s111 = sphi 0, %s110
      %s127 = sphi 0, %s111
      %s135 = sphi 0, %s137
      %s138 = sphi 0, %s135
      %s139 = sphi 0, %s138
      %s155 = sphi 0, %s139
      %s163 = sphi 0, %s165
      %s166 = sphi 0, %s163
      %s167 = sphi 0, %s166
      %s183 = sphi 0, %s167
      %s191 = sphi 0, %s193
      %s194 = sphi 0, %s191
      %s195 = sphi 0, %s194
      %s211 = sphi 0, %s195
    $region4: #{tpu_custom_call.1} parent=1 // loop_header_branch
      %25 = sbr.rel (%p23) target = $region8
    $region5: #{tpu_custom_call.1} parent=1 // loop_body
      %s27 = ssub.s32 %s22, 1
      %s28 = ssub.s32 %s22, 2
      %s38 = sadd.s32 1, %s31
      %p39 = scmp.ge.s32.totalorder %s38, 1
      %s40 = scalar_select %p39, 0, %s38
      %s41 = sadd.s32 1, %s30
      %s42 = scalar_select %p39, %s41, %s30
      %p43 = scmp.ge.s32.totalorder %s42, 1
      %s44 = scalar_select %p43, 0, %s42
      %s45 = sadd.s32 1, %s29
      %s46 = scalar_select %p43, %s45, %s29
      %p47 = scmp.ge.s32.totalorder %s46, 2
      %s48 = scalar_select %p47, 0, %s46
      %s49 = ssub.s32 %s29, %s48
      %s50 = ssub.s32 %s31, %s40
      %s51 = sor.u32 %s49, %s50
      %p52 = scmp.eq.s32.totalorder %s51, 0
      %s54 = sadd.s32 %s53, 1
      %s55 = scalar_select %p52, %s53, %s54
      %p58 = pneg %p52
      %p59 = scmp.eq.s32.totalorder %s22, 1
      %p60 = por %p58, %p59
      %p61 = scmp.ne.s32.totalorder %s53, %s56
      %p62 = scmp.eq.s32.totalorder %s22, 0
      %p63 = por %p61, %p62
      %p64 = scmp.ne.s32.totalorder %s53, %s56
      %p65 = scmp.eq.s32.totalorder %s27, 1
      %p66 = por %p64, %p65
      %p67 = scmp.ne.s32.totalorder %s56, %s57
      %p68 = scmp.eq.s32.totalorder %s27, 0
      %p69 = por %p67, %p68
      %p70 = scmp.ne.s32.totalorder %s56, %s57
      %p71 = scmp.eq.s32.totalorder %s28, 1
      %p72 = por %p70, %p71
      %p74 = scmp.ne.s32.totalorder %s57, %s73
      %p75 = scmp.eq.s32.totalorder %s28, 0
      %p76 = por %p74, %p75
      %s77 = ssub.s32 %s31, %s40
      %s78 = ssub.s32 %s30, %s44
      %s79 = sor.u32 %s77, %s78
      %p80 = scmp.eq.s32.totalorder %s79, 0
      %s82 = sadd.s32 %s81, 1
      %s83 = scalar_select %p80, %s81, %s82
      %p86 = pneg %p80
      %p87 = scmp.eq.s32.totalorder %s22, 1
      %p88 = por %p86, %p87
      %p89 = scmp.ne.s32.totalorder %s81, %s84
      %p90 = scmp.eq.s32.totalorder %s22, 0
      %p91 = por %p89, %p90
      %p92 = scmp.ne.s32.totalorder %s81, %s84
      %p93 = scmp.eq.s32.totalorder %s27, 1
      %p94 = por %p92, %p93
      %p95 = scmp.ne.s32.totalorder %s84, %s85
      %p96 = scmp.eq.s32.totalorder %s27, 0
      %p97 = por %p95, %p96
      %p98 = scmp.ne.s32.totalorder %s84, %s85
      %p99 = scmp.eq.s32.totalorder %s28, 1
      %p100 = por %p98, %p99
      %p102 = scmp.ne.s32.totalorder %s85, %s101
      %p103 = scmp.eq.s32.totalorder %s28, 0
      %p104 = por %p102, %p103
      %s105 = ssub.s32 %s30, %s44
      %p106 = scmp.eq.s32.totalorder %s105, 0
      %s108 = sadd.s32 %s107, 1
      %s109 = scalar_select %p106, %s107, %s108
      %p112 = pneg %p106
      %p113 = scmp.eq.s32.totalorder %s22, 1
      %p114 = por %p112, %p113
      %p115 = scmp.ne.s32.totalorder %s107, %s110
      %p116 = scmp.eq.s32.totalorder %s22, 0
      %p117 = por %p115, %p116
      %p118 = scmp.ne.s32.totalorder %s107, %s110
      %p119 = scmp.eq.s32.totalorder %s27, 1
      %p120 = por %p118, %p119
      %p121 = scmp.ne.s32.totalorder %s110, %s111
      %p122 = scmp.eq.s32.totalorder %s27, 0
      %p123 = por %p121, %p122
      %p124 = scmp.ne.s32.totalorder %s110, %s111
      %p125 = scmp.eq.s32.totalorder %s28, 1
      %p126 = por %p124, %p125
      %p128 = scmp.ne.s32.totalorder %s111, %s127
      %p129 = scmp.eq.s32.totalorder %s28, 0
      %p130 = por %p128, %p129
      %s131 = ssub.s32 %s29, %s48
      %s132 = ssub.s32 %s30, %s44
      %s133 = sor.u32 %s131, %s132
      %p134 = scmp.eq.s32.totalorder %s133, 0
      %s136 = sadd.s32 %s135, 1
      %s137 = scalar_select %p134, %s135, %s136
      %p140 = pneg %p134
      %p141 = scmp.eq.s32.totalorder %s22, 1
      %p142 = por %p140, %p141
      %p143 = scmp.ne.s32.totalorder %s135, %s138
      %p144 = scmp.eq.s32.totalorder %s22, 0
      %p145 = por %p143, %p144
      %p146 = scmp.ne.s32.totalorder %s135, %s138
      %p147 = scmp.eq.s32.totalorder %s27, 1
      %p148 = por %p146, %p147
      %p149 = scmp.ne.s32.totalorder %s138, %s139
      %p150 = scmp.eq.s32.totalorder %s27, 0
      %p151 = por %p149, %p150
      %p152 = scmp.ne.s32.totalorder %s138, %s139
      %p153 = scmp.eq.s32.totalorder %s28, 1
      %p154 = por %p152, %p153
      %p156 = scmp.ne.s32.totalorder %s139, %s155
      %p157 = scmp.eq.s32.totalorder %s28, 0
      %p158 = por %p156, %p157
      %s159 = ssub.s32 %s29, %s48
      %s160 = ssub.s32 %s30, %s44
      %s161 = sor.u32 %s159, %s160
      %p162 = scmp.eq.s32.totalorder %s161, 0
      %s164 = sadd.s32 %s163, 1
      %s165 = scalar_select %p162, %s163, %s164
      %p168 = pneg %p162
      %p169 = scmp.eq.s32.totalorder %s22, 1
      %p170 = por %p168, %p169
      %p171 = scmp.ne.s32.totalorder %s163, %s166
      %p172 = scmp.eq.s32.totalorder %s22, 0
      %p173 = por %p171, %p172
      %p174 = scmp.ne.s32.totalorder %s163, %s166
      %p175 = scmp.eq.s32.totalorder %s27, 1
      %p176 = por %p174, %p175
      %p177 = scmp.ne.s32.totalorder %s166, %s167
      %p178 = scmp.eq.s32.totalorder %s27, 0
      %p179 = por %p177, %p178
      %p180 = scmp.ne.s32.totalorder %s166, %s167
      %p181 = scmp.eq.s32.totalorder %s28, 1
      %p182 = por %p180, %p181
      %p184 = scmp.ne.s32.totalorder %s167, %s183
      %p185 = scmp.eq.s32.totalorder %s28, 0
      %p186 = por %p184, %p185
      %s187 = ssub.s32 %s29, %s48
      %s188 = ssub.s32 %s30, %s44
      %s189 = sor.u32 %s187, %s188
      %p190 = scmp.eq.s32.totalorder %s189, 0
      %s192 = sadd.s32 %s191, 1
      %s193 = scalar_select %p190, %s191, %s192
      %p196 = pneg %p190
      %p197 = scmp.eq.s32.totalorder %s22, 1
      %p198 = por %p196, %p197
      %p199 = scmp.ne.s32.totalorder %s191, %s194
      %p200 = scmp.eq.s32.totalorder %s22, 0
      %p201 = por %p199, %p200
      %p202 = scmp.ne.s32.totalorder %s191, %s194
      %p203 = scmp.eq.s32.totalorder %s27, 1
      %p204 = por %p202, %p203
      %p205 = scmp.ne.s32.totalorder %s194, %s195
      %p206 = scmp.eq.s32.totalorder %s27, 0
      %p207 = por %p205, %p206
      %p208 = scmp.ne.s32.totalorder %s194, %s195
      %p209 = scmp.eq.s32.totalorder %s28, 1
      %p210 = por %p208, %p209
      %p212 = scmp.ne.s32.totalorder %s195, %s211
      %p213 = scmp.eq.s32.totalorder %s28, 0
      %p214 = por %p212, %p213
      %p215 = scmp.le.s32.totalorder 1, %s22
      %p216 = scmp.lt.s32.totalorder %s22, 3
      %p217 = pnand %p215, %p216
      %p218 = pneg %p217
      // Predicated region
      $region9: #{tpu_custom_call.1} parent=5 // pred_check
        _
      $region10: #{tpu_custom_call.1} parent=5 // pred_check_branch
        %220 = sbr.rel (%p217) target = $region12
      $region11: #{tpu_custom_call.1} parent=5 // pred_region
        %s221 = ssub.s32 %s22, 1
        // Predicated region
        $region13: #{tpu_custom_call.1} parent=11 // pred_check
          %p222 = pneg %p97
        $region14: #{tpu_custom_call.1} parent=11 // pred_check_branch
          %224 = sbr.rel (%p222) target = $region16
        $region15: #{tpu_custom_call.1} parent=11 // pred_region
          %s225 = smul.u32 64, %s34
          %s226 = smul.u32 8, %s33
          %s228 = ssub.s32 32768, 32768
          %229 = vsyncadd [#allocation7], %s228
          %s230 = smul.addr %s225, 8
          %s231 = sadd.s32 %s226, %s230
          %s232 = smul.addr %s231, 64
          %s233 = scalar_lea.hbm %s1, %s232
          %s234 = sshll.u32 [#allocation6], 4
          %s235 = int_to_ptr.vmem [resolvable:$true] %s234
          %240 = dma.hbm_to_vmem [thread:$0]  %s233, 32768, %s235, [#allocation7], 512, 512, 32
        $region16: #{tpu_custom_call.1} parent=11 // pred_fallthru
          _
        // Predicated region
        $region17: #{tpu_custom_call.1} parent=11 // pred_check
          %p241 = pneg %p123
        $region18: #{tpu_custom_call.1} parent=11 // pred_check_branch
          %243 = sbr.rel (%p241) target = $region20
        $region19: #{tpu_custom_call.1} parent=11 // pred_region
          %s244 = smul.u32 8, %s33
          %s246 = ssub.s32 128, 128
          %247 = vsyncadd [#allocation7], %s246
          %s248 = smul.addr %s244, 16
          %s249 = scalar_lea.hbm %s2, %s248
          %s251 = sshll.u32 [#allocation8], 4
          %s252 = int_to_ptr.vmem [resolvable:$true] %s251
          %254 = dma.hbm_to_vmem [thread:$0]  %s249, 128, %s252, [#allocation7]
        $region20: #{tpu_custom_call.1} parent=11 // pred_fallthru
          _
      $region12: #{tpu_custom_call.1} parent=5 // pred_fallthru
        _
      %p255 = scmp.lt.s32.totalorder %s22, 2
      // Predicated region
      $region21: #{tpu_custom_call.1} parent=5 // pred_check
        %p256 = pneg %p255
      $region22: #{tpu_custom_call.1} parent=5 // pred_check_branch
        %258 = sbr.rel (%p256) target = $region24
      $region23: #{tpu_custom_call.1} parent=5 // pred_region
        // Predicated region
        $region25: #{tpu_custom_call.1} parent=23 // pred_check
          %p259 = pneg %p63
        $region26: #{tpu_custom_call.1} parent=23 // pred_check_branch
          %261 = sbr.rel (%p259) target = $region28
        $region27: #{tpu_custom_call.1} parent=23 // pred_region
          %s262 = sand.u32 %s53, 1
          %s263 = scalar_lea.sflag [#allocation4], %s262
          %s264 = sand.u32 %s53, 1
          %s265 = smul.addr %s264, 256
          %s266 = scalar_lea.vmem [#allocation3], %s265
          %s267 = smul.u32 16, %s29
          %s268 = smul.u32 4, %s31
          %s270 = ssub.s32 4096, 4096
          %271 = vsyncadd %s263, %s270
          %s272 = smul.addr %s267, 4
          %s273 = sadd.s32 %s268, %s272
          %s274 = smul.addr %s273, 64
          %s275 = scalar_lea.hbm %s0, %s274
          %s276 = sshll.u32 %s266, 4
          %s277 = int_to_ptr.vmem [resolvable:$true] %s276
          %282 = dma.hbm_to_vmem [thread:$0]  %s275, 4096, %s277, %s263, 256, 256, 16
        $region28: #{tpu_custom_call.1} parent=23 // pred_fallthru
          _
      $region24: #{tpu_custom_call.1} parent=5 // pred_fallthru
        _
      %p283 = scmp.le.s32.totalorder 1, %s22
      %p284 = scmp.lt.s32.totalorder %s22, 3
      %p285 = pnand %p283, %p284
      %p286 = pneg %p285
      // Predicated region
      $region29: #{tpu_custom_call.1} parent=5 // pred_check
        _
      $region30: #{tpu_custom_call.1} parent=5 // pred_check_branch
        %288 = sbr.rel (%p285) target = $region32
      $region31: #{tpu_custom_call.1} parent=5 // pred_region
        %s289 = ssub.s32 %s22, 1
        %s290 = sand.u32 %s56, 1
        %s291 = scalar_lea.sflag [#allocation4], %s290
        %s292 = sand.u32 %s56, 1
        %s293 = smul.addr %s292, 256
        %s294 = scalar_lea.vmem [#allocation3], %s293
        // Predicated region
        $region33: #{tpu_custom_call.1} parent=31 // pred_check
          %p295 = pneg %p69
        $region34: #{tpu_custom_call.1} parent=31 // pred_check_branch
          %297 = sbr.rel (%p295) target = $region36
        $region35: #{tpu_custom_call.1} parent=31 // pred_region
          %298 = dma.done %s291, 4096
        $region36: #{tpu_custom_call.1} parent=31 // pred_fallthru
          _
        // Predicated region
        $region37: #{tpu_custom_call.1} parent=31 // pred_check
          %p299 = pneg %p97
        $region38: #{tpu_custom_call.1} parent=31 // pred_check_branch
          %301 = sbr.rel (%p299) target = $region40
        $region39: #{tpu_custom_call.1} parent=31 // pred_region
          %302 = dma.done [#allocation7], 32768
        $region40: #{tpu_custom_call.1} parent=31 // pred_fallthru
          _
        // Predicated region
        $region41: #{tpu_custom_call.1} parent=31 // pred_check
          %p303 = pneg %p123
        $region42: #{tpu_custom_call.1} parent=31 // pred_check_branch
          %305 = sbr.rel (%p303) target = $region44
        $region43: #{tpu_custom_call.1} parent=31 // pred_region
          %306 = dma.done [#allocation7], 128
        $region44: #{tpu_custom_call.1} parent=31 // pred_fallthru
          _
        %s307 = sand.u32 %s56, 1
        %s308 = scalar_lea.sflag [#allocation4], %s307
        %s309 = sand.u32 %s56, 1
        %s310 = smul.addr %s309, 256
        %s311 = scalar_lea.vmem [#allocation3], %s310
        %p312 = pneg %p69
        %p313 = pneg %p66
        %p314 = pneg %p97
        %p315 = pneg %p94
        %p316 = pneg %p123
        %p317 = pneg %p120
        %p318 = pneg %p151
        %p319 = pneg %p148
        %s320 = sand.u32 %s138, 1
        %s321 = scalar_lea.sflag [#allocation5], %s320
        %s322 = sand.u32 %s138, 1
        %s323 = smul.addr %s322, 512
        %s324 = scalar_lea.vmem [#allocation9], %s323
        %p325 = pneg %p179
        %p326 = pneg %p176
        %s327 = sand.u32 %s27, 1
        %s328 = scalar_lea.sflag [#allocation11], %s327
        %s329 = sand.u32 %s166, 1
        %s330 = smul.addr %s329, 64
        %s331 = scalar_lea.vmem [#allocation10], %s330
        %p332 = pneg %p207
        %p333 = pneg %p204
        %s334 = sand.u32 %s27, 1
        %s335 = scalar_lea.sflag [#allocation11], %s334
        %s336 = sand.u32 %s194, 1
        %s337 = smul.addr %s336, 64
        %s338 = scalar_lea.vmem [#allocation12], %s337
        %s339 = smul.u32 16, %s32
        %s340 = smul.u32 4, %s34
        %s341 = smul.u32 64, %s34
        %s342 = smul.u32 8, %s33
        %s343 = smul.u32 8, %s33
        %s344 = smul.u32 16, %s32
        %s345 = smul.u32 8, %s33
        %s346 = smul.u32 8, %s33
        %s347 = smul.u32 8, %s33
        %p348 = scmp.eq.s32.totalorder %s34, 0
        // Predicated region
        $region45: #{tpu_custom_call.1} parent=31 // pred_check
          %p349 = pneg %p348
        $region46: #{tpu_custom_call.1} parent=31 // pred_check_branch
          %351 = sbr.rel (%p349) target = $region48
        $region47: #{tpu_custom_call.1} parent=31 // pred_region
          %352 = vst [vmem:[#allocation2] sm:$0xff] 0.0
          %353 = vst [vmem:[#allocation2 + $0x8] sm:$0xff] 0.0
          %354 = vst [vmem:[#allocation2 + $0x10] sm:$0xff] 0.0
          %355 = vst [vmem:[#allocation2 + $0x18] sm:$0xff] 0.0
          %356 = vst [vmem:[#allocation2 + $0x20] sm:$0xff] 0.0
          %357 = vst [vmem:[#allocation2 + $0x28] sm:$0xff] 0.0
          %358 = vst [vmem:[#allocation2 + $0x30] sm:$0xff] 0.0
          %359 = vst [vmem:[#allocation2 + $0x38] sm:$0xff] 0.0
          %360 = vst [vmem:[#allocation2 + $0x40] sm:$0xff] 0.0
          %361 = vst [vmem:[#allocation2 + $0x48] sm:$0xff] 0.0
          %362 = vst [vmem:[#allocation2 + $0x50] sm:$0xff] 0.0
          %363 = vst [vmem:[#allocation2 + $0x58] sm:$0xff] 0.0
          %364 = vst [vmem:[#allocation2 + $0x60] sm:$0xff] 0.0
          %365 = vst [vmem:[#allocation2 + $0x68] sm:$0xff] 0.0
          %366 = vst [vmem:[#allocation2 + $0x70] sm:$0xff] 0.0
          %367 = vst [vmem:[#allocation2 + $0x78] sm:$0xff] 0.0
          %368 = vst [vmem:[#allocation2 + $0x80] sm:$0xff] 0.0
          %369 = vst [vmem:[#allocation2 + $0x88] sm:$0xff] 0.0
          %370 = vst [vmem:[#allocation2 + $0x90] sm:$0xff] 0.0
          %371 = vst [vmem:[#allocation2 + $0x98] sm:$0xff] 0.0
          %372 = vst [vmem:[#allocation2 + $0xa0] sm:$0xff] 0.0
          %373 = vst [vmem:[#allocation2 + $0xa8] sm:$0xff] 0.0
          %374 = vst [vmem:[#allocation2 + $0xb0] sm:$0xff] 0.0
          %375 = vst [vmem:[#allocation2 + $0xb8] sm:$0xff] 0.0
          %376 = vst [vmem:[#allocation2 + $0xc0] sm:$0xff] 0.0
          %377 = vst [vmem:[#allocation2 + $0xc8] sm:$0xff] 0.0
          %378 = vst [vmem:[#allocation2 + $0xd0] sm:$0xff] 0.0
          %379 = vst [vmem:[#allocation2 + $0xd8] sm:$0xff] 0.0
          %380 = vst [vmem:[#allocation2 + $0xe0] sm:$0xff] 0.0
          %381 = vst [vmem:[#allocation2 + $0xe8] sm:$0xff] 0.0
          %382 = vst [vmem:[#allocation2 + $0xf0] sm:$0xff] 0.0
          %383 = vst [vmem:[#allocation2 + $0xf8] sm:$0xff] 0.0
          %384 = vst [vmem:[#allocation2 + $0x100] sm:$0xff] 0.0
          %385 = vst [vmem:[#allocation2 + $0x108] sm:$0xff] 0.0
          %386 = vst [vmem:[#allocation2 + $0x110] sm:$0xff] 0.0
          %387 = vst [vmem:[#allocation2 + $0x118] sm:$0xff] 0.0
          %388 = vst [vmem:[#allocation2 + $0x120] sm:$0xff] 0.0
          %389 = vst [vmem:[#allocation2 + $0x128] sm:$0xff] 0.0
          %390 = vst [vmem:[#allocation2 + $0x130] sm:$0xff] 0.0
          %391 = vst [vmem:[#allocation2 + $0x138] sm:$0xff] 0.0
          %392 = vst [vmem:[#allocation2 + $0x140] sm:$0xff] 0.0
          %393 = vst [vmem:[#allocation2 + $0x148] sm:$0xff] 0.0
          %394 = vst [vmem:[#allocation2 + $0x150] sm:$0xff] 0.0
          %395 = vst [vmem:[#allocation2 + $0x158] sm:$0xff] 0.0
          %396 = vst [vmem:[#allocation2 + $0x160] sm:$0xff] 0.0
          %397 = vst [vmem:[#allocation2 + $0x168] sm:$0xff] 0.0
          %398 = vst [vmem:[#allocation2 + $0x170] sm:$0xff] 0.0
          %399 = vst [vmem:[#allocation2 + $0x178] sm:$0xff] 0.0
          %400 = vst [vmem:[#allocation2 + $0x180] sm:$0xff] 0.0
          %401 = vst [vmem:[#allocation2 + $0x188] sm:$0xff] 0.0
          %402 = vst [vmem:[#allocation2 + $0x190] sm:$0xff] 0.0
          %403 = vst [vmem:[#allocation2 + $0x198] sm:$0xff] 0.0
          %404 = vst [vmem:[#allocation2 + $0x1a0] sm:$0xff] 0.0
          %405 = vst [vmem:[#allocation2 + $0x1a8] sm:$0xff] 0.0
          %406 = vst [vmem:[#allocation2 + $0x1b0] sm:$0xff] 0.0
          %407 = vst [vmem:[#allocation2 + $0x1b8] sm:$0xff] 0.0
          %408 = vst [vmem:[#allocation2 + $0x1c0] sm:$0xff] 0.0
          %409 = vst [vmem:[#allocation2 + $0x1c8] sm:$0xff] 0.0
          %410 = vst [vmem:[#allocation2 + $0x1d0] sm:$0xff] 0.0
          %411 = vst [vmem:[#allocation2 + $0x1d8] sm:$0xff] 0.0
          %412 = vst [vmem:[#allocation2 + $0x1e0] sm:$0xff] 0.0
          %413 = vst [vmem:[#allocation2 + $0x1e8] sm:$0xff] 0.0
          %414 = vst [vmem:[#allocation2 + $0x1f0] sm:$0xff] 0.0
          %415 = vst [vmem:[#allocation2 + $0x1f8] sm:$0xff] 0.0
          %416 = vst [vmem:[#allocation2 + $0x200] sm:$0xff] 0.0
          %417 = vst [vmem:[#allocation2 + $0x208] sm:$0xff] 0.0
          %418 = vst [vmem:[#allocation2 + $0x210] sm:$0xff] 0.0
          %419 = vst [vmem:[#allocation2 + $0x218] sm:$0xff] 0.0
          %420 = vst [vmem:[#allocation2 + $0x220] sm:$0xff] 0.0
          %421 = vst [vmem:[#allocation2 + $0x228] sm:$0xff] 0.0
          %422 = vst [vmem:[#allocation2 + $0x230] sm:$0xff] 0.0
          %423 = vst [vmem:[#allocation2 + $0x238] sm:$0xff] 0.0
          %424 = vst [vmem:[#allocation2 + $0x240] sm:$0xff] 0.0
          %425 = vst [vmem:[#allocation2 + $0x248] sm:$0xff] 0.0
          %426 = vst [vmem:[#allocation2 + $0x250] sm:$0xff] 0.0
          %427 = vst [vmem:[#allocation2 + $0x258] sm:$0xff] 0.0
          %428 = vst [vmem:[#allocation2 + $0x260] sm:$0xff] 0.0
          %429 = vst [vmem:[#allocation2 + $0x268] sm:$0xff] 0.0
          %430 = vst [vmem:[#allocation2 + $0x270] sm:$0xff] 0.0
          %431 = vst [vmem:[#allocation2 + $0x278] sm:$0xff] 0.0
          %432 = vst [vmem:[#allocation2 + $0x280] sm:$0xff] 0.0
          %433 = vst [vmem:[#allocation2 + $0x288] sm:$0xff] 0.0
          %434 = vst [vmem:[#allocation2 + $0x290] sm:$0xff] 0.0
          %435 = vst [vmem:[#allocation2 + $0x298] sm:$0xff] 0.0
          %436 = vst [vmem:[#allocation2 + $0x2a0] sm:$0xff] 0.0
          %437 = vst [vmem:[#allocation2 + $0x2a8] sm:$0xff] 0.0
          %438 = vst [vmem:[#allocation2 + $0x2b0] sm:$0xff] 0.0
          %439 = vst [vmem:[#allocation2 + $0x2b8] sm:$0xff] 0.0
          %440 = vst [vmem:[#allocation2 + $0x2c0] sm:$0xff] 0.0
          %441 = vst [vmem:[#allocation2 + $0x2c8] sm:$0xff] 0.0
          %442 = vst [vmem:[#allocation2 + $0x2d0] sm:$0xff] 0.0
          %443 = vst [vmem:[#allocation2 + $0x2d8] sm:$0xff] 0.0
          %444 = vst [vmem:[#allocation2 + $0x2e0] sm:$0xff] 0.0
          %445 = vst [vmem:[#allocation2 + $0x2e8] sm:$0xff] 0.0
          %446 = vst [vmem:[#allocation2 + $0x2f0] sm:$0xff] 0.0
          %447 = vst [vmem:[#allocation2 + $0x2f8] sm:$0xff] 0.0
          %448 = vst [vmem:[#allocation2 + $0x300] sm:$0xff] 0.0
          %449 = vst [vmem:[#allocation2 + $0x308] sm:$0xff] 0.0
          %450 = vst [vmem:[#allocation2 + $0x310] sm:$0xff] 0.0
          %451 = vst [vmem:[#allocation2 + $0x318] sm:$0xff] 0.0
          %452 = vst [vmem:[#allocation2 + $0x320] sm:$0xff] 0.0
          %453 = vst [vmem:[#allocation2 + $0x328] sm:$0xff] 0.0
          %454 = vst [vmem:[#allocation2 + $0x330] sm:$0xff] 0.0
          %455 = vst [vmem:[#allocation2 + $0x338] sm:$0xff] 0.0
          %456 = vst [vmem:[#allocation2 + $0x340] sm:$0xff] 0.0
          %457 = vst [vmem:[#allocation2 + $0x348] sm:$0xff] 0.0
          %458 = vst [vmem:[#allocation2 + $0x350] sm:$0xff] 0.0
          %459 = vst [vmem:[#allocation2 + $0x358] sm:$0xff] 0.0
          %460 = vst [vmem:[#allocation2 + $0x360] sm:$0xff] 0.0
          %461 = vst [vmem:[#allocation2 + $0x368] sm:$0xff] 0.0
          %462 = vst [vmem:[#allocation2 + $0x370] sm:$0xff] 0.0
          %463 = vst [vmem:[#allocation2 + $0x378] sm:$0xff] 0.0
          %464 = vst [vmem:[#allocation2 + $0x380] sm:$0xff] 0.0
          %465 = vst [vmem:[#allocation2 + $0x388] sm:$0xff] 0.0
          %466 = vst [vmem:[#allocation2 + $0x390] sm:$0xff] 0.0
          %467 = vst [vmem:[#allocation2 + $0x398] sm:$0xff] 0.0
          %468 = vst [vmem:[#allocation2 + $0x3a0] sm:$0xff] 0.0
          %469 = vst [vmem:[#allocation2 + $0x3a8] sm:$0xff] 0.0
          %470 = vst [vmem:[#allocation2 + $0x3b0] sm:$0xff] 0.0
          %471 = vst [vmem:[#allocation2 + $0x3b8] sm:$0xff] 0.0
          %472 = vst [vmem:[#allocation2 + $0x3c0] sm:$0xff] 0.0
          %473 = vst [vmem:[#allocation2 + $0x3c8] sm:$0xff] 0.0
          %474 = vst [vmem:[#allocation2 + $0x3d0] sm:$0xff] 0.0
          %475 = vst [vmem:[#allocation2 + $0x3d8] sm:$0xff] 0.0
          %476 = vst [vmem:[#allocation2 + $0x3e0] sm:$0xff] 0.0
          %477 = vst [vmem:[#allocation2 + $0x3e8] sm:$0xff] 0.0
          %478 = vst [vmem:[#allocation2 + $0x3f0] sm:$0xff] 0.0
          %479 = vst [vmem:[#allocation2 + $0x3f8] sm:$0xff] 0.0
        $region48: #{tpu_custom_call.1} parent=31 // pred_fallthru
          _
        %v480 = vld [vmem:[%s294] sm:$0xff]
        %v481 = vld [vmem:[%s294 + $0x8] sm:$0xff]
        %v482 = vld [vmem:[%s294 + $0x10] sm:$0xff]
        %v483 = vld [vmem:[%s294 + $0x18] sm:$0xff]
        %v484 = vld [vmem:[%s294 + $0x20] sm:$0xff]
        %v485 = vld [vmem:[%s294 + $0x28] sm:$0xff]
        %v486 = vld [vmem:[%s294 + $0x30] sm:$0xff]
        %v487 = vld [vmem:[%s294 + $0x38] sm:$0xff]
        %v488 = vld [vmem:[%s294 + $0x40] sm:$0xff]
        %v489 = vld [vmem:[%s294 + $0x48] sm:$0xff]
        %v490 = vld [vmem:[%s294 + $0x50] sm:$0xff]
        %v491 = vld [vmem:[%s294 + $0x58] sm:$0xff]
        %v492 = vld [vmem:[%s294 + $0x60] sm:$0xff]
        %v493 = vld [vmem:[%s294 + $0x68] sm:$0xff]
        %v494 = vld [vmem:[%s294 + $0x70] sm:$0xff]
        %v495 = vld [vmem:[%s294 + $0x78] sm:$0xff]
        %v496 = vld [vmem:[%s294 + $0x80] sm:$0xff]
        %v497 = vld [vmem:[%s294 + $0x88] sm:$0xff]
        %v498 = vld [vmem:[%s294 + $0x90] sm:$0xff]
        %v499 = vld [vmem:[%s294 + $0x98] sm:$0xff]
        %v500 = vld [vmem:[%s294 + $0xa0] sm:$0xff]
        %v501 = vld [vmem:[%s294 + $0xa8] sm:$0xff]
        %v502 = vld [vmem:[%s294 + $0xb0] sm:$0xff]
        %v503 = vld [vmem:[%s294 + $0xb8] sm:$0xff]
        %v504 = vld [vmem:[%s294 + $0xc0] sm:$0xff]
        %v505 = vld [vmem:[%s294 + $0xc8] sm:$0xff]
        %v506 = vld [vmem:[%s294 + $0xd0] sm:$0xff]
        %v507 = vld [vmem:[%s294 + $0xd8] sm:$0xff]
        %v508 = vld [vmem:[%s294 + $0xe0] sm:$0xff]
        %v509 = vld [vmem:[%s294 + $0xe8] sm:$0xff]
        %v510 = vld [vmem:[%s294 + $0xf0] sm:$0xff]
        %v511 = vld [vmem:[%s294 + $0xf8] sm:$0xff]
        %v512 = vld [vmem:[#allocation2] sm:$0xff]
        %v513 = vld [vmem:[#allocation2 + $0x8] sm:$0xff]
        %v514 = vld [vmem:[#allocation2 + $0x10] sm:$0xff]
        %v515 = vld [vmem:[#allocation2 + $0x18] sm:$0xff]
        %v516 = vld [vmem:[#allocation2 + $0x20] sm:$0xff]
        %v517 = vld [vmem:[#allocation2 + $0x28] sm:$0xff]
        %v518 = vld [vmem:[#allocation2 + $0x30] sm:$0xff]
        %v519 = vld [vmem:[#allocation2 + $0x38] sm:$0xff]
        %v520 = vld [vmem:[#allocation2 + $0x40] sm:$0xff]
        %v521 = vld [vmem:[#allocation2 + $0x48] sm:$0xff]
        %v522 = vld [vmem:[#allocation2 + $0x50] sm:$0xff]
        %v523 = vld [vmem:[#allocation2 + $0x58] sm:$0xff]
        %v524 = vld [vmem:[#allocation2 + $0x60] sm:$0xff]
        %v525 = vld [vmem:[#allocation2 + $0x68] sm:$0xff]
        %v526 = vld [vmem:[#allocation2 + $0x70] sm:$0xff]
        %v527 = vld [vmem:[#allocation2 + $0x78] sm:$0xff]
        %v528 = vld [vmem:[#allocation2 + $0x80] sm:$0xff]
        %v529 = vld [vmem:[#allocation2 + $0x88] sm:$0xff]
        %v530 = vld [vmem:[#allocation2 + $0x90] sm:$0xff]
        %v531 = vld [vmem:[#allocation2 + $0x98] sm:$0xff]
        %v532 = vld [vmem:[#allocation2 + $0xa0] sm:$0xff]
        %v533 = vld [vmem:[#allocation2 + $0xa8] sm:$0xff]
        %v534 = vld [vmem:[#allocation2 + $0xb0] sm:$0xff]
        %v535 = vld [vmem:[#allocation2 + $0xb8] sm:$0xff]
        %v536 = vld [vmem:[#allocation2 + $0xc0] sm:$0xff]
        %v537 = vld [vmem:[#allocation2 + $0xc8] sm:$0xff]
        %v538 = vld [vmem:[#allocation2 + $0xd0] sm:$0xff]
        %v539 = vld [vmem:[#allocation2 + $0xd8] sm:$0xff]
        %v540 = vld [vmem:[#allocation2 + $0xe0] sm:$0xff]
        %v541 = vld [vmem:[#allocation2 + $0xe8] sm:$0xff]
        %v542 = vld [vmem:[#allocation2 + $0xf0] sm:$0xff]
        %v543 = vld [vmem:[#allocation2 + $0xf8] sm:$0xff]
        %v544 = vld [vmem:[#allocation2 + $0x100] sm:$0xff]
        %v545 = vld [vmem:[#allocation2 + $0x108] sm:$0xff]
        %v546 = vld [vmem:[#allocation2 + $0x110] sm:$0xff]
        %v547 = vld [vmem:[#allocation2 + $0x118] sm:$0xff]
        %v548 = vld [vmem:[#allocation2 + $0x120] sm:$0xff]
        %v549 = vld [vmem:[#allocation2 + $0x128] sm:$0xff]
        %v550 = vld [vmem:[#allocation2 + $0x130] sm:$0xff]
        %v551 = vld [vmem:[#allocation2 + $0x138] sm:$0xff]
        %v552 = vld [vmem:[#allocation2 + $0x140] sm:$0xff]
        %v553 = vld [vmem:[#allocation2 + $0x148] sm:$0xff]
        %v554 = vld [vmem:[#allocation2 + $0x150] sm:$0xff]
        %v555 = vld [vmem:[#allocation2 + $0x158] sm:$0xff]
        %v556 = vld [vmem:[#allocation2 + $0x160] sm:$0xff]
        %v557 = vld [vmem:[#allocation2 + $0x168] sm:$0xff]
        %v558 = vld [vmem:[#allocation2 + $0x170] sm:$0xff]
        %v559 = vld [vmem:[#allocation2 + $0x178] sm:$0xff]
        %v560 = vld [vmem:[#allocation2 + $0x180] sm:$0xff]
        %v561 = vld [vmem:[#allocation2 + $0x188] sm:$0xff]
        %v562 = vld [vmem:[#allocation2 + $0x190] sm:$0xff]
        %v563 = vld [vmem:[#allocation2 + $0x198] sm:$0xff]
        %v564 = vld [vmem:[#allocation2 + $0x1a0] sm:$0xff]
        %v565 = vld [vmem:[#allocation2 + $0x1a8] sm:$0xff]
        %v566 = vld [vmem:[#allocation2 + $0x1b0] sm:$0xff]
        %v567 = vld [vmem:[#allocation2 + $0x1b8] sm:$0xff]
        %v568 = vld [vmem:[#allocation2 + $0x1c0] sm:$0xff]
        %v569 = vld [vmem:[#allocation2 + $0x1c8] sm:$0xff]
        %v570 = vld [vmem:[#allocation2 + $0x1d0] sm:$0xff]
        %v571 = vld [vmem:[#allocation2 + $0x1d8] sm:$0xff]
        %v572 = vld [vmem:[#allocation2 + $0x1e0] sm:$0xff]
        %v573 = vld [vmem:[#allocation2 + $0x1e8] sm:$0xff]
        %v574 = vld [vmem:[#allocation2 + $0x1f0] sm:$0xff]
        %v575 = vld [vmem:[#allocation2 + $0x1f8] sm:$0xff]
        %v576 = vld [vmem:[#allocation2 + $0x200] sm:$0xff]
        %v577 = vld [vmem:[#allocation2 + $0x208] sm:$0xff]
        %v578 = vld [vmem:[#allocation2 + $0x210] sm:$0xff]
        %v579 = vld [vmem:[#allocation2 + $0x218] sm:$0xff]
        %v580 = vld [vmem:[#allocation2 + $0x220] sm:$0xff]
        %v581 = vld [vmem:[#allocation2 + $0x228] sm:$0xff]
        %v582 = vld [vmem:[#allocation2 + $0x230] sm:$0xff]
        %v583 = vld [vmem:[#allocation2 + $0x238] sm:$0xff]
        %v584 = vld [vmem:[#allocation2 + $0x240] sm:$0xff]
        %v585 = vld [vmem:[#allocation2 + $0x248] sm:$0xff]
        %v586 = vld [vmem:[#allocation2 + $0x250] sm:$0xff]
        %v587 = vld [vmem:[#allocation2 + $0x258] sm:$0xff]
        %v588 = vld [vmem:[#allocation2 + $0x260] sm:$0xff]
        %v589 = vld [vmem:[#allocation2 + $0x268] sm:$0xff]
        %v590 = vld [vmem:[#allocation2 + $0x270] sm:$0xff]
        %v591 = vld [vmem:[#allocation2 + $0x278] sm:$0xff]
        %v592 = vld [vmem:[#allocation2 + $0x280] sm:$0xff]
        %v593 = vld [vmem:[#allocation2 + $0x288] sm:$0xff]
        %v594 = vld [vmem:[#allocation2 + $0x290] sm:$0xff]
        %v595 = vld [vmem:[#allocation2 + $0x298] sm:$0xff]
        %v596 = vld [vmem:[#allocation2 + $0x2a0] sm:$0xff]
        %v597 = vld [vmem:[#allocation2 + $0x2a8] sm:$0xff]
        %v598 = vld [vmem:[#allocation2 + $0x2b0] sm:$0xff]
        %v599 = vld [vmem:[#allocation2 + $0x2b8] sm:$0xff]
        %v600 = vld [vmem:[#allocation2 + $0x2c0] sm:$0xff]
        %v601 = vld [vmem:[#allocation2 + $0x2c8] sm:$0xff]
        %v602 = vld [vmem:[#allocation2 + $0x2d0] sm:$0xff]
        %v603 = vld [vmem:[#allocation2 + $0x2d8] sm:$0xff]
        %v604 = vld [vmem:[#allocation2 + $0x2e0] sm:$0xff]
        %v605 = vld [vmem:[#allocation2 + $0x2e8] sm:$0xff]
        %v606 = vld [vmem:[#allocation2 + $0x2f0] sm:$0xff]
        %v607 = vld [vmem:[#allocation2 + $0x2f8] sm:$0xff]
        %v608 = vld [vmem:[#allocation2 + $0x300] sm:$0xff]
        %v609 = vld [vmem:[#allocation2 + $0x308] sm:$0xff]
        %v610 = vld [vmem:[#allocation2 + $0x310] sm:$0xff]
        %v611 = vld [vmem:[#allocation2 + $0x318] sm:$0xff]
        %v612 = vld [vmem:[#allocation2 + $0x320] sm:$0xff]
        %v613 = vld [vmem:[#allocation2 + $0x328] sm:$0xff]
        %v614 = vld [vmem:[#allocation2 + $0x330] sm:$0xff]
        %v615 = vld [vmem:[#allocation2 + $0x338] sm:$0xff]
        %v616 = vld [vmem:[#allocation2 + $0x340] sm:$0xff]
        %v617 = vld [vmem:[#allocation2 + $0x348] sm:$0xff]
        %v618 = vld [vmem:[#allocation2 + $0x350] sm:$0xff]
        %v619 = vld [vmem:[#allocation2 + $0x358] sm:$0xff]
        %v620 = vld [vmem:[#allocation2 + $0x360] sm:$0xff]
        %v621 = vld [vmem:[#allocation2 + $0x368] sm:$0xff]
        %v622 = vld [vmem:[#allocation2 + $0x370] sm:$0xff]
        %v623 = vld [vmem:[#allocation2 + $0x378] sm:$0xff]
        %v624 = vld [vmem:[#allocation2 + $0x380] sm:$0xff]
        %v625 = vld [vmem:[#allocation2 + $0x388] sm:$0xff]
        %v626 = vld [vmem:[#allocation2 + $0x390] sm:$0xff]
        %v627 = vld [vmem:[#allocation2 + $0x398] sm:$0xff]
        %v628 = vld [vmem:[#allocation2 + $0x3a0] sm:$0xff]
        %v629 = vld [vmem:[#allocation2 + $0x3a8] sm:$0xff]
        %v630 = vld [vmem:[#allocation2 + $0x3b0] sm:$0xff]
        %v631 = vld [vmem:[#allocation2 + $0x3b8] sm:$0xff]
        %v632 = vld [vmem:[#allocation2 + $0x3c0] sm:$0xff]
        %v633 = vld [vmem:[#allocation2 + $0x3c8] sm:$0xff]
        %v634 = vld [vmem:[#allocation2 + $0x3d0] sm:$0xff]
        %v635 = vld [vmem:[#allocation2 + $0x3d8] sm:$0xff]
        %v636 = vld [vmem:[#allocation2 + $0x3e0] sm:$0xff]
        %v637 = vld [vmem:[#allocation2 + $0x3e8] sm:$0xff]
        %v638 = vld [vmem:[#allocation2 + $0x3f0] sm:$0xff]
        %v639 = vld [vmem:[#allocation2 + $0x3f8] sm:$0xff]
        %v640 = vld [vmem:[#allocation6] sm:$0xff]
        %v641 = vld [vmem:[#allocation6 + $0x8] sm:$0xff]
        %v642 = vld [vmem:[#allocation6 + $0x10] sm:$0xff]
        %v643 = vld [vmem:[#allocation6 + $0x18] sm:$0xff]
        %v644 = vld [vmem:[#allocation6 + $0x20] sm:$0xff]
        %v645 = vld [vmem:[#allocation6 + $0x28] sm:$0xff]
        %v646 = vld [vmem:[#allocation6 + $0x30] sm:$0xff]
        %v647 = vld [vmem:[#allocation6 + $0x38] sm:$0xff]
        %v648 = vld [vmem:[#allocation6 + $0x40] sm:$0xff]
        %v649 = vld [vmem:[#allocation6 + $0x48] sm:$0xff]
        %v650 = vld [vmem:[#allocation6 + $0x50] sm:$0xff]
        %v651 = vld [vmem:[#allocation6 + $0x58] sm:$0xff]
        %v652 = vld [vmem:[#allocation6 + $0x60] sm:$0xff]
        %v653 = vld [vmem:[#allocation6 + $0x68] sm:$0xff]
        %v654 = vld [vmem:[#allocation6 + $0x70] sm:$0xff]
        %v655 = vld [vmem:[#allocation6 + $0x78] sm:$0xff]
        %v656 = vld [vmem:[#allocation6 + $0x80] sm:$0xff]
        %v657 = vld [vmem:[#allocation6 + $0x88] sm:$0xff]
        %v658 = vld [vmem:[#allocation6 + $0x90] sm:$0xff]
        %v659 = vld [vmem:[#allocation6 + $0x98] sm:$0xff]
        %v660 = vld [vmem:[#allocation6 + $0xa0] sm:$0xff]
        %v661 = vld [vmem:[#allocation6 + $0xa8] sm:$0xff]
        %v662 = vld [vmem:[#allocation6 + $0xb0] sm:$0xff]
        %v663 = vld [vmem:[#allocation6 + $0xb8] sm:$0xff]
        %v664 = vld [vmem:[#allocation6 + $0xc0] sm:$0xff]
        %v665 = vld [vmem:[#allocation6 + $0xc8] sm:$0xff]
        %v666 = vld [vmem:[#allocation6 + $0xd0] sm:$0xff]
        %v667 = vld [vmem:[#allocation6 + $0xd8] sm:$0xff]
        %v668 = vld [vmem:[#allocation6 + $0xe0] sm:$0xff]
        %v669 = vld [vmem:[#allocation6 + $0xe8] sm:$0xff]
        %v670 = vld [vmem:[#allocation6 + $0xf0] sm:$0xff]
        %v671 = vld [vmem:[#allocation6 + $0xf8] sm:$0xff]
        %v672 = vld [vmem:[#allocation6 + $0x100] sm:$0xff]
        %v673 = vld [vmem:[#allocation6 + $0x108] sm:$0xff]
        %v674 = vld [vmem:[#allocation6 + $0x110] sm:$0xff]
        %v675 = vld [vmem:[#allocation6 + $0x118] sm:$0xff]
        %v676 = vld [vmem:[#allocation6 + $0x120] sm:$0xff]
        %v677 = vld [vmem:[#allocation6 + $0x128] sm:$0xff]
        %v678 = vld [vmem:[#allocation6 + $0x130] sm:$0xff]
        %v679 = vld [vmem:[#allocation6 + $0x138] sm:$0xff]
        %v680 = vld [vmem:[#allocation6 + $0x140] sm:$0xff]
        %v681 = vld [vmem:[#allocation6 + $0x148] sm:$0xff]
        %v682 = vld [vmem:[#allocation6 + $0x150] sm:$0xff]
        %v683 = vld [vmem:[#allocation6 + $0x158] sm:$0xff]
        %v684 = vld [vmem:[#allocation6 + $0x160] sm:$0xff]
        %v685 = vld [vmem:[#allocation6 + $0x168] sm:$0xff]
        %v686 = vld [vmem:[#allocation6 + $0x170] sm:$0xff]
        %v687 = vld [vmem:[#allocation6 + $0x178] sm:$0xff]
        %v688 = vld [vmem:[#allocation6 + $0x180] sm:$0xff]
        %v689 = vld [vmem:[#allocation6 + $0x188] sm:$0xff]
        %v690 = vld [vmem:[#allocation6 + $0x190] sm:$0xff]
        %v691 = vld [vmem:[#allocation6 + $0x198] sm:$0xff]
        %v692 = vld [vmem:[#allocation6 + $0x1a0] sm:$0xff]
        %v693 = vld [vmem:[#allocation6 + $0x1a8] sm:$0xff]
        %v694 = vld [vmem:[#allocation6 + $0x1b0] sm:$0xff]
        %v695 = vld [vmem:[#allocation6 + $0x1b8] sm:$0xff]
        %v696 = vld [vmem:[#allocation6 + $0x1c0] sm:$0xff]
        %v697 = vld [vmem:[#allocation6 + $0x1c8] sm:$0xff]
        %v698 = vld [vmem:[#allocation6 + $0x1d0] sm:$0xff]
        %v699 = vld [vmem:[#allocation6 + $0x1d8] sm:$0xff]
        %v700 = vld [vmem:[#allocation6 + $0x1e0] sm:$0xff]
        %v701 = vld [vmem:[#allocation6 + $0x1e8] sm:$0xff]
        %v702 = vld [vmem:[#allocation6 + $0x1f0] sm:$0xff]
        %v703 = vld [vmem:[#allocation6 + $0x1f8] sm:$0xff]
        %v704 = vld [vmem:[#allocation6 + $0x200] sm:$0xff]
        %v705 = vld [vmem:[#allocation6 + $0x208] sm:$0xff]
        %v706 = vld [vmem:[#allocation6 + $0x210] sm:$0xff]
        %v707 = vld [vmem:[#allocation6 + $0x218] sm:$0xff]
        %v708 = vld [vmem:[#allocation6 + $0x220] sm:$0xff]
        %v709 = vld [vmem:[#allocation6 + $0x228] sm:$0xff]
        %v710 = vld [vmem:[#allocation6 + $0x230] sm:$0xff]
        %v711 = vld [vmem:[#allocation6 + $0x238] sm:$0xff]
        %v712 = vld [vmem:[#allocation6 + $0x240] sm:$0xff]
        %v713 = vld [vmem:[#allocation6 + $0x248] sm:$0xff]
        %v714 = vld [vmem:[#allocation6 + $0x250] sm:$0xff]
        %v715 = vld [vmem:[#allocation6 + $0x258] sm:$0xff]
        %v716 = vld [vmem:[#allocation6 + $0x260] sm:$0xff]
        %v717 = vld [vmem:[#allocation6 + $0x268] sm:$0xff]
        %v718 = vld [vmem:[#allocation6 + $0x270] sm:$0xff]
        %v719 = vld [vmem:[#allocation6 + $0x278] sm:$0xff]
        %v720 = vld [vmem:[#allocation6 + $0x280] sm:$0xff]
        %v721 = vld [vmem:[#allocation6 + $0x288] sm:$0xff]
        %v722 = vld [vmem:[#allocation6 + $0x290] sm:$0xff]
        %v723 = vld [vmem:[#allocation6 + $0x298] sm:$0xff]
        %v724 = vld [vmem:[#allocation6 + $0x2a0] sm:$0xff]
        %v725 = vld [vmem:[#allocation6 + $0x2a8] sm:$0xff]
        %v726 = vld [vmem:[#allocation6 + $0x2b0] sm:$0xff]
        %v727 = vld [vmem:[#allocation6 + $0x2b8] sm:$0xff]
        %v728 = vld [vmem:[#allocation6 + $0x2c0] sm:$0xff]
        %v729 = vld [vmem:[#allocation6 + $0x2c8] sm:$0xff]
        %v730 = vld [vmem:[#allocation6 + $0x2d0] sm:$0xff]
        %v731 = vld [vmem:[#allocation6 + $0x2d8] sm:$0xff]
        %v732 = vld [vmem:[#allocation6 + $0x2e0] sm:$0xff]
        %v733 = vld [vmem:[#allocation6 + $0x2e8] sm:$0xff]
        %v734 = vld [vmem:[#allocation6 + $0x2f0] sm:$0xff]
        %v735 = vld [vmem:[#allocation6 + $0x2f8] sm:$0xff]
        %v736 = vld [vmem:[#allocation6 + $0x300] sm:$0xff]
        %v737 = vld [vmem:[#allocation6 + $0x308] sm:$0xff]
        %v738 = vld [vmem:[#allocation6 + $0x310] sm:$0xff]
        %v739 = vld [vmem:[#allocation6 + $0x318] sm:$0xff]
        %v740 = vld [vmem:[#allocation6 + $0x320] sm:$0xff]
        %v741 = vld [vmem:[#allocation6 + $0x328] sm:$0xff]
        %v742 = vld [vmem:[#allocation6 + $0x330] sm:$0xff]
        %v743 = vld [vmem:[#allocation6 + $0x338] sm:$0xff]
        %v744 = vld [vmem:[#allocation6 + $0x340] sm:$0xff]
        %v745 = vld [vmem:[#allocation6 + $0x348] sm:$0xff]
        %v746 = vld [vmem:[#allocation6 + $0x350] sm:$0xff]
        %v747 = vld [vmem:[#allocation6 + $0x358] sm:$0xff]
        %v748 = vld [vmem:[#allocation6 + $0x360] sm:$0xff]
        %v749 = vld [vmem:[#allocation6 + $0x368] sm:$0xff]
        %v750 = vld [vmem:[#allocation6 + $0x370] sm:$0xff]
        %v751 = vld [vmem:[#allocation6 + $0x378] sm:$0xff]
        %v752 = vld [vmem:[#allocation6 + $0x380] sm:$0xff]
        %v753 = vld [vmem:[#allocation6 + $0x388] sm:$0xff]
        %v754 = vld [vmem:[#allocation6 + $0x390] sm:$0xff]
        %v755 = vld [vmem:[#allocation6 + $0x398] sm:$0xff]
        %v756 = vld [vmem:[#allocation6 + $0x3a0] sm:$0xff]
        %v757 = vld [vmem:[#allocation6 + $0x3a8] sm:$0xff]
        %v758 = vld [vmem:[#allocation6 + $0x3b0] sm:$0xff]
        %v759 = vld [vmem:[#allocation6 + $0x3b8] sm:$0xff]
        %v760 = vld [vmem:[#allocation6 + $0x3c0] sm:$0xff]
        %v761 = vld [vmem:[#allocation6 + $0x3c8] sm:$0xff]
        %v762 = vld [vmem:[#allocation6 + $0x3d0] sm:$0xff]
        %v763 = vld [vmem:[#allocation6 + $0x3d8] sm:$0xff]
        %v764 = vld [vmem:[#allocation6 + $0x3e0] sm:$0xff]
        %v765 = vld [vmem:[#allocation6 + $0x3e8] sm:$0xff]
        %v766 = vld [vmem:[#allocation6 + $0x3f0] sm:$0xff]
        %v767 = vld [vmem:[#allocation6 + $0x3f8] sm:$0xff]
        %v768 = vld [vmem:[#allocation6 + $0x400] sm:$0xff]
        %v769 = vld [vmem:[#allocation6 + $0x408] sm:$0xff]
        %v770 = vld [vmem:[#allocation6 + $0x410] sm:$0xff]
        %v771 = vld [vmem:[#allocation6 + $0x418] sm:$0xff]
        %v772 = vld [vmem:[#allocation6 + $0x420] sm:$0xff]
        %v773 = vld [vmem:[#allocation6 + $0x428] sm:$0xff]
        %v774 = vld [vmem:[#allocation6 + $0x430] sm:$0xff]
        %v775 = vld [vmem:[#allocation6 + $0x438] sm:$0xff]
        %v776 = vld [vmem:[#allocation6 + $0x440] sm:$0xff]
        %v777 = vld [vmem:[#allocation6 + $0x448] sm:$0xff]
        %v778 = vld [vmem:[#allocation6 + $0x450] sm:$0xff]
        %v779 = vld [vmem:[#allocation6 + $0x458] sm:$0xff]
        %v780 = vld [vmem:[#allocation6 + $0x460] sm:$0xff]
        %v781 = vld [vmem:[#allocation6 + $0x468] sm:$0xff]
        %v782 = vld [vmem:[#allocation6 + $0x470] sm:$0xff]
        %v783 = vld [vmem:[#allocation6 + $0x478] sm:$0xff]
        %v784 = vld [vmem:[#allocation6 + $0x480] sm:$0xff]
        %v785 = vld [vmem:[#allocation6 + $0x488] sm:$0xff]
        %v786 = vld [vmem:[#allocation6 + $0x490] sm:$0xff]
        %v787 = vld [vmem:[#allocation6 + $0x498] sm:$0xff]
        %v788 = vld [vmem:[#allocation6 + $0x4a0] sm:$0xff]
        %v789 = vld [vmem:[#allocation6 + $0x4a8] sm:$0xff]
        %v790 = vld [vmem:[#allocation6 + $0x4b0] sm:$0xff]
        %v791 = vld [vmem:[#allocation6 + $0x4b8] sm:$0xff]
        %v792 = vld [vmem:[#allocation6 + $0x4c0] sm:$0xff]
        %v793 = vld [vmem:[#allocation6 + $0x4c8] sm:$0xff]
        %v794 = vld [vmem:[#allocation6 + $0x4d0] sm:$0xff]
        %v795 = vld [vmem:[#allocation6 + $0x4d8] sm:$0xff]
        %v796 = vld [vmem:[#allocation6 + $0x4e0] sm:$0xff]
        %v797 = vld [vmem:[#allocation6 + $0x4e8] sm:$0xff]
        %v798 = vld [vmem:[#allocation6 + $0x4f0] sm:$0xff]
        %v799 = vld [vmem:[#allocation6 + $0x4f8] sm:$0xff]
        %v800 = vld [vmem:[#allocation6 + $0x500] sm:$0xff]
        %v801 = vld [vmem:[#allocation6 + $0x508] sm:$0xff]
        %v802 = vld [vmem:[#allocation6 + $0x510] sm:$0xff]
        %v803 = vld [vmem:[#allocation6 + $0x518] sm:$0xff]
        %v804 = vld [vmem:[#allocation6 + $0x520] sm:$0xff]
        %v805 = vld [vmem:[#allocation6 + $0x528] sm:$0xff]
        %v806 = vld [vmem:[#allocation6 + $0x530] sm:$0xff]
        %v807 = vld [vmem:[#allocation6 + $0x538] sm:$0xff]
        %v808 = vld [vmem:[#allocation6 + $0x540] sm:$0xff]
        %v809 = vld [vmem:[#allocation6 + $0x548] sm:$0xff]
        %v810 = vld [vmem:[#allocation6 + $0x550] sm:$0xff]
        %v811 = vld [vmem:[#allocation6 + $0x558] sm:$0xff]
        %v812 = vld [vmem:[#allocation6 + $0x560] sm:$0xff]
        %v813 = vld [vmem:[#allocation6 + $0x568] sm:$0xff]
        %v814 = vld [vmem:[#allocation6 + $0x570] sm:$0xff]
        %v815 = vld [vmem:[#allocation6 + $0x578] sm:$0xff]
        %v816 = vld [vmem:[#allocation6 + $0x580] sm:$0xff]
        %v817 = vld [vmem:[#allocation6 + $0x588] sm:$0xff]
        %v818 = vld [vmem:[#allocation6 + $0x590] sm:$0xff]
        %v819 = vld [vmem:[#allocation6 + $0x598] sm:$0xff]
        %v820 = vld [vmem:[#allocation6 + $0x5a0] sm:$0xff]
        %v821 = vld [vmem:[#allocation6 + $0x5a8] sm:$0xff]
        %v822 = vld [vmem:[#allocation6 + $0x5b0] sm:$0xff]
        %v823 = vld [vmem:[#allocation6 + $0x5b8] sm:$0xff]
        %v824 = vld [vmem:[#allocation6 + $0x5c0] sm:$0xff]
        %v825 = vld [vmem:[#allocation6 + $0x5c8] sm:$0xff]
        %v826 = vld [vmem:[#allocation6 + $0x5d0] sm:$0xff]
        %v827 = vld [vmem:[#allocation6 + $0x5d8] sm:$0xff]
        %v828 = vld [vmem:[#allocation6 + $0x5e0] sm:$0xff]
        %v829 = vld [vmem:[#allocation6 + $0x5e8] sm:$0xff]
        %v830 = vld [vmem:[#allocation6 + $0x5f0] sm:$0xff]
        %v831 = vld [vmem:[#allocation6 + $0x5f8] sm:$0xff]
        %v832 = vld [vmem:[#allocation6 + $0x600] sm:$0xff]
        %v833 = vld [vmem:[#allocation6 + $0x608] sm:$0xff]
        %v834 = vld [vmem:[#allocation6 + $0x610] sm:$0xff]
        %v835 = vld [vmem:[#allocation6 + $0x618] sm:$0xff]
        %v836 = vld [vmem:[#allocation6 + $0x620] sm:$0xff]
        %v837 = vld [vmem:[#allocation6 + $0x628] sm:$0xff]
        %v838 = vld [vmem:[#allocation6 + $0x630] sm:$0xff]
        %v839 = vld [vmem:[#allocation6 + $0x638] sm:$0xff]
        %v840 = vld [vmem:[#allocation6 + $0x640] sm:$0xff]
        %v841 = vld [vmem:[#allocation6 + $0x648] sm:$0xff]
        %v842 = vld [vmem:[#allocation6 + $0x650] sm:$0xff]
        %v843 = vld [vmem:[#allocation6 + $0x658] sm:$0xff]
        %v844 = vld [vmem:[#allocation6 + $0x660] sm:$0xff]
        %v845 = vld [vmem:[#allocation6 + $0x668] sm:$0xff]
        %v846 = vld [vmem:[#allocation6 + $0x670] sm:$0xff]
        %v847 = vld [vmem:[#allocation6 + $0x678] sm:$0xff]
        %v848 = vld [vmem:[#allocation6 + $0x680] sm:$0xff]
        %v849 = vld [vmem:[#allocation6 + $0x688] sm:$0xff]
        %v850 = vld [vmem:[#allocation6 + $0x690] sm:$0xff]
        %v851 = vld [vmem:[#allocation6 + $0x698] sm:$0xff]
        %v852 = vld [vmem:[#allocation6 + $0x6a0] sm:$0xff]
        %v853 = vld [vmem:[#allocation6 + $0x6a8] sm:$0xff]
        %v854 = vld [vmem:[#allocation6 + $0x6b0] sm:$0xff]
        %v855 = vld [vmem:[#allocation6 + $0x6b8] sm:$0xff]
        %v856 = vld [vmem:[#allocation6 + $0x6c0] sm:$0xff]
        %v857 = vld [vmem:[#allocation6 + $0x6c8] sm:$0xff]
        %v858 = vld [vmem:[#allocation6 + $0x6d0] sm:$0xff]
        %v859 = vld [vmem:[#allocation6 + $0x6d8] sm:$0xff]
        %v860 = vld [vmem:[#allocation6 + $0x6e0] sm:$0xff]
        %v861 = vld [vmem:[#allocation6 + $0x6e8] sm:$0xff]
        %v862 = vld [vmem:[#allocation6 + $0x6f0] sm:$0xff]
        %v863 = vld [vmem:[#allocation6 + $0x6f8] sm:$0xff]
        %v864 = vld [vmem:[#allocation6 + $0x700] sm:$0xff]
        %v865 = vld [vmem:[#allocation6 + $0x708] sm:$0xff]
        %v866 = vld [vmem:[#allocation6 + $0x710] sm:$0xff]
        %v867 = vld [vmem:[#allocation6 + $0x718] sm:$0xff]
        %v868 = vld [vmem:[#allocation6 + $0x720] sm:$0xff]
        %v869 = vld [vmem:[#allocation6 + $0x728] sm:$0xff]
        %v870 = vld [vmem:[#allocation6 + $0x730] sm:$0xff]
        %v871 = vld [vmem:[#allocation6 + $0x738] sm:$0xff]
        %v872 = vld [vmem:[#allocation6 + $0x740] sm:$0xff]
        %v873 = vld [vmem:[#allocation6 + $0x748] sm:$0xff]
        %v874 = vld [vmem:[#allocation6 + $0x750] sm:$0xff]
        %v875 = vld [vmem:[#allocation6 + $0x758] sm:$0xff]
        %v876 = vld [vmem:[#allocation6 + $0x760] sm:$0xff]
        %v877 = vld [vmem:[#allocation6 + $0x768] sm:$0xff]
        %v878 = vld [vmem:[#allocation6 + $0x770] sm:$0xff]
        %v879 = vld [vmem:[#allocation6 + $0x778] sm:$0xff]
        %v880 = vld [vmem:[#allocation6 + $0x780] sm:$0xff]
        %v881 = vld [vmem:[#allocation6 + $0x788] sm:$0xff]
        %v882 = vld [vmem:[#allocation6 + $0x790] sm:$0xff]
        %v883 = vld [vmem:[#allocation6 + $0x798] sm:$0xff]
        %v884 = vld [vmem:[#allocation6 + $0x7a0] sm:$0xff]
        %v885 = vld [vmem:[#allocation6 + $0x7a8] sm:$0xff]
        %v886 = vld [vmem:[#allocation6 + $0x7b0] sm:$0xff]
        %v887 = vld [vmem:[#allocation6 + $0x7b8] sm:$0xff]
        %v888 = vld [vmem:[#allocation6 + $0x7c0] sm:$0xff]
        %v889 = vld [vmem:[#allocation6 + $0x7c8] sm:$0xff]
        %v890 = vld [vmem:[#allocation6 + $0x7d0] sm:$0xff]
        %v891 = vld [vmem:[#allocation6 + $0x7d8] sm:$0xff]
        %v892 = vld [vmem:[#allocation6 + $0x7e0] sm:$0xff]
        %v893 = vld [vmem:[#allocation6 + $0x7e8] sm:$0xff]
        %v894 = vld [vmem:[#allocation6 + $0x7f0] sm:$0xff]
        %v895 = vld [vmem:[#allocation6 + $0x7f8] sm:$0xff]
        %v928 = vunpack.c.l.b16 %v480
        %v929 = vunpack.c.h.b16 %v480
        %v930 = vunpack.c.l.b16 %v481
        %v931 = vunpack.c.h.b16 %v481
        %v932 = vunpack.c.l.b16 %v482
        %v933 = vunpack.c.h.b16 %v482
        %v934 = vunpack.c.l.b16 %v483
        %v935 = vunpack.c.h.b16 %v483
        %v936 = vunpack.c.l.b16 %v484
        %v937 = vunpack.c.h.b16 %v484
        %v938 = vunpack.c.l.b16 %v485
        %v939 = vunpack.c.h.b16 %v485
        %v940 = vunpack.c.l.b16 %v486
        %v941 = vunpack.c.h.b16 %v486
        %v942 = vunpack.c.l.b16 %v487
        %v943 = vunpack.c.h.b16 %v487
        %v944 = vunpack.c.l.b16 %v488
        %v945 = vunpack.c.h.b16 %v488
        %v946 = vunpack.c.l.b16 %v489
        %v947 = vunpack.c.h.b16 %v489
        %v948 = vunpack.c.l.b16 %v490
        %v949 = vunpack.c.h.b16 %v490
        %v950 = vunpack.c.l.b16 %v491
        %v951 = vunpack.c.h.b16 %v491
        %v952 = vunpack.c.l.b16 %v492
        %v953 = vunpack.c.h.b16 %v492
        %v954 = vunpack.c.l.b16 %v493
        %v955 = vunpack.c.h.b16 %v493
        %v956 = vunpack.c.l.b16 %v494
        %v957 = vunpack.c.h.b16 %v494
        %v958 = vunpack.c.l.b16 %v495
        %v959 = vunpack.c.h.b16 %v495
        %v960 = vunpack.c.l.b16 %v496
        %v961 = vunpack.c.h.b16 %v496
        %v962 = vunpack.c.l.b16 %v497
        %v963 = vunpack.c.h.b16 %v497
        %v964 = vunpack.c.l.b16 %v498
        %v965 = vunpack.c.h.b16 %v498
        %v966 = vunpack.c.l.b16 %v499
        %v967 = vunpack.c.h.b16 %v499
        %v968 = vunpack.c.l.b16 %v500
        %v969 = vunpack.c.h.b16 %v500
        %v970 = vunpack.c.l.b16 %v501
        %v971 = vunpack.c.h.b16 %v501
        %v972 = vunpack.c.l.b16 %v502
        %v973 = vunpack.c.h.b16 %v502
        %v974 = vunpack.c.l.b16 %v503
        %v975 = vunpack.c.h.b16 %v503
        %v976 = vunpack.c.l.b16 %v504
        %v977 = vunpack.c.h.b16 %v504
        %v978 = vunpack.c.l.b16 %v505
        %v979 = vunpack.c.h.b16 %v505
        %v980 = vunpack.c.l.b16 %v506
        %v981 = vunpack.c.h.b16 %v506
        %v982 = vunpack.c.l.b16 %v507
        %v983 = vunpack.c.h.b16 %v507
        %v984 = vunpack.c.l.b16 %v508
        %v985 = vunpack.c.h.b16 %v508
        %v986 = vunpack.c.l.b16 %v509
        %v987 = vunpack.c.h.b16 %v509
        %v988 = vunpack.c.l.b16 %v510
        %v989 = vunpack.c.h.b16 %v510
        %v990 = vunpack.c.l.b16 %v511
        %v991 = vunpack.c.h.b16 %v511
        %v992 = vpack.c.b16 %v932, %v928
        %v993 = vpack.c.b16 %v933, %v929
        %v994 = vpack.c.b16 %v934, %v930
        %v995 = vpack.c.b16 %v935, %v931
        %v996 = vpack.c.b16 %v940, %v936
        %v997 = vpack.c.b16 %v941, %v937
        %v998 = vpack.c.b16 %v942, %v938
        %v999 = vpack.c.b16 %v943, %v939
        %v1000 = vpack.c.b16 %v948, %v944
        %v1001 = vpack.c.b16 %v949, %v945
        %v1002 = vpack.c.b16 %v950, %v946
        %v1003 = vpack.c.b16 %v951, %v947
        %v1004 = vpack.c.b16 %v956, %v952
        %v1005 = vpack.c.b16 %v957, %v953
        %v1006 = vpack.c.b16 %v958, %v954
        %v1007 = vpack.c.b16 %v959, %v955
        %v1008 = vpack.c.b16 %v964, %v960
        %v1009 = vpack.c.b16 %v965, %v961
        %v1010 = vpack.c.b16 %v966, %v962
        %v1011 = vpack.c.b16 %v967, %v963
        %v1012 = vpack.c.b16 %v972, %v968
        %v1013 = vpack.c.b16 %v973, %v969
        %v1014 = vpack.c.b16 %v974, %v970
        %v1015 = vpack.c.b16 %v975, %v971
        %v1016 = vpack.c.b16 %v980, %v976
        %v1017 = vpack.c.b16 %v981, %v977
        %v1018 = vpack.c.b16 %v982, %v978
        %v1019 = vpack.c.b16 %v983, %v979
        %v1020 = vpack.c.b16 %v988, %v984
        %v1021 = vpack.c.b16 %v989, %v985
        %v1022 = vpack.c.b16 %v990, %v986
        %v1023 = vpack.c.b16 %v991, %v987
        %v1312 = vunpack.c.l.b16 %v640
        %v1313 = vunpack.c.h.b16 %v640
        %v1314 = vunpack.c.l.b16 %v641
        %v1315 = vunpack.c.h.b16 %v641
        %v1316 = vunpack.c.l.b16 %v642
        %v1317 = vunpack.c.h.b16 %v642
        %v1318 = vunpack.c.l.b16 %v643
        %v1319 = vunpack.c.h.b16 %v643
        %v1320 = vunpack.c.l.b16 %v644
        %v1321 = vunpack.c.h.b16 %v644
        %v1322 = vunpack.c.l.b16 %v645
        %v1323 = vunpack.c.h.b16 %v645
        %v1324 = vunpack.c.l.b16 %v646
        %v1325 = vunpack.c.h.b16 %v646
        %v1326 = vunpack.c.l.b16 %v647
        %v1327 = vunpack.c.h.b16 %v647
        %v1328 = vunpack.c.l.b16 %v648
        %v1329 = vunpack.c.h.b16 %v648
        %v1330 = vunpack.c.l.b16 %v649
        %v1331 = vunpack.c.h.b16 %v649
        %v1332 = vunpack.c.l.b16 %v650
        %v1333 = vunpack.c.h.b16 %v650
        %v1334 = vunpack.c.l.b16 %v651
        %v1335 = vunpack.c.h.b16 %v651
        %v1336 = vunpack.c.l.b16 %v652
        %v1337 = vunpack.c.h.b16 %v652
        %v1338 = vunpack.c.l.b16 %v653
        %v1339 = vunpack.c.h.b16 %v653
        %v1340 = vunpack.c.l.b16 %v654
        %v1341 = vunpack.c.h.b16 %v654
        %v1342 = vunpack.c.l.b16 %v655
        %v1343 = vunpack.c.h.b16 %v655
        %v1344 = vunpack.c.l.b16 %v656
        %v1345 = vunpack.c.h.b16 %v656
        %v1346 = vunpack.c.l.b16 %v657
        %v1347 = vunpack.c.h.b16 %v657
        %v1348 = vunpack.c.l.b16 %v658
        %v1349 = vunpack.c.h.b16 %v658
        %v1350 = vunpack.c.l.b16 %v659
        %v1351 = vunpack.c.h.b16 %v659
        %v1352 = vunpack.c.l.b16 %v660
        %v1353 = vunpack.c.h.b16 %v660
        %v1354 = vunpack.c.l.b16 %v661
        %v1355 = vunpack.c.h.b16 %v661
        %v1356 = vunpack.c.l.b16 %v662
        %v1357 = vunpack.c.h.b16 %v662
        %v1358 = vunpack.c.l.b16 %v663
        %v1359 = vunpack.c.h.b16 %v663
        %v1360 = vunpack.c.l.b16 %v664
        %v1361 = vunpack.c.h.b16 %v664
        %v1362 = vunpack.c.l.b16 %v665
        %v1363 = vunpack.c.h.b16 %v665
        %v1364 = vunpack.c.l.b16 %v666
        %v1365 = vunpack.c.h.b16 %v666
        %v1366 = vunpack.c.l.b16 %v667
        %v1367 = vunpack.c.h.b16 %v667
        %v1368 = vunpack.c.l.b16 %v668
        %v1369 = vunpack.c.h.b16 %v668
        %v1370 = vunpack.c.l.b16 %v669
        %v1371 = vunpack.c.h.b16 %v669
        %v1372 = vunpack.c.l.b16 %v670
        %v1373 = vunpack.c.h.b16 %v670
        %v1374 = vunpack.c.l.b16 %v671
        %v1375 = vunpack.c.h.b16 %v671
        %v1376 = vunpack.c.l.b16 %v672
        %v1377 = vunpack.c.h.b16 %v672
        %v1378 = vunpack.c.l.b16 %v673
        %v1379 = vunpack.c.h.b16 %v673
        %v1380 = vunpack.c.l.b16 %v674
        %v1381 = vunpack.c.h.b16 %v674
        %v1382 = vunpack.c.l.b16 %v675
        %v1383 = vunpack.c.h.b16 %v675
        %v1384 = vunpack.c.l.b16 %v676
        %v1385 = vunpack.c.h.b16 %v676
        %v1386 = vunpack.c.l.b16 %v677
        %v1387 = vunpack.c.h.b16 %v677
        %v1388 = vunpack.c.l.b16 %v678
        %v1389 = vunpack.c.h.b16 %v678
        %v1390 = vunpack.c.l.b16 %v679
        %v1391 = vunpack.c.h.b16 %v679
        %v1392 = vunpack.c.l.b16 %v680
        %v1393 = vunpack.c.h.b16 %v680
        %v1394 = vunpack.c.l.b16 %v681
        %v1395 = vunpack.c.h.b16 %v681
        %v1396 = vunpack.c.l.b16 %v682
        %v1397 = vunpack.c.h.b16 %v682
        %v1398 = vunpack.c.l.b16 %v683
        %v1399 = vunpack.c.h.b16 %v683
        %v1400 = vunpack.c.l.b16 %v684
        %v1401 = vunpack.c.h.b16 %v684
        %v1402 = vunpack.c.l.b16 %v685
        %v1403 = vunpack.c.h.b16 %v685
        %v1404 = vunpack.c.l.b16 %v686
        %v1405 = vunpack.c.h.b16 %v686
        %v1406 = vunpack.c.l.b16 %v687
        %v1407 = vunpack.c.h.b16 %v687
        %v1408 = vunpack.c.l.b16 %v688
        %v1409 = vunpack.c.h.b16 %v688
        %v1410 = vunpack.c.l.b16 %v689
        %v1411 = vunpack.c.h.b16 %v689
        %v1412 = vunpack.c.l.b16 %v690
        %v1413 = vunpack.c.h.b16 %v690
        %v1414 = vunpack.c.l.b16 %v691
        %v1415 = vunpack.c.h.b16 %v691
        %v1416 = vunpack.c.l.b16 %v692
        %v1417 = vunpack.c.h.b16 %v692
        %v1418 = vunpack.c.l.b16 %v693
        %v1419 = vunpack.c.h.b16 %v693
        %v1420 = vunpack.c.l.b16 %v694
        %v1421 = vunpack.c.h.b16 %v694
        %v1422 = vunpack.c.l.b16 %v695
        %v1423 = vunpack.c.h.b16 %v695
        %v1424 = vunpack.c.l.b16 %v696
        %v1425 = vunpack.c.h.b16 %v696
        %v1426 = vunpack.c.l.b16 %v697
        %v1427 = vunpack.c.h.b16 %v697
        %v1428 = vunpack.c.l.b16 %v698
        %v1429 = vunpack.c.h.b16 %v698
        %v1430 = vunpack.c.l.b16 %v699
        %v1431 = vunpack.c.h.b16 %v699
        %v1432 = vunpack.c.l.b16 %v700
        %v1433 = vunpack.c.h.b16 %v700
        %v1434 = vunpack.c.l.b16 %v701
        %v1435 = vunpack.c.h.b16 %v701
        %v1436 = vunpack.c.l.b16 %v702
        %v1437 = vunpack.c.h.b16 %v702
        %v1438 = vunpack.c.l.b16 %v703
        %v1439 = vunpack.c.h.b16 %v703
        %v1440 = vunpack.c.l.b16 %v704
        %v1441 = vunpack.c.h.b16 %v704
        %v1442 = vunpack.c.l.b16 %v705
        %v1443 = vunpack.c.h.b16 %v705
        %v1444 = vunpack.c.l.b16 %v706
        %v1445 = vunpack.c.h.b16 %v706
        %v1446 = vunpack.c.l.b16 %v707
        %v1447 = vunpack.c.h.b16 %v707
        %v1448 = vunpack.c.l.b16 %v708
        %v1449 = vunpack.c.h.b16 %v708
        %v1450 = vunpack.c.l.b16 %v709
        %v1451 = vunpack.c.h.b16 %v709
        %v1452 = vunpack.c.l.b16 %v710
        %v1453 = vunpack.c.h.b16 %v710
        %v1454 = vunpack.c.l.b16 %v711
        %v1455 = vunpack.c.h.b16 %v711
        %v1456 = vunpack.c.l.b16 %v712
        %v1457 = vunpack.c.h.b16 %v712
        %v1458 = vunpack.c.l.b16 %v713
        %v1459 = vunpack.c.h.b16 %v713
        %v1460 = vunpack.c.l.b16 %v714
        %v1461 = vunpack.c.h.b16 %v714
        %v1462 = vunpack.c.l.b16 %v715
        %v1463 = vunpack.c.h.b16 %v715
        %v1464 = vunpack.c.l.b16 %v716
        %v1465 = vunpack.c.h.b16 %v716
        %v1466 = vunpack.c.l.b16 %v717
        %v1467 = vunpack.c.h.b16 %v717
        %v1468 = vunpack.c.l.b16 %v718
        %v1469 = vunpack.c.h.b16 %v718
        %v1470 = vunpack.c.l.b16 %v719
        %v1471 = vunpack.c.h.b16 %v719
        %v1472 = vunpack.c.l.b16 %v720
        %v1473 = vunpack.c.h.b16 %v720
        %v1474 = vunpack.c.l.b16 %v721
        %v1475 = vunpack.c.h.b16 %v721
        %v1476 = vunpack.c.l.b16 %v722
        %v1477 = vunpack.c.h.b16 %v722
        %v1478 = vunpack.c.l.b16 %v723
        %v1479 = vunpack.c.h.b16 %v723
        %v1480 = vunpack.c.l.b16 %v724
        %v1481 = vunpack.c.h.b16 %v724
        %v1482 = vunpack.c.l.b16 %v725
        %v1483 = vunpack.c.h.b16 %v725
        %v1484 = vunpack.c.l.b16 %v726
        %v1485 = vunpack.c.h.b16 %v726
        %v1486 = vunpack.c.l.b16 %v727
        %v1487 = vunpack.c.h.b16 %v727
        %v1488 = vunpack.c.l.b16 %v728
        %v1489 = vunpack.c.h.b16 %v728
        %v1490 = vunpack.c.l.b16 %v729
        %v1491 = vunpack.c.h.b16 %v729
        %v1492 = vunpack.c.l.b16 %v730
        %v1493 = vunpack.c.h.b16 %v730
        %v1494 = vunpack.c.l.b16 %v731
        %v1495 = vunpack.c.h.b16 %v731
        %v1496 = vunpack.c.l.b16 %v732
        %v1497 = vunpack.c.h.b16 %v732
        %v1498 = vunpack.c.l.b16 %v733
        %v1499 = vunpack.c.h.b16 %v733
        %v1500 = vunpack.c.l.b16 %v734
        %v1501 = vunpack.c.h.b16 %v734
        %v1502 = vunpack.c.l.b16 %v735
        %v1503 = vunpack.c.h.b16 %v735
        %v1504 = vunpack.c.l.b16 %v736
        %v1505 = vunpack.c.h.b16 %v736
        %v1506 = vunpack.c.l.b16 %v737
        %v1507 = vunpack.c.h.b16 %v737
        %v1508 = vunpack.c.l.b16 %v738
        %v1509 = vunpack.c.h.b16 %v738
        %v1510 = vunpack.c.l.b16 %v739
        %v1511 = vunpack.c.h.b16 %v739
        %v1512 = vunpack.c.l.b16 %v740
        %v1513 = vunpack.c.h.b16 %v740
        %v1514 = vunpack.c.l.b16 %v741
        %v1515 = vunpack.c.h.b16 %v741
        %v1516 = vunpack.c.l.b16 %v742
        %v1517 = vunpack.c.h.b16 %v742
        %v1518 = vunpack.c.l.b16 %v743
        %v1519 = vunpack.c.h.b16 %v743
        %v1520 = vunpack.c.l.b16 %v744
        %v1521 = vunpack.c.h.b16 %v744
        %v1522 = vunpack.c.l.b16 %v745
        %v1523 = vunpack.c.h.b16 %v745
        %v1524 = vunpack.c.l.b16 %v746
        %v1525 = vunpack.c.h.b16 %v746
        %v1526 = vunpack.c.l.b16 %v747
        %v1527 = vunpack.c.h.b16 %v747
        %v1528 = vunpack.c.l.b16 %v748
        %v1529 = vunpack.c.h.b16 %v748
        %v1530 = vunpack.c.l.b16 %v749
        %v1531 = vunpack.c.h.b16 %v749
        %v1532 = vunpack.c.l.b16 %v750
        %v1533 = vunpack.c.h.b16 %v750
        %v1534 = vunpack.c.l.b16 %v751
        %v1535 = vunpack.c.h.b16 %v751
        %v1536 = vunpack.c.l.b16 %v752
        %v1537 = vunpack.c.h.b16 %v752
        %v1538 = vunpack.c.l.b16 %v753
        %v1539 = vunpack.c.h.b16 %v753
        %v1540 = vunpack.c.l.b16 %v754
        %v1541 = vunpack.c.h.b16 %v754
        %v1542 = vunpack.c.l.b16 %v755
        %v1543 = vunpack.c.h.b16 %v755
        %v1544 = vunpack.c.l.b16 %v756
        %v1545 = vunpack.c.h.b16 %v756
        %v1546 = vunpack.c.l.b16 %v757
        %v1547 = vunpack.c.h.b16 %v757
        %v1548 = vunpack.c.l.b16 %v758
        %v1549 = vunpack.c.h.b16 %v758
        %v1550 = vunpack.c.l.b16 %v759
        %v1551 = vunpack.c.h.b16 %v759
        %v1552 = vunpack.c.l.b16 %v760
        %v1553 = vunpack.c.h.b16 %v760
        %v1554 = vunpack.c.l.b16 %v761
        %v1555 = vunpack.c.h.b16 %v761
        %v1556 = vunpack.c.l.b16 %v762
        %v1557 = vunpack.c.h.b16 %v762
        %v1558 = vunpack.c.l.b16 %v763
        %v1559 = vunpack.c.h.b16 %v763
        %v1560 = vunpack.c.l.b16 %v764
        %v1561 = vunpack.c.h.b16 %v764
        %v1562 = vunpack.c.l.b16 %v765
        %v1563 = vunpack.c.h.b16 %v765
        %v1564 = vunpack.c.l.b16 %v766
        %v1565 = vunpack.c.h.b16 %v766
        %v1566 = vunpack.c.l.b16 %v767
        %v1567 = vunpack.c.h.b16 %v767
        %v1568 = vunpack.c.l.b16 %v768
        %v1569 = vunpack.c.h.b16 %v768
        %v1570 = vunpack.c.l.b16 %v769
        %v1571 = vunpack.c.h.b16 %v769
        %v1572 = vunpack.c.l.b16 %v770
        %v1573 = vunpack.c.h.b16 %v770
        %v1574 = vunpack.c.l.b16 %v771
        %v1575 = vunpack.c.h.b16 %v771
        %v1576 = vunpack.c.l.b16 %v772
        %v1577 = vunpack.c.h.b16 %v772
        %v1578 = vunpack.c.l.b16 %v773
        %v1579 = vunpack.c.h.b16 %v773
        %v1580 = vunpack.c.l.b16 %v774
        %v1581 = vunpack.c.h.b16 %v774
        %v1582 = vunpack.c.l.b16 %v775
        %v1583 = vunpack.c.h.b16 %v775
        %v1584 = vunpack.c.l.b16 %v776
        %v1585 = vunpack.c.h.b16 %v776
        %v1586 = vunpack.c.l.b16 %v777
        %v1587 = vunpack.c.h.b16 %v777
        %v1588 = vunpack.c.l.b16 %v778
        %v1589 = vunpack.c.h.b16 %v778
        %v1590 = vunpack.c.l.b16 %v779
        %v1591 = vunpack.c.h.b16 %v779
        %v1592 = vunpack.c.l.b16 %v780
        %v1593 = vunpack.c.h.b16 %v780
        %v1594 = vunpack.c.l.b16 %v781
        %v1595 = vunpack.c.h.b16 %v781
        %v1596 = vunpack.c.l.b16 %v782
        %v1597 = vunpack.c.h.b16 %v782
        %v1598 = vunpack.c.l.b16 %v783
        %v1599 = vunpack.c.h.b16 %v783
        %v1600 = vunpack.c.l.b16 %v784
        %v1601 = vunpack.c.h.b16 %v784
        %v1602 = vunpack.c.l.b16 %v785
        %v1603 = vunpack.c.h.b16 %v785
        %v1604 = vunpack.c.l.b16 %v786
        %v1605 = vunpack.c.h.b16 %v786
        %v1606 = vunpack.c.l.b16 %v787
        %v1607 = vunpack.c.h.b16 %v787
        %v1608 = vunpack.c.l.b16 %v788
        %v1609 = vunpack.c.h.b16 %v788
        %v1610 = vunpack.c.l.b16 %v789
        %v1611 = vunpack.c.h.b16 %v789
        %v1612 = vunpack.c.l.b16 %v790
        %v1613 = vunpack.c.h.b16 %v790
        %v1614 = vunpack.c.l.b16 %v791
        %v1615 = vunpack.c.h.b16 %v791
        %v1616 = vunpack.c.l.b16 %v792
        %v1617 = vunpack.c.h.b16 %v792
        %v1618 = vunpack.c.l.b16 %v793
        %v1619 = vunpack.c.h.b16 %v793
        %v1620 = vunpack.c.l.b16 %v794
        %v1621 = vunpack.c.h.b16 %v794
        %v1622 = vunpack.c.l.b16 %v795
        %v1623 = vunpack.c.h.b16 %v795
        %v1624 = vunpack.c.l.b16 %v796
        %v1625 = vunpack.c.h.b16 %v796
        %v1626 = vunpack.c.l.b16 %v797
        %v1627 = vunpack.c.h.b16 %v797
        %v1628 = vunpack.c.l.b16 %v798
        %v1629 = vunpack.c.h.b16 %v798
        %v1630 = vunpack.c.l.b16 %v799
        %v1631 = vunpack.c.h.b16 %v799
        %v1632 = vunpack.c.l.b16 %v800
        %v1633 = vunpack.c.h.b16 %v800
        %v1634 = vunpack.c.l.b16 %v801
        %v1635 = vunpack.c.h.b16 %v801
        %v1636 = vunpack.c.l.b16 %v802
        %v1637 = vunpack.c.h.b16 %v802
        %v1638 = vunpack.c.l.b16 %v803
        %v1639 = vunpack.c.h.b16 %v803
        %v1640 = vunpack.c.l.b16 %v804
        %v1641 = vunpack.c.h.b16 %v804
        %v1642 = vunpack.c.l.b16 %v805
        %v1643 = vunpack.c.h.b16 %v805
        %v1644 = vunpack.c.l.b16 %v806
        %v1645 = vunpack.c.h.b16 %v806
        %v1646 = vunpack.c.l.b16 %v807
        %v1647 = vunpack.c.h.b16 %v807
        %v1648 = vunpack.c.l.b16 %v808
        %v1649 = vunpack.c.h.b16 %v808
        %v1650 = vunpack.c.l.b16 %v809
        %v1651 = vunpack.c.h.b16 %v809
        %v1652 = vunpack.c.l.b16 %v810
        %v1653 = vunpack.c.h.b16 %v810
        %v1654 = vunpack.c.l.b16 %v811
        %v1655 = vunpack.c.h.b16 %v811
        %v1656 = vunpack.c.l.b16 %v812
        %v1657 = vunpack.c.h.b16 %v812
        %v1658 = vunpack.c.l.b16 %v813
        %v1659 = vunpack.c.h.b16 %v813
        %v1660 = vunpack.c.l.b16 %v814
        %v1661 = vunpack.c.h.b16 %v814
        %v1662 = vunpack.c.l.b16 %v815
        %v1663 = vunpack.c.h.b16 %v815
        %v1664 = vunpack.c.l.b16 %v816
        %v1665 = vunpack.c.h.b16 %v816
        %v1666 = vunpack.c.l.b16 %v817
        %v1667 = vunpack.c.h.b16 %v817
        %v1668 = vunpack.c.l.b16 %v818
        %v1669 = vunpack.c.h.b16 %v818
        %v1670 = vunpack.c.l.b16 %v819
        %v1671 = vunpack.c.h.b16 %v819
        %v1672 = vunpack.c.l.b16 %v820
        %v1673 = vunpack.c.h.b16 %v820
        %v1674 = vunpack.c.l.b16 %v821
        %v1675 = vunpack.c.h.b16 %v821
        %v1676 = vunpack.c.l.b16 %v822
        %v1677 = vunpack.c.h.b16 %v822
        %v1678 = vunpack.c.l.b16 %v823
        %v1679 = vunpack.c.h.b16 %v823
        %v1680 = vunpack.c.l.b16 %v824
        %v1681 = vunpack.c.h.b16 %v824
        %v1682 = vunpack.c.l.b16 %v825
        %v1683 = vunpack.c.h.b16 %v825
        %v1684 = vunpack.c.l.b16 %v826
        %v1685 = vunpack.c.h.b16 %v826
        %v1686 = vunpack.c.l.b16 %v827
        %v1687 = vunpack.c.h.b16 %v827
        %v1688 = vunpack.c.l.b16 %v828
        %v1689 = vunpack.c.h.b16 %v828
        %v1690 = vunpack.c.l.b16 %v829
        %v1691 = vunpack.c.h.b16 %v829
        %v1692 = vunpack.c.l.b16 %v830
        %v1693 = vunpack.c.h.b16 %v830
        %v1694 = vunpack.c.l.b16 %v831
        %v1695 = vunpack.c.h.b16 %v831
        %v1696 = vunpack.c.l.b16 %v832
        %v1697 = vunpack.c.h.b16 %v832
        %v1698 = vunpack.c.l.b16 %v833
        %v1699 = vunpack.c.h.b16 %v833
        %v1700 = vunpack.c.l.b16 %v834
        %v1701 = vunpack.c.h.b16 %v834
        %v1702 = vunpack.c.l.b16 %v835
        %v1703 = vunpack.c.h.b16 %v835
        %v1704 = vunpack.c.l.b16 %v836
        %v1705 = vunpack.c.h.b16 %v836
        %v1706 = vunpack.c.l.b16 %v837
        %v1707 = vunpack.c.h.b16 %v837
        %v1708 = vunpack.c.l.b16 %v838
        %v1709 = vunpack.c.h.b16 %v838
        %v1710 = vunpack.c.l.b16 %v839
        %v1711 = vunpack.c.h.b16 %v839
        %v1712 = vunpack.c.l.b16 %v840
        %v1713 = vunpack.c.h.b16 %v840
        %v1714 = vunpack.c.l.b16 %v841
        %v1715 = vunpack.c.h.b16 %v841
        %v1716 = vunpack.c.l.b16 %v842
        %v1717 = vunpack.c.h.b16 %v842
        %v1718 = vunpack.c.l.b16 %v843
        %v1719 = vunpack.c.h.b16 %v843
        %v1720 = vunpack.c.l.b16 %v844
        %v1721 = vunpack.c.h.b16 %v844
        %v1722 = vunpack.c.l.b16 %v845
        %v1723 = vunpack.c.h.b16 %v845
        %v1724 = vunpack.c.l.b16 %v846
        %v1725 = vunpack.c.h.b16 %v846
        %v1726 = vunpack.c.l.b16 %v847
        %v1727 = vunpack.c.h.b16 %v847
        %v1728 = vunpack.c.l.b16 %v848
        %v1729 = vunpack.c.h.b16 %v848
        %v1730 = vunpack.c.l.b16 %v849
        %v1731 = vunpack.c.h.b16 %v849
        %v1732 = vunpack.c.l.b16 %v850
        %v1733 = vunpack.c.h.b16 %v850
        %v1734 = vunpack.c.l.b16 %v851
        %v1735 = vunpack.c.h.b16 %v851
        %v1736 = vunpack.c.l.b16 %v852
        %v1737 = vunpack.c.h.b16 %v852
        %v1738 = vunpack.c.l.b16 %v853
        %v1739 = vunpack.c.h.b16 %v853
        %v1740 = vunpack.c.l.b16 %v854
        %v1741 = vunpack.c.h.b16 %v854
        %v1742 = vunpack.c.l.b16 %v855
        %v1743 = vunpack.c.h.b16 %v855
        %v1744 = vunpack.c.l.b16 %v856
        %v1745 = vunpack.c.h.b16 %v856
        %v1746 = vunpack.c.l.b16 %v857
        %v1747 = vunpack.c.h.b16 %v857
        %v1748 = vunpack.c.l.b16 %v858
        %v1749 = vunpack.c.h.b16 %v858
        %v1750 = vunpack.c.l.b16 %v859
        %v1751 = vunpack.c.h.b16 %v859
        %v1752 = vunpack.c.l.b16 %v860
        %v1753 = vunpack.c.h.b16 %v860
        %v1754 = vunpack.c.l.b16 %v861
        %v1755 = vunpack.c.h.b16 %v861
        %v1756 = vunpack.c.l.b16 %v862
        %v1757 = vunpack.c.h.b16 %v862
        %v1758 = vunpack.c.l.b16 %v863
        %v1759 = vunpack.c.h.b16 %v863
        %v1760 = vunpack.c.l.b16 %v864
        %v1761 = vunpack.c.h.b16 %v864
        %v1762 = vunpack.c.l.b16 %v865
        %v1763 = vunpack.c.h.b16 %v865
        %v1764 = vunpack.c.l.b16 %v866
        %v1765 = vunpack.c.h.b16 %v866
        %v1766 = vunpack.c.l.b16 %v867
        %v1767 = vunpack.c.h.b16 %v867
        %v1768 = vunpack.c.l.b16 %v868
        %v1769 = vunpack.c.h.b16 %v868
        %v1770 = vunpack.c.l.b16 %v869
        %v1771 = vunpack.c.h.b16 %v869
        %v1772 = vunpack.c.l.b16 %v870
        %v1773 = vunpack.c.h.b16 %v870
        %v1774 = vunpack.c.l.b16 %v871
        %v1775 = vunpack.c.h.b16 %v871
        %v1776 = vunpack.c.l.b16 %v872
        %v1777 = vunpack.c.h.b16 %v872
        %v1778 = vunpack.c.l.b16 %v873
        %v1779 = vunpack.c.h.b16 %v873
        %v1780 = vunpack.c.l.b16 %v874
        %v1781 = vunpack.c.h.b16 %v874
        %v1782 = vunpack.c.l.b16 %v875
        %v1783 = vunpack.c.h.b16 %v875
        %v1784 = vunpack.c.l.b16 %v876
        %v1785 = vunpack.c.h.b16 %v876
        %v1786 = vunpack.c.l.b16 %v877
        %v1787 = vunpack.c.h.b16 %v877
        %v1788 = vunpack.c.l.b16 %v878
        %v1789 = vunpack.c.h.b16 %v878
        %v1790 = vunpack.c.l.b16 %v879
        %v1791 = vunpack.c.h.b16 %v879
        %v1792 = vunpack.c.l.b16 %v880
        %v1793 = vunpack.c.h.b16 %v880
        %v1794 = vunpack.c.l.b16 %v881
        %v1795 = vunpack.c.h.b16 %v881
        %v1796 = vunpack.c.l.b16 %v882
        %v1797 = vunpack.c.h.b16 %v882
        %v1798 = vunpack.c.l.b16 %v883
        %v1799 = vunpack.c.h.b16 %v883
        %v1800 = vunpack.c.l.b16 %v884
        %v1801 = vunpack.c.h.b16 %v884
        %v1802 = vunpack.c.l.b16 %v885
        %v1803 = vunpack.c.h.b16 %v885
        %v1804 = vunpack.c.l.b16 %v886
        %v1805 = vunpack.c.h.b16 %v886
        %v1806 = vunpack.c.l.b16 %v887
        %v1807 = vunpack.c.h.b16 %v887
        %v1808 = vunpack.c.l.b16 %v888
        %v1809 = vunpack.c.h.b16 %v888
        %v1810 = vunpack.c.l.b16 %v889
        %v1811 = vunpack.c.h.b16 %v889
        %v1812 = vunpack.c.l.b16 %v890
        %v1813 = vunpack.c.h.b16 %v890
        %v1814 = vunpack.c.l.b16 %v891
        %v1815 = vunpack.c.h.b16 %v891
        %v1816 = vunpack.c.l.b16 %v892
        %v1817 = vunpack.c.h.b16 %v892
        %v1818 = vunpack.c.l.b16 %v893
        %v1819 = vunpack.c.h.b16 %v893
        %v1820 = vunpack.c.l.b16 %v894
        %v1821 = vunpack.c.h.b16 %v894
        %v1822 = vunpack.c.l.b16 %v895
        %v1823 = vunpack.c.h.b16 %v895
        %v1824 = vpack.c.b16 %v1320, %v1312
        %v1825 = vpack.c.b16 %v1321, %v1313
        %v1826 = vpack.c.b16 %v1322, %v1314
        %v1827 = vpack.c.b16 %v1323, %v1315
        %v1828 = vpack.c.b16 %v1324, %v1316
        %v1829 = vpack.c.b16 %v1325, %v1317
        %v1830 = vpack.c.b16 %v1326, %v1318
        %v1831 = vpack.c.b16 %v1327, %v1319
        %v1832 = vpack.c.b16 %v1336, %v1328
        %v1833 = vpack.c.b16 %v1337, %v1329
        %v1834 = vpack.c.b16 %v1338, %v1330
        %v1835 = vpack.c.b16 %v1339, %v1331
        %v1836 = vpack.c.b16 %v1340, %v1332
        %v1837 = vpack.c.b16 %v1341, %v1333
        %v1838 = vpack.c.b16 %v1342, %v1334
        %v1839 = vpack.c.b16 %v1343, %v1335
        %v1840 = vpack.c.b16 %v1352, %v1344
        %v1841 = vpack.c.b16 %v1353, %v1345
        %v1842 = vpack.c.b16 %v1354, %v1346
        %v1843 = vpack.c.b16 %v1355, %v1347
        %v1844 = vpack.c.b16 %v1356, %v1348
        %v1845 = vpack.c.b16 %v1357, %v1349
        %v1846 = vpack.c.b16 %v1358, %v1350
        %v1847 = vpack.c.b16 %v1359, %v1351
        %v1848 = vpack.c.b16 %v1368, %v1360
        %v1849 = vpack.c.b16 %v1369, %v1361
        %v1850 = vpack.c.b16 %v1370, %v1362
        %v1851 = vpack.c.b16 %v1371, %v1363
        %v1852 = vpack.c.b16 %v1372, %v1364
        %v1853 = vpack.c.b16 %v1373, %v1365
        %v1854 = vpack.c.b16 %v1374, %v1366
        %v1855 = vpack.c.b16 %v1375, %v1367
        %v1856 = vpack.c.b16 %v1384, %v1376
        %v1857 = vpack.c.b16 %v1385, %v1377
        %v1858 = vpack.c.b16 %v1386, %v1378
        %v1859 = vpack.c.b16 %v1387, %v1379
        %v1860 = vpack.c.b16 %v1388, %v1380
        %v1861 = vpack.c.b16 %v1389, %v1381
        %v1862 = vpack.c.b16 %v1390, %v1382
        %v1863 = vpack.c.b16 %v1391, %v1383
        %v1864 = vpack.c.b16 %v1400, %v1392
        %v1865 = vpack.c.b16 %v1401, %v1393
        %v1866 = vpack.c.b16 %v1402, %v1394
        %v1867 = vpack.c.b16 %v1403, %v1395
        %v1868 = vpack.c.b16 %v1404, %v1396
        %v1869 = vpack.c.b16 %v1405, %v1397
        %v1870 = vpack.c.b16 %v1406, %v1398
        %v1871 = vpack.c.b16 %v1407, %v1399
        %v1872 = vpack.c.b16 %v1416, %v1408
        %v1873 = vpack.c.b16 %v1417, %v1409
        %v1874 = vpack.c.b16 %v1418, %v1410
        %v1875 = vpack.c.b16 %v1419, %v1411
        %v1876 = vpack.c.b16 %v1420, %v1412
        %v1877 = vpack.c.b16 %v1421, %v1413
        %v1878 = vpack.c.b16 %v1422, %v1414
        %v1879 = vpack.c.b16 %v1423, %v1415
        %v1880 = vpack.c.b16 %v1432, %v1424
        %v1881 = vpack.c.b16 %v1433, %v1425
        %v1882 = vpack.c.b16 %v1434, %v1426
        %v1883 = vpack.c.b16 %v1435, %v1427
        %v1884 = vpack.c.b16 %v1436, %v1428
        %v1885 = vpack.c.b16 %v1437, %v1429
        %v1886 = vpack.c.b16 %v1438, %v1430
        %v1887 = vpack.c.b16 %v1439, %v1431
        %v1888 = vpack.c.b16 %v1448, %v1440
        %v1889 = vpack.c.b16 %v1449, %v1441
        %v1890 = vpack.c.b16 %v1450, %v1442
        %v1891 = vpack.c.b16 %v1451, %v1443
        %v1892 = vpack.c.b16 %v1452, %v1444
        %v1893 = vpack.c.b16 %v1453, %v1445
        %v1894 = vpack.c.b16 %v1454, %v1446
        %v1895 = vpack.c.b16 %v1455, %v1447
        %v1896 = vpack.c.b16 %v1464, %v1456
        %v1897 = vpack.c.b16 %v1465, %v1457
        %v1898 = vpack.c.b16 %v1466, %v1458
        %v1899 = vpack.c.b16 %v1467, %v1459
        %v1900 = vpack.c.b16 %v1468, %v1460
        %v1901 = vpack.c.b16 %v1469, %v1461
        %v1902 = vpack.c.b16 %v1470, %v1462
        %v1903 = vpack.c.b16 %v1471, %v1463
        %v1904 = vpack.c.b16 %v1480, %v1472
        %v1905 = vpack.c.b16 %v1481, %v1473
        %v1906 = vpack.c.b16 %v1482, %v1474
        %v1907 = vpack.c.b16 %v1483, %v1475
        %v1908 = vpack.c.b16 %v1484, %v1476
        %v1909 = vpack.c.b16 %v1485, %v1477
        %v1910 = vpack.c.b16 %v1486, %v1478
        %v1911 = vpack.c.b16 %v1487, %v1479
        %v1912 = vpack.c.b16 %v1496, %v1488
        %v1913 = vpack.c.b16 %v1497, %v1489
        %v1914 = vpack.c.b16 %v1498, %v1490
        %v1915 = vpack.c.b16 %v1499, %v1491
        %v1916 = vpack.c.b16 %v1500, %v1492
        %v1917 = vpack.c.b16 %v1501, %v1493
        %v1918 = vpack.c.b16 %v1502, %v1494
        %v1919 = vpack.c.b16 %v1503, %v1495
        %v1920 = vpack.c.b16 %v1512, %v1504
        %v1921 = vpack.c.b16 %v1513, %v1505
        %v1922 = vpack.c.b16 %v1514, %v1506
        %v1923 = vpack.c.b16 %v1515, %v1507
        %v1924 = vpack.c.b16 %v1516, %v1508
        %v1925 = vpack.c.b16 %v1517, %v1509
        %v1926 = vpack.c.b16 %v1518, %v1510
        %v1927 = vpack.c.b16 %v1519, %v1511
        %v1928 = vpack.c.b16 %v1528, %v1520
        %v1929 = vpack.c.b16 %v1529, %v1521
        %v1930 = vpack.c.b16 %v1530, %v1522
        %v1931 = vpack.c.b16 %v1531, %v1523
        %v1932 = vpack.c.b16 %v1532, %v1524
        %v1933 = vpack.c.b16 %v1533, %v1525
        %v1934 = vpack.c.b16 %v1534, %v1526
        %v1935 = vpack.c.b16 %v1535, %v1527
        %v1936 = vpack.c.b16 %v1544, %v1536
        %v1937 = vpack.c.b16 %v1545, %v1537
        %v1938 = vpack.c.b16 %v1546, %v1538
        %v1939 = vpack.c.b16 %v1547, %v1539
        %v1940 = vpack.c.b16 %v1548, %v1540
        %v1941 = vpack.c.b16 %v1549, %v1541
        %v1942 = vpack.c.b16 %v1550, %v1542
        %v1943 = vpack.c.b16 %v1551, %v1543
        %v1944 = vpack.c.b16 %v1560, %v1552
        %v1945 = vpack.c.b16 %v1561, %v1553
        %v1946 = vpack.c.b16 %v1562, %v1554
        %v1947 = vpack.c.b16 %v1563, %v1555
        %v1948 = vpack.c.b16 %v1564, %v1556
        %v1949 = vpack.c.b16 %v1565, %v1557
        %v1950 = vpack.c.b16 %v1566, %v1558
        %v1951 = vpack.c.b16 %v1567, %v1559
        %v1952 = vpack.c.b16 %v1576, %v1568
        %v1953 = vpack.c.b16 %v1577, %v1569
        %v1954 = vpack.c.b16 %v1578, %v1570
        %v1955 = vpack.c.b16 %v1579, %v1571
        %v1956 = vpack.c.b16 %v1580, %v1572
        %v1957 = vpack.c.b16 %v1581, %v1573
        %v1958 = vpack.c.b16 %v1582, %v1574
        %v1959 = vpack.c.b16 %v1583, %v1575
        %v1960 = vpack.c.b16 %v1592, %v1584
        %v1961 = vpack.c.b16 %v1593, %v1585
        %v1962 = vpack.c.b16 %v1594, %v1586
        %v1963 = vpack.c.b16 %v1595, %v1587
        %v1964 = vpack.c.b16 %v1596, %v1588
        %v1965 = vpack.c.b16 %v1597, %v1589
        %v1966 = vpack.c.b16 %v1598, %v1590
        %v1967 = vpack.c.b16 %v1599, %v1591
        %v1968 = vpack.c.b16 %v1608, %v1600
        %v1969 = vpack.c.b16 %v1609, %v1601
        %v1970 = vpack.c.b16 %v1610, %v1602
        %v1971 = vpack.c.b16 %v1611, %v1603
        %v1972 = vpack.c.b16 %v1612, %v1604
        %v1973 = vpack.c.b16 %v1613, %v1605
        %v1974 = vpack.c.b16 %v1614, %v1606
        %v1975 = vpack.c.b16 %v1615, %v1607
        %v1976 = vpack.c.b16 %v1624, %v1616
        %v1977 = vpack.c.b16 %v1625, %v1617
        %v1978 = vpack.c.b16 %v1626, %v1618
        %v1979 = vpack.c.b16 %v1627, %v1619
        %v1980 = vpack.c.b16 %v1628, %v1620
        %v1981 = vpack.c.b16 %v1629, %v1621
        %v1982 = vpack.c.b16 %v1630, %v1622
        %v1983 = vpack.c.b16 %v1631, %v1623
        %v1984 = vpack.c.b16 %v1640, %v1632
        %v1985 = vpack.c.b16 %v1641, %v1633
        %v1986 = vpack.c.b16 %v1642, %v1634
        %v1987 = vpack.c.b16 %v1643, %v1635
        %v1988 = vpack.c.b16 %v1644, %v1636
        %v1989 = vpack.c.b16 %v1645, %v1637
        %v1990 = vpack.c.b16 %v1646, %v1638
        %v1991 = vpack.c.b16 %v1647, %v1639
        %v1992 = vpack.c.b16 %v1656, %v1648
        %v1993 = vpack.c.b16 %v1657, %v1649
        %v1994 = vpack.c.b16 %v1658, %v1650
        %v1995 = vpack.c.b16 %v1659, %v1651
        %v1996 = vpack.c.b16 %v1660, %v1652
        %v1997 = vpack.c.b16 %v1661, %v1653
        %v1998 = vpack.c.b16 %v1662, %v1654
        %v1999 = vpack.c.b16 %v1663, %v1655
        %v2000 = vpack.c.b16 %v1672, %v1664
        %v2001 = vpack.c.b16 %v1673, %v1665
        %v2002 = vpack.c.b16 %v1674, %v1666
        %v2003 = vpack.c.b16 %v1675, %v1667
        %v2004 = vpack.c.b16 %v1676, %v1668
        %v2005 = vpack.c.b16 %v1677, %v1669
        %v2006 = vpack.c.b16 %v1678, %v1670
        %v2007 = vpack.c.b16 %v1679, %v1671
        %v2008 = vpack.c.b16 %v1688, %v1680
        %v2009 = vpack.c.b16 %v1689, %v1681
        %v2010 = vpack.c.b16 %v1690, %v1682
        %v2011 = vpack.c.b16 %v1691, %v1683
        %v2012 = vpack.c.b16 %v1692, %v1684
        %v2013 = vpack.c.b16 %v1693, %v1685
        %v2014 = vpack.c.b16 %v1694, %v1686
        %v2015 = vpack.c.b16 %v1695, %v1687
        %v2016 = vpack.c.b16 %v1704, %v1696
        %v2017 = vpack.c.b16 %v1705, %v1697
        %v2018 = vpack.c.b16 %v1706, %v1698
        %v2019 = vpack.c.b16 %v1707, %v1699
        %v2020 = vpack.c.b16 %v1708, %v1700
        %v2021 = vpack.c.b16 %v1709, %v1701
        %v2022 = vpack.c.b16 %v1710, %v1702
        %v2023 = vpack.c.b16 %v1711, %v1703
        %v2024 = vpack.c.b16 %v1720, %v1712
        %v2025 = vpack.c.b16 %v1721, %v1713
        %v2026 = vpack.c.b16 %v1722, %v1714
        %v2027 = vpack.c.b16 %v1723, %v1715
        %v2028 = vpack.c.b16 %v1724, %v1716
        %v2029 = vpack.c.b16 %v1725, %v1717
        %v2030 = vpack.c.b16 %v1726, %v1718
        %v2031 = vpack.c.b16 %v1727, %v1719
        %v2032 = vpack.c.b16 %v1736, %v1728
        %v2033 = vpack.c.b16 %v1737, %v1729
        %v2034 = vpack.c.b16 %v1738, %v1730
        %v2035 = vpack.c.b16 %v1739, %v1731
        %v2036 = vpack.c.b16 %v1740, %v1732
        %v2037 = vpack.c.b16 %v1741, %v1733
        %v2038 = vpack.c.b16 %v1742, %v1734
        %v2039 = vpack.c.b16 %v1743, %v1735
        %v2040 = vpack.c.b16 %v1752, %v1744
        %v2041 = vpack.c.b16 %v1753, %v1745
        %v2042 = vpack.c.b16 %v1754, %v1746
        %v2043 = vpack.c.b16 %v1755, %v1747
        %v2044 = vpack.c.b16 %v1756, %v1748
        %v2045 = vpack.c.b16 %v1757, %v1749
        %v2046 = vpack.c.b16 %v1758, %v1750
        %v2047 = vpack.c.b16 %v1759, %v1751
        %v2048 = vpack.c.b16 %v1768, %v1760
        %v2049 = vpack.c.b16 %v1769, %v1761
        %v2050 = vpack.c.b16 %v1770, %v1762
        %v2051 = vpack.c.b16 %v1771, %v1763
        %v2052 = vpack.c.b16 %v1772, %v1764
        %v2053 = vpack.c.b16 %v1773, %v1765
        %v2054 = vpack.c.b16 %v1774, %v1766
        %v2055 = vpack.c.b16 %v1775, %v1767
        %v2056 = vpack.c.b16 %v1784, %v1776
        %v2057 = vpack.c.b16 %v1785, %v1777
        %v2058 = vpack.c.b16 %v1786, %v1778
        %v2059 = vpack.c.b16 %v1787, %v1779
        %v2060 = vpack.c.b16 %v1788, %v1780
        %v2061 = vpack.c.b16 %v1789, %v1781
        %v2062 = vpack.c.b16 %v1790, %v1782
        %v2063 = vpack.c.b16 %v1791, %v1783
        %v2064 = vpack.c.b16 %v1800, %v1792
        %v2065 = vpack.c.b16 %v1801, %v1793
        %v2066 = vpack.c.b16 %v1802, %v1794
        %v2067 = vpack.c.b16 %v1803, %v1795
        %v2068 = vpack.c.b16 %v1804, %v1796
        %v2069 = vpack.c.b16 %v1805, %v1797
        %v2070 = vpack.c.b16 %v1806, %v1798
        %v2071 = vpack.c.b16 %v1807, %v1799
        %v2072 = vpack.c.b16 %v1816, %v1808
        %v2073 = vpack.c.b16 %v1817, %v1809
        %v2074 = vpack.c.b16 %v1818, %v1810
        %v2075 = vpack.c.b16 %v1819, %v1811
        %v2076 = vpack.c.b16 %v1820, %v1812
        %v2077 = vpack.c.b16 %v1821, %v1813
        %v2078 = vpack.c.b16 %v1822, %v1814
        %v2079 = vpack.c.b16 %v1823, %v1815
        %2336 = vmatprep.subr.bf16.mxu0 %v1825
        %2337 = vmatpush1.bf16.msra.mxu0 %v1824
        %2338 = vmatprep.subr.bf16.mxu0 %v1833
        %2339 = vmatpush1.bf16.msra.mxu0 %v1832
        %2340 = vmatprep.subr.bf16.mxu0 %v1841
        %2341 = vmatpush1.bf16.msra.mxu0 %v1840
        %2342 = vmatprep.subr.bf16.mxu0 %v1849
        %2343 = vmatpush1.bf16.msra.mxu0 %v1848
        %2344 = vmatprep.subr.bf16.mxu0 %v1857
        %2345 = vmatpush1.bf16.msra.mxu0 %v1856
        %2346 = vmatprep.subr.bf16.mxu0 %v1865
        %2347 = vmatpush1.bf16.msra.mxu0 %v1864
        %2348 = vmatprep.subr.bf16.mxu0 %v1873
        %2349 = vmatpush1.bf16.msra.mxu0 %v1872
        %2350 = vmatprep.subr.bf16.mxu0 %v1881
        %2351 = vmatpush1.bf16.msra.mxu0 %v1880
        %2352 = vmatprep.subr.bf16.mxu0 %v1889
        %2353 = vmatpush1.bf16.msra.mxu0 %v1888
        %2354 = vmatprep.subr.bf16.mxu0 %v1897
        %2355 = vmatpush1.bf16.msra.mxu0 %v1896
        %2356 = vmatprep.subr.bf16.mxu0 %v1905
        %2357 = vmatpush1.bf16.msra.mxu0 %v1904
        %2358 = vmatprep.subr.bf16.mxu0 %v1913
        %2359 = vmatpush1.bf16.msra.mxu0 %v1912
        %2360 = vmatprep.subr.bf16.mxu0 %v1921
        %2361 = vmatpush1.bf16.msra.mxu0 %v1920
        %2362 = vmatprep.subr.bf16.mxu0 %v1929
        %2363 = vmatpush1.bf16.msra.mxu0 %v1928
        %2364 = vmatprep.subr.bf16.mxu0 %v1937
        %2365 = vmatpush1.bf16.msra.mxu0 %v1936
        %2366 = vmatprep.subr.bf16.mxu0 %v1945
        %2367 = vmatpush1.bf16.msra.mxu0 %v1944
        %2368 = vmatprep.mubr.bf16.mxu0 %v993
        %2369 = vmatmul.mubr.bf16.gmra.mrb[0].mxu0 %v992
        %v2370 = vpop.f32.mrb[0].mxu0
        %v2371 = vadd.f32 0.0, %v2370
        %v2372 = vpop.f32.mrb[0].mxu0
        %v2373 = vadd.f32 0.0, %v2372
        %v2374 = vpop.f32.mrb[0].mxu0
        %v2375 = vadd.f32 0.0, %v2374
        %v2376 = vpop.f32.mrb[0].mxu0
        %v2377 = vadd.f32 0.0, %v2376
        %2378 = vmatprep.mubr.bf16.mxu0 %v997
        %2379 = vmatmul.mubr.bf16.gmra.mrb[0].mxu0 %v996
        %v2380 = vpop.f32.mrb[0].mxu0
        %v2381 = vadd.f32 0.0, %v2380
        %v2382 = vpop.f32.mrb[0].mxu0
        %v2383 = vadd.f32 0.0, %v2382
        %v2384 = vpop.f32.mrb[0].mxu0
        %v2385 = vadd.f32 0.0, %v2384
        %v2386 = vpop.f32.mrb[0].mxu0
        %v2387 = vadd.f32 0.0, %v2386
        %2388 = vmatprep.mubr.bf16.mxu0 %v1001
        %2389 = vmatmul.mubr.bf16.gmra.mrb[0].mxu0 %v1000
        %v2390 = vpop.f32.mrb[0].mxu0
        %v2391 = vadd.f32 0.0, %v2390
        %v2392 = vpop.f32.mrb[0].mxu0
        %v2393 = vadd.f32 0.0, %v2392
        %v2394 = vpop.f32.mrb[0].mxu0
        %v2395 = vadd.f32 0.0, %v2394
        %v2396 = vpop.f32.mrb[0].mxu0
        %v2397 = vadd.f32 0.0, %v2396
        %2398 = vmatprep.mubr.bf16.mxu0 %v1005
        %2399 = vmatmul.mubr.bf16.gmra.mrb[0].mxu0 %v1004
        %v2400 = vpop.f32.mrb[0].mxu0
        %v2401 = vadd.f32 0.0, %v2400
        %v2402 = vpop.f32.mrb[0].mxu0
        %v2403 = vadd.f32 0.0, %v2402
        %v2404 = vpop.f32.mrb[0].mxu0
        %v2405 = vadd.f32 0.0, %v2404
        %v2406 = vpop.f32.mrb[0].mxu0
        %v2407 = vadd.f32 0.0, %v2406
        %2408 = vmatprep.mubr.bf16.mxu0 %v1009
        %2409 = vmatmul.mubr.bf16.gmra.mrb[0].mxu0 %v1008
        %v2410 = vpop.f32.mrb[0].mxu0
        %v2411 = vadd.f32 0.0, %v2410
        %v2412 = vpop.f32.mrb[0].mxu0
        %v2413 = vadd.f32 0.0, %v2412
        %v2414 = vpop.f32.mrb[0].mxu0
        %v2415 = vadd.f32 0.0, %v2414
        %v2416 = vpop.f32.mrb[0].mxu0
        %v2417 = vadd.f32 0.0, %v2416
        %2418 = vmatprep.mubr.bf16.mxu0 %v1013
        %2419 = vmatmul.mubr.bf16.gmra.mrb[0].mxu0 %v1012
        %v2420 = vpop.f32.mrb[0].mxu0
        %v2421 = vadd.f32 0.0, %v2420
        %v2422 = vpop.f32.mrb[0].mxu0
        %v2423 = vadd.f32 0.0, %v2422
        %v2424 = vpop.f32.mrb[0].mxu0
        %v2425 = vadd.f32 0.0, %v2424
        %v2426 = vpop.f32.mrb[0].mxu0
        %v2427 = vadd.f32 0.0, %v2426
        %2428 = vmatprep.mubr.bf16.mxu0 %v1017
        %2429 = vmatmul.mubr.bf16.gmra.mrb[0].mxu0 %v1016
        %v2430 = vpop.f32.mrb[0].mxu0
        %v2431 = vadd.f32 0.0, %v2430
        %v2432 = vpop.f32.mrb[0].mxu0
        %v2433 = vadd.f32 0.0, %v2432
        %v2434 = vpop.f32.mrb[0].mxu0
        %v2435 = vadd.f32 0.0, %v2434
        %v2436 = vpop.f32.mrb[0].mxu0
        %v2437 = vadd.f32 0.0, %v2436
        %2438 = vmatprep.mubr.bf16.mxu0 %v1021
        %2439 = vmatmul.mubr.bf16.gmra.mrb[0].mxu0 %v1020
        %v2440 = vpop.f32.mrb[0].mxu0
        %v2441 = vadd.f32 0.0, %v2440
        %v2442 = vpop.f32.mrb[0].mxu0
        %v2443 = vadd.f32 0.0, %v2442
        %v2444 = vpop.f32.mrb[0].mxu0
        %v2445 = vadd.f32 0.0, %v2444
        %v2446 = vpop.f32.mrb[0].mxu0
        %v2447 = vadd.f32 0.0, %v2446
        %2448 = vdwg.mxu0
        %2449 = vmatprep.subr.bf16.mxu0 %v1953
        %2450 = vmatpush1.bf16.msra.mxu0 %v1952
        %2451 = vmatprep.subr.bf16.mxu0 %v1961
        %2452 = vmatpush1.bf16.msra.mxu0 %v1960
        %2453 = vmatprep.subr.bf16.mxu0 %v1969
        %2454 = vmatpush1.bf16.msra.mxu0 %v1968
        %2455 = vmatprep.subr.bf16.mxu0 %v1977
        %2456 = vmatpush1.bf16.msra.mxu0 %v1976
        %2457 = vmatprep.subr.bf16.mxu0 %v1985
        %2458 = vmatpush1.bf16.msra.mxu0 %v1984
        %2459 = vmatprep.subr.bf16.mxu0 %v1993
        %2460 = vmatpush1.bf16.msra.mxu0 %v1992
        %2461 = vmatprep.subr.bf16.mxu0 %v2001
        %2462 = vmatpush1.bf16.msra.mxu0 %v2000
        %2463 = vmatprep.subr.bf16.mxu0 %v2009
        %2464 = vmatpush1.bf16.msra.mxu0 %v2008
        %2465 = vmatprep.subr.bf16.mxu0 %v2017
        %2466 = vmatpush1.bf16.msra.mxu0 %v2016
        %2467 = vmatprep.subr.bf16.mxu0 %v2025
        %2468 = vmatpush1.bf16.msra.mxu0 %v2024
        %2469 = vmatprep.subr.bf16.mxu0 %v2033
        %2470 = vmatpush1.bf16.msra.mxu0 %v2032
        %2471 = vmatprep.subr.bf16.mxu0 %v2041
        %2472 = vmatpush1.bf16.msra.mxu0 %v2040
        %2473 = vmatprep.subr.bf16.mxu0 %v2049
        %2474 = vmatpush1.bf16.msra.mxu0 %v2048
        %2475 = vmatprep.subr.bf16.mxu0 %v2057
        %2476 = vmatpush1.bf16.msra.mxu0 %v2056
        %2477 = vmatprep.subr.bf16.mxu0 %v2065
        %2478 = vmatpush1.bf16.msra.mxu0 %v2064
        %2479 = vmatprep.subr.bf16.mxu0 %v2073
        %2480 = vmatpush1.bf16.msra.mxu0 %v2072
        %2481 = vmatprep.mubr.bf16.mxu0 %v995
        %2482 = vmatmul.mubr.bf16.gmra.mrb[0].mxu0 %v994
        %v2483 = vpop.f32.mrb[0].mxu0
        %v2484 = vadd.f32 %v2371, %v2483
        %v2485 = vpop.f32.mrb[0].mxu0
        %v2486 = vadd.f32 %v2373, %v2485
        %v2487 = vpop.f32.mrb[0].mxu0
        %v2488 = vadd.f32 %v2375, %v2487
        %v2489 = vpop.f32.mrb[0].mxu0
        %v2490 = vadd.f32 %v2377, %v2489
        %2491 = vmatprep.mubr.bf16.mxu0 %v999
        %2492 = vmatmul.mubr.bf16.gmra.mrb[0].mxu0 %v998
        %v2493 = vpop.f32.mrb[0].mxu0
        %v2494 = vadd.f32 %v2381, %v2493
        %v2495 = vpop.f32.mrb[0].mxu0
        %v2496 = vadd.f32 %v2383, %v2495
        %v2497 = vpop.f32.mrb[0].mxu0
        %v2498 = vadd.f32 %v2385, %v2497
        %v2499 = vpop.f32.mrb[0].mxu0
        %v2500 = vadd.f32 %v2387, %v2499
        %2501 = vmatprep.mubr.bf16.mxu0 %v1003
        %2502 = vmatmul.mubr.bf16.gmra.mrb[0].mxu0 %v1002
        %v2503 = vpop.f32.mrb[0].mxu0
        %v2504 = vadd.f32 %v2391, %v2503
        %v2505 = vpop.f32.mrb[0].mxu0
        %v2506 = vadd.f32 %v2393, %v2505
        %v2507 = vpop.f32.mrb[0].mxu0
        %v2508 = vadd.f32 %v2395, %v2507
        %v2509 = vpop.f32.mrb[0].mxu0
        %v2510 = vadd.f32 %v2397, %v2509
        %2511 = vmatprep.mubr.bf16.mxu0 %v1007
        %2512 = vmatmul.mubr.bf16.gmra.mrb[0].mxu0 %v1006
        %v2513 = vpop.f32.mrb[0].mxu0
        %v2514 = vadd.f32 %v2401, %v2513
        %v2515 = vpop.f32.mrb[0].mxu0
        %v2516 = vadd.f32 %v2403, %v2515
        %v2517 = vpop.f32.mrb[0].mxu0
        %v2518 = vadd.f32 %v2405, %v2517
        %v2519 = vpop.f32.mrb[0].mxu0
        %v2520 = vadd.f32 %v2407, %v2519
        %2521 = vmatprep.mubr.bf16.mxu0 %v1011
        %2522 = vmatmul.mubr.bf16.gmra.mrb[0].mxu0 %v1010
        %v2523 = vpop.f32.mrb[0].mxu0
        %v2524 = vadd.f32 %v2411, %v2523
        %v2525 = vpop.f32.mrb[0].mxu0
        %v2526 = vadd.f32 %v2413, %v2525
        %v2527 = vpop.f32.mrb[0].mxu0
        %v2528 = vadd.f32 %v2415, %v2527
        %v2529 = vpop.f32.mrb[0].mxu0
        %v2530 = vadd.f32 %v2417, %v2529
        %2531 = vmatprep.mubr.bf16.mxu0 %v1015
        %2532 = vmatmul.mubr.bf16.gmra.mrb[0].mxu0 %v1014
        %v2533 = vpop.f32.mrb[0].mxu0
        %v2534 = vadd.f32 %v2421, %v2533
        %v2535 = vpop.f32.mrb[0].mxu0
        %v2536 = vadd.f32 %v2423, %v2535
        %v2537 = vpop.f32.mrb[0].mxu0
        %v2538 = vadd.f32 %v2425, %v2537
        %v2539 = vpop.f32.mrb[0].mxu0
        %v2540 = vadd.f32 %v2427, %v2539
        %2541 = vmatprep.mubr.bf16.mxu0 %v1019
        %2542 = vmatmul.mubr.bf16.gmra.mrb[0].mxu0 %v1018
        %v2543 = vpop.f32.mrb[0].mxu0
        %v2544 = vadd.f32 %v2431, %v2543
        %v2545 = vpop.f32.mrb[0].mxu0
        %v2546 = vadd.f32 %v2433, %v2545
        %v2547 = vpop.f32.mrb[0].mxu0
        %v2548 = vadd.f32 %v2435, %v2547
        %v2549 = vpop.f32.mrb[0].mxu0
        %v2550 = vadd.f32 %v2437, %v2549
        %2551 = vmatprep.mubr.bf16.mxu0 %v1023
        %2552 = vmatmul.mubr.bf16.gmra.mrb[0].mxu0 %v1022
        %v2553 = vpop.f32.mrb[0].mxu0
        %v2554 = vadd.f32 %v2441, %v2553
        %v2555 = vpop.f32.mrb[0].mxu0
        %v2556 = vadd.f32 %v2443, %v2555
        %v2557 = vpop.f32.mrb[0].mxu0
        %v2558 = vadd.f32 %v2445, %v2557
        %v2559 = vpop.f32.mrb[0].mxu0
        %v2560 = vadd.f32 %v2447, %v2559
        %2561 = vdwg.mxu0
        %2562 = vmatprep.subr.bf16.mxu0 %v1827
        %2563 = vmatpush1.bf16.msra.mxu0 %v1826
        %2564 = vmatprep.subr.bf16.mxu0 %v1835
        %2565 = vmatpush1.bf16.msra.mxu0 %v1834
        %2566 = vmatprep.subr.bf16.mxu0 %v1843
        %2567 = vmatpush1.bf16.msra.mxu0 %v1842
        %2568 = vmatprep.subr.bf16.mxu0 %v1851
        %2569 = vmatpush1.bf16.msra.mxu0 %v1850
        %2570 = vmatprep.subr.bf16.mxu0 %v1859
        %2571 = vmatpush1.bf16.msra.mxu0 %v1858
        %2572 = vmatprep.subr.bf16.mxu0 %v1867
        %2573 = vmatpush1.bf16.msra.mxu0 %v1866
        %2574 = vmatprep.subr.bf16.mxu0 %v1875
        %2575 = vmatpush1.bf16.msra.mxu0 %v1874
        %2576 = vmatprep.subr.bf16.mxu0 %v1883
        %2577 = vmatpush1.bf16.msra.mxu0 %v1882
        %2578 = vmatprep.subr.bf16.mxu0 %v1891
        %2579 = vmatpush1.bf16.msra.mxu0 %v1890
        %2580 = vmatprep.subr.bf16.mxu0 %v1899
        %2581 = vmatpush1.bf16.msra.mxu0 %v1898
        %2582 = vmatprep.subr.bf16.mxu0 %v1907
        %2583 = vmatpush1.bf16.msra.mxu0 %v1906
        %2584 = vmatprep.subr.bf16.mxu0 %v1915
        %2585 = vmatpush1.bf16.msra.mxu0 %v1914
        %2586 = vmatprep.subr.bf16.mxu0 %v1923
        %2587 = vmatpush1.bf16.msra.mxu0 %v1922
        %2588 = vmatprep.subr.bf16.mxu0 %v1931
        %2589 = vmatpush1.bf16.msra.mxu0 %v1930
        %2590 = vmatprep.subr.bf16.mxu0 %v1939
        %2591 = vmatpush1.bf16.msra.mxu0 %v1938
        %2592 = vmatprep.subr.bf16.mxu0 %v1947
        %2593 = vmatpush1.bf16.msra.mxu0 %v1946
        %2594 = vmatprep.mubr.bf16.mxu0 %v993
        %2595 = vmatmul.mubr.bf16.gmra.mrb[0].mxu0 %v992
        %v2596 = vpop.f32.mrb[0].mxu0
        %v2597 = vadd.f32 0.0, %v2596
        %v2598 = vpop.f32.mrb[0].mxu0
        %v2599 = vadd.f32 0.0, %v2598
        %v2600 = vpop.f32.mrb[0].mxu0
        %v2601 = vadd.f32 0.0, %v2600
        %v2602 = vpop.f32.mrb[0].mxu0
        %v2603 = vadd.f32 0.0, %v2602
        %2604 = vmatprep.mubr.bf16.mxu0 %v997
        %2605 = vmatmul.mubr.bf16.gmra.mrb[0].mxu0 %v996
        %v2606 = vpop.f32.mrb[0].mxu0
        %v2607 = vadd.f32 0.0, %v2606
        %v2608 = vpop.f32.mrb[0].mxu0
        %v2609 = vadd.f32 0.0, %v2608
        %v2610 = vpop.f32.mrb[0].mxu0
        %v2611 = vadd.f32 0.0, %v2610
        %v2612 = vpop.f32.mrb[0].mxu0
        %v2613 = vadd.f32 0.0, %v2612
        %2614 = vmatprep.mubr.bf16.mxu0 %v1001
        %2615 = vmatmul.mubr.bf16.gmra.mrb[0].mxu0 %v1000
        %v2616 = vpop.f32.mrb[0].mxu0
        %v2617 = vadd.f32 0.0, %v2616
        %v2618 = vpop.f32.mrb[0].mxu0
        %v2619 = vadd.f32 0.0, %v2618
        %v2620 = vpop.f32.mrb[0].mxu0
        %v2621 = vadd.f32 0.0, %v2620
        %v2622 = vpop.f32.mrb[0].mxu0
        %v2623 = vadd.f32 0.0, %v2622
        %2624 = vmatprep.mubr.bf16.mxu0 %v1005
        %2625 = vmatmul.mubr.bf16.gmra.mrb[0].mxu0 %v1004
        %v2626 = vpop.f32.mrb[0].mxu0
        %v2627 = vadd.f32 0.0, %v2626
        %v2628 = vpop.f32.mrb[0].mxu0
        %v2629 = vadd.f32 0.0, %v2628
        %v2630 = vpop.f32.mrb[0].mxu0
        %v2631 = vadd.f32 0.0, %v2630
        %v2632 = vpop.f32.mrb[0].mxu0
        %v2633 = vadd.f32 0.0, %v2632
        %2634 = vmatprep.mubr.bf16.mxu0 %v1009
        %2635 = vmatmul.mubr.bf16.gmra.mrb[0].mxu0 %v1008
        %v2636 = vpop.f32.mrb[0].mxu0
        %v2637 = vadd.f32 0.0, %v2636
        %v2638 = vpop.f32.mrb[0].mxu0
        %v2639 = vadd.f32 0.0, %v2638
        %v2640 = vpop.f32.mrb[0].mxu0
        %v2641 = vadd.f32 0.0, %v2640
        %v2642 = vpop.f32.mrb[0].mxu0
        %v2643 = vadd.f32 0.0, %v2642
        %2644 = vmatprep.mubr.bf16.mxu0 %v1013
        %2645 = vmatmul.mubr.bf16.gmra.mrb[0].mxu0 %v1012
        %v2646 = vpop.f32.mrb[0].mxu0
        %v2647 = vadd.f32 0.0, %v2646
        %v2648 = vpop.f32.mrb[0].mxu0
        %v2649 = vadd.f32 0.0, %v2648
        %v2650 = vpop.f32.mrb[0].mxu0
        %v2651 = vadd.f32 0.0, %v2650
        %v2652 = vpop.f32.mrb[0].mxu0
        %v2653 = vadd.f32 0.0, %v2652
        %2654 = vmatprep.mubr.bf16.mxu0 %v1017
        %2655 = vmatmul.mubr.bf16.gmra.mrb[0].mxu0 %v1016
        %v2656 = vpop.f32.mrb[0].mxu0
        %v2657 = vadd.f32 0.0, %v2656
        %v2658 = vpop.f32.mrb[0].mxu0
        %v2659 = vadd.f32 0.0, %v2658
        %v2660 = vpop.f32.mrb[0].mxu0
        %v2661 = vadd.f32 0.0, %v2660
        %v2662 = vpop.f32.mrb[0].mxu0
        %v2663 = vadd.f32 0.0, %v2662
        %2664 = vmatprep.mubr.bf16.mxu0 %v1021
        %2665 = vmatmul.mubr.bf16.gmra.mrb[0].mxu0 %v1020
        %v2666 = vpop.f32.mrb[0].mxu0
        %v2667 = vadd.f32 0.0, %v2666
        %v2668 = vpop.f32.mrb[0].mxu0
        %v2669 = vadd.f32 0.0, %v2668
        %v2670 = vpop.f32.mrb[0].mxu0
        %v2671 = vadd.f32 0.0, %v2670
        %v2672 = vpop.f32.mrb[0].mxu0
        %v2673 = vadd.f32 0.0, %v2672
        %2674 = vdwg.mxu0
        %2675 = vmatprep.subr.bf16.mxu0 %v1955
        %2676 = vmatpush1.bf16.msra.mxu0 %v1954
        %2677 = vmatprep.subr.bf16.mxu0 %v1963
        %2678 = vmatpush1.bf16.msra.mxu0 %v1962
        %2679 = vmatprep.subr.bf16.mxu0 %v1971
        %2680 = vmatpush1.bf16.msra.mxu0 %v1970
        %2681 = vmatprep.subr.bf16.mxu0 %v1979
        %2682 = vmatpush1.bf16.msra.mxu0 %v1978
        %2683 = vmatprep.subr.bf16.mxu0 %v1987
        %2684 = vmatpush1.bf16.msra.mxu0 %v1986
        %2685 = vmatprep.subr.bf16.mxu0 %v1995
        %2686 = vmatpush1.bf16.msra.mxu0 %v1994
        %2687 = vmatprep.subr.bf16.mxu0 %v2003
        %2688 = vmatpush1.bf16.msra.mxu0 %v2002
        %2689 = vmatprep.subr.bf16.mxu0 %v2011
        %2690 = vmatpush1.bf16.msra.mxu0 %v2010
        %2691 = vmatprep.subr.bf16.mxu0 %v2019
        %2692 = vmatpush1.bf16.msra.mxu0 %v2018
        %2693 = vmatprep.subr.bf16.mxu0 %v2027
        %2694 = vmatpush1.bf16.msra.mxu0 %v2026
        %2695 = vmatprep.subr.bf16.mxu0 %v2035
        %2696 = vmatpush1.bf16.msra.mxu0 %v2034
        %2697 = vmatprep.subr.bf16.mxu0 %v2043
        %2698 = vmatpush1.bf16.msra.mxu0 %v2042
        %2699 = vmatprep.subr.bf16.mxu0 %v2051
        %2700 = vmatpush1.bf16.msra.mxu0 %v2050
        %2701 = vmatprep.subr.bf16.mxu0 %v2059
        %2702 = vmatpush1.bf16.msra.mxu0 %v2058
        %2703 = vmatprep.subr.bf16.mxu0 %v2067
        %2704 = vmatpush1.bf16.msra.mxu0 %v2066
        %2705 = vmatprep.subr.bf16.mxu0 %v2075
        %2706 = vmatpush1.bf16.msra.mxu0 %v2074
        %2707 = vmatprep.mubr.bf16.mxu0 %v995
        %2708 = vmatmul.mubr.bf16.gmra.mrb[0].mxu0 %v994
        %v2709 = vpop.f32.mrb[0].mxu0
        %v2710 = vadd.f32 %v2597, %v2709
        %v2711 = vpop.f32.mrb[0].mxu0
        %v2712 = vadd.f32 %v2599, %v2711
        %v2713 = vpop.f32.mrb[0].mxu0
        %v2714 = vadd.f32 %v2601, %v2713
        %v2715 = vpop.f32.mrb[0].mxu0
        %v2716 = vadd.f32 %v2603, %v2715
        %2717 = vmatprep.mubr.bf16.mxu0 %v999
        %2718 = vmatmul.mubr.bf16.gmra.mrb[0].mxu0 %v998
        %v2719 = vpop.f32.mrb[0].mxu0
        %v2720 = vadd.f32 %v2607, %v2719
        %v2721 = vpop.f32.mrb[0].mxu0
        %v2722 = vadd.f32 %v2609, %v2721
        %v2723 = vpop.f32.mrb[0].mxu0
        %v2724 = vadd.f32 %v2611, %v2723
        %v2725 = vpop.f32.mrb[0].mxu0
        %v2726 = vadd.f32 %v2613, %v2725
        %2727 = vmatprep.mubr.bf16.mxu0 %v1003
        %2728 = vmatmul.mubr.bf16.gmra.mrb[0].mxu0 %v1002
        %v2729 = vpop.f32.mrb[0].mxu0
        %v2730 = vadd.f32 %v2617, %v2729
        %v2731 = vpop.f32.mrb[0].mxu0
        %v2732 = vadd.f32 %v2619, %v2731
        %v2733 = vpop.f32.mrb[0].mxu0
        %v2734 = vadd.f32 %v2621, %v2733
        %v2735 = vpop.f32.mrb[0].mxu0
        %v2736 = vadd.f32 %v2623, %v2735
        %2737 = vmatprep.mubr.bf16.mxu0 %v1007
        %2738 = vmatmul.mubr.bf16.gmra.mrb[0].mxu0 %v1006
        %v2739 = vpop.f32.mrb[0].mxu0
        %v2740 = vadd.f32 %v2627, %v2739
        %v2741 = vpop.f32.mrb[0].mxu0
        %v2742 = vadd.f32 %v2629, %v2741
        %v2743 = vpop.f32.mrb[0].mxu0
        %v2744 = vadd.f32 %v2631, %v2743
        %v2745 = vpop.f32.mrb[0].mxu0
        %v2746 = vadd.f32 %v2633, %v2745
        %2747 = vmatprep.mubr.bf16.mxu0 %v1011
        %2748 = vmatmul.mubr.bf16.gmra.mrb[0].mxu0 %v1010
        %v2749 = vpop.f32.mrb[0].mxu0
        %v2750 = vadd.f32 %v2637, %v2749
        %v2751 = vpop.f32.mrb[0].mxu0
        %v2752 = vadd.f32 %v2639, %v2751
        %v2753 = vpop.f32.mrb[0].mxu0
        %v2754 = vadd.f32 %v2641, %v2753
        %v2755 = vpop.f32.mrb[0].mxu0
        %v2756 = vadd.f32 %v2643, %v2755
        %2757 = vmatprep.mubr.bf16.mxu0 %v1015
        %2758 = vmatmul.mubr.bf16.gmra.mrb[0].mxu0 %v1014
        %v2759 = vpop.f32.mrb[0].mxu0
        %v2760 = vadd.f32 %v2647, %v2759
        %v2761 = vpop.f32.mrb[0].mxu0
        %v2762 = vadd.f32 %v2649, %v2761
        %v2763 = vpop.f32.mrb[0].mxu0
        %v2764 = vadd.f32 %v2651, %v2763
        %v2765 = vpop.f32.mrb[0].mxu0
        %v2766 = vadd.f32 %v2653, %v2765
        %2767 = vmatprep.mubr.bf16.mxu0 %v1019
        %2768 = vmatmul.mubr.bf16.gmra.mrb[0].mxu0 %v1018
        %v2769 = vpop.f32.mrb[0].mxu0
        %v2770 = vadd.f32 %v2657, %v2769
        %v2771 = vpop.f32.mrb[0].mxu0
        %v2772 = vadd.f32 %v2659, %v2771
        %v2773 = vpop.f32.mrb[0].mxu0
        %v2774 = vadd.f32 %v2661, %v2773
        %v2775 = vpop.f32.mrb[0].mxu0
        %v2776 = vadd.f32 %v2663, %v2775
        %2777 = vmatprep.mubr.bf16.mxu0 %v1023
        %2778 = vmatmul.mubr.bf16.gmra.mrb[0].mxu0 %v1022
        %v2779 = vpop.f32.mrb[0].mxu0
        %v2780 = vadd.f32 %v2667, %v2779
        %v2781 = vpop.f32.mrb[0].mxu0
        %v2782 = vadd.f32 %v2669, %v2781
        %v2783 = vpop.f32.mrb[0].mxu0
        %v2784 = vadd.f32 %v2671, %v2783
        %v2785 = vpop.f32.mrb[0].mxu0
        %v2786 = vadd.f32 %v2673, %v2785
        %2787 = vdwg.mxu0
        %2788 = vmatprep.subr.bf16.mxu0 %v1829
        %2789 = vmatpush1.bf16.msra.mxu0 %v1828
        %2790 = vmatprep.subr.bf16.mxu0 %v1837
        %2791 = vmatpush1.bf16.msra.mxu0 %v1836
        %2792 = vmatprep.subr.bf16.mxu0 %v1845
        %2793 = vmatpush1.bf16.msra.mxu0 %v1844
        %2794 = vmatprep.subr.bf16.mxu0 %v1853
        %2795 = vmatpush1.bf16.msra.mxu0 %v1852
        %2796 = vmatprep.subr.bf16.mxu0 %v1861
        %2797 = vmatpush1.bf16.msra.mxu0 %v1860
        %2798 = vmatprep.subr.bf16.mxu0 %v1869
        %2799 = vmatpush1.bf16.msra.mxu0 %v1868
        %2800 = vmatprep.subr.bf16.mxu0 %v1877
        %2801 = vmatpush1.bf16.msra.mxu0 %v1876
        %2802 = vmatprep.subr.bf16.mxu0 %v1885
        %2803 = vmatpush1.bf16.msra.mxu0 %v1884
        %2804 = vmatprep.subr.bf16.mxu0 %v1893
        %2805 = vmatpush1.bf16.msra.mxu0 %v1892
        %2806 = vmatprep.subr.bf16.mxu0 %v1901
        %2807 = vmatpush1.bf16.msra.mxu0 %v1900
        %2808 = vmatprep.subr.bf16.mxu0 %v1909
        %2809 = vmatpush1.bf16.msra.mxu0 %v1908
        %2810 = vmatprep.subr.bf16.mxu0 %v1917
        %2811 = vmatpush1.bf16.msra.mxu0 %v1916
        %2812 = vmatprep.subr.bf16.mxu0 %v1925
        %2813 = vmatpush1.bf16.msra.mxu0 %v1924
        %2814 = vmatprep.subr.bf16.mxu0 %v1933
        %2815 = vmatpush1.bf16.msra.mxu0 %v1932
        %2816 = vmatprep.subr.bf16.mxu0 %v1941
        %2817 = vmatpush1.bf16.msra.mxu0 %v1940
        %2818 = vmatprep.subr.bf16.mxu0 %v1949
        %2819 = vmatpush1.bf16.msra.mxu0 %v1948
        %2820 = vmatprep.mubr.bf16.mxu0 %v993
        %2821 = vmatmul.mubr.bf16.gmra.mrb[0].mxu0 %v992
        %v2822 = vpop.f32.mrb[0].mxu0
        %v2823 = vadd.f32 0.0, %v2822
        %v2824 = vpop.f32.mrb[0].mxu0
        %v2825 = vadd.f32 0.0, %v2824
        %v2826 = vpop.f32.mrb[0].mxu0
        %v2827 = vadd.f32 0.0, %v2826
        %v2828 = vpop.f32.mrb[0].mxu0
        %v2829 = vadd.f32 0.0, %v2828
        %2830 = vmatprep.mubr.bf16.mxu0 %v997
        %2831 = vmatmul.mubr.bf16.gmra.mrb[0].mxu0 %v996
        %v2832 = vpop.f32.mrb[0].mxu0
        %v2833 = vadd.f32 0.0, %v2832
        %v2834 = vpop.f32.mrb[0].mxu0
        %v2835 = vadd.f32 0.0, %v2834
        %v2836 = vpop.f32.mrb[0].mxu0
        %v2837 = vadd.f32 0.0, %v2836
        %v2838 = vpop.f32.mrb[0].mxu0
        %v2839 = vadd.f32 0.0, %v2838
        %2840 = vmatprep.mubr.bf16.mxu0 %v1001
        %2841 = vmatmul.mubr.bf16.gmra.mrb[0].mxu0 %v1000
        %v2842 = vpop.f32.mrb[0].mxu0
        %v2843 = vadd.f32 0.0, %v2842
        %v2844 = vpop.f32.mrb[0].mxu0
        %v2845 = vadd.f32 0.0, %v2844
        %v2846 = vpop.f32.mrb[0].mxu0
        %v2847 = vadd.f32 0.0, %v2846
        %v2848 = vpop.f32.mrb[0].mxu0
        %v2849 = vadd.f32 0.0, %v2848
        %2850 = vmatprep.mubr.bf16.mxu0 %v1005
        %2851 = vmatmul.mubr.bf16.gmra.mrb[0].mxu0 %v1004
        %v2852 = vpop.f32.mrb[0].mxu0
        %v2853 = vadd.f32 0.0, %v2852
        %v2854 = vpop.f32.mrb[0].mxu0
        %v2855 = vadd.f32 0.0, %v2854
        %v2856 = vpop.f32.mrb[0].mxu0
        %v2857 = vadd.f32 0.0, %v2856
        %v2858 = vpop.f32.mrb[0].mxu0
        %v2859 = vadd.f32 0.0, %v2858
        %2860 = vmatprep.mubr.bf16.mxu0 %v1009
        %2861 = vmatmul.mubr.bf16.gmra.mrb[0].mxu0 %v1008
        %v2862 = vpop.f32.mrb[0].mxu0
        %v2863 = vadd.f32 0.0, %v2862
        %v2864 = vpop.f32.mrb[0].mxu0
        %v2865 = vadd.f32 0.0, %v2864
        %v2866 = vpop.f32.mrb[0].mxu0
        %v2867 = vadd.f32 0.0, %v2866
        %v2868 = vpop.f32.mrb[0].mxu0
        %v2869 = vadd.f32 0.0, %v2868
        %2870 = vmatprep.mubr.bf16.mxu0 %v1013
        %2871 = vmatmul.mubr.bf16.gmra.mrb[0].mxu0 %v1012
        %v2872 = vpop.f32.mrb[0].mxu0
        %v2873 = vadd.f32 0.0, %v2872
        %v2874 = vpop.f32.mrb[0].mxu0
        %v2875 = vadd.f32 0.0, %v2874
        %v2876 = vpop.f32.mrb[0].mxu0
        %v2877 = vadd.f32 0.0, %v2876
        %v2878 = vpop.f32.mrb[0].mxu0
        %v2879 = vadd.f32 0.0, %v2878
        %2880 = vmatprep.mubr.bf16.mxu0 %v1017
        %2881 = vmatmul.mubr.bf16.gmra.mrb[0].mxu0 %v1016
        %v2882 = vpop.f32.mrb[0].mxu0
        %v2883 = vadd.f32 0.0, %v2882
        %v2884 = vpop.f32.mrb[0].mxu0
        %v2885 = vadd.f32 0.0, %v2884
        %v2886 = vpop.f32.mrb[0].mxu0
        %v2887 = vadd.f32 0.0, %v2886
        %v2888 = vpop.f32.mrb[0].mxu0
        %v2889 = vadd.f32 0.0, %v2888
        %2890 = vmatprep.mubr.bf16.mxu0 %v1021
        %2891 = vmatmul.mubr.bf16.gmra.mrb[0].mxu0 %v1020
        %v2892 = vpop.f32.mrb[0].mxu0
        %v2893 = vadd.f32 0.0, %v2892
        %v2894 = vpop.f32.mrb[0].mxu0
        %v2895 = vadd.f32 0.0, %v2894
        %v2896 = vpop.f32.mrb[0].mxu0
        %v2897 = vadd.f32 0.0, %v2896
        %v2898 = vpop.f32.mrb[0].mxu0
        %v2899 = vadd.f32 0.0, %v2898
        %2900 = vdwg.mxu0
        %2901 = vmatprep.subr.bf16.mxu0 %v1957
        %2902 = vmatpush1.bf16.msra.mxu0 %v1956
        %2903 = vmatprep.subr.bf16.mxu0 %v1965
        %2904 = vmatpush1.bf16.msra.mxu0 %v1964
        %2905 = vmatprep.subr.bf16.mxu0 %v1973
        %2906 = vmatpush1.bf16.msra.mxu0 %v1972
        %2907 = vmatprep.subr.bf16.mxu0 %v1981
        %2908 = vmatpush1.bf16.msra.mxu0 %v1980
        %2909 = vmatprep.subr.bf16.mxu0 %v1989
        %2910 = vmatpush1.bf16.msra.mxu0 %v1988
        %2911 = vmatprep.subr.bf16.mxu0 %v1997
        %2912 = vmatpush1.bf16.msra.mxu0 %v1996
        %2913 = vmatprep.subr.bf16.mxu0 %v2005
        %2914 = vmatpush1.bf16.msra.mxu0 %v2004
        %2915 = vmatprep.subr.bf16.mxu0 %v2013
        %2916 = vmatpush1.bf16.msra.mxu0 %v2012
        %2917 = vmatprep.subr.bf16.mxu0 %v2021
        %2918 = vmatpush1.bf16.msra.mxu0 %v2020
        %2919 = vmatprep.subr.bf16.mxu0 %v2029
        %2920 = vmatpush1.bf16.msra.mxu0 %v2028
        %2921 = vmatprep.subr.bf16.mxu0 %v2037
        %2922 = vmatpush1.bf16.msra.mxu0 %v2036
        %2923 = vmatprep.subr.bf16.mxu0 %v2045
        %2924 = vmatpush1.bf16.msra.mxu0 %v2044
        %2925 = vmatprep.subr.bf16.mxu0 %v2053
        %2926 = vmatpush1.bf16.msra.mxu0 %v2052
        %2927 = vmatprep.subr.bf16.mxu0 %v2061
        %2928 = vmatpush1.bf16.msra.mxu0 %v2060
        %2929 = vmatprep.subr.bf16.mxu0 %v2069
        %2930 = vmatpush1.bf16.msra.mxu0 %v2068
        %2931 = vmatprep.subr.bf16.mxu0 %v2077
        %2932 = vmatpush1.bf16.msra.mxu0 %v2076
        %2933 = vmatprep.mubr.bf16.mxu0 %v995
        %2934 = vmatmul.mubr.bf16.gmra.mrb[0].mxu0 %v994
        %v2935 = vpop.f32.mrb[0].mxu0
        %v2936 = vadd.f32 %v2823, %v2935
        %v2937 = vpop.f32.mrb[0].mxu0
        %v2938 = vadd.f32 %v2825, %v2937
        %v2939 = vpop.f32.mrb[0].mxu0
        %v2940 = vadd.f32 %v2827, %v2939
        %v2941 = vpop.f32.mrb[0].mxu0
        %v2942 = vadd.f32 %v2829, %v2941
        %2943 = vmatprep.mubr.bf16.mxu0 %v999
        %2944 = vmatmul.mubr.bf16.gmra.mrb[0].mxu0 %v998
        %v2945 = vpop.f32.mrb[0].mxu0
        %v2946 = vadd.f32 %v2833, %v2945
        %v2947 = vpop.f32.mrb[0].mxu0
        %v2948 = vadd.f32 %v2835, %v2947
        %v2949 = vpop.f32.mrb[0].mxu0
        %v2950 = vadd.f32 %v2837, %v2949
        %v2951 = vpop.f32.mrb[0].mxu0
        %v2952 = vadd.f32 %v2839, %v2951
        %2953 = vmatprep.mubr.bf16.mxu0 %v1003
        %2954 = vmatmul.mubr.bf16.gmra.mrb[0].mxu0 %v1002
        %v2955 = vpop.f32.mrb[0].mxu0
        %v2956 = vadd.f32 %v2843, %v2955
        %v2957 = vpop.f32.mrb[0].mxu0
        %v2958 = vadd.f32 %v2845, %v2957
        %v2959 = vpop.f32.mrb[0].mxu0
        %v2960 = vadd.f32 %v2847, %v2959
        %v2961 = vpop.f32.mrb[0].mxu0
        %v2962 = vadd.f32 %v2849, %v2961
        %2963 = vmatprep.mubr.bf16.mxu0 %v1007
        %2964 = vmatmul.mubr.bf16.gmra.mrb[0].mxu0 %v1006
        %v2965 = vpop.f32.mrb[0].mxu0
        %v2966 = vadd.f32 %v2853, %v2965
        %v2967 = vpop.f32.mrb[0].mxu0
        %v2968 = vadd.f32 %v2855, %v2967
        %v2969 = vpop.f32.mrb[0].mxu0
        %v2970 = vadd.f32 %v2857, %v2969
        %v2971 = vpop.f32.mrb[0].mxu0
        %v2972 = vadd.f32 %v2859, %v2971
        %2973 = vmatprep.mubr.bf16.mxu0 %v1011
        %2974 = vmatmul.mubr.bf16.gmra.mrb[0].mxu0 %v1010
        %v2975 = vpop.f32.mrb[0].mxu0
        %v2976 = vadd.f32 %v2863, %v2975
        %v2977 = vpop.f32.mrb[0].mxu0
        %v2978 = vadd.f32 %v2865, %v2977
        %v2979 = vpop.f32.mrb[0].mxu0
        %v2980 = vadd.f32 %v2867, %v2979
        %v2981 = vpop.f32.mrb[0].mxu0
        %v2982 = vadd.f32 %v2869, %v2981
        %2983 = vmatprep.mubr.bf16.mxu0 %v1015
        %2984 = vmatmul.mubr.bf16.gmra.mrb[0].mxu0 %v1014
        %v2985 = vpop.f32.mrb[0].mxu0
        %v2986 = vadd.f32 %v2873, %v2985
        %v2987 = vpop.f32.mrb[0].mxu0
        %v2988 = vadd.f32 %v2875, %v2987
        %v2989 = vpop.f32.mrb[0].mxu0
        %v2990 = vadd.f32 %v2877, %v2989
        %v2991 = vpop.f32.mrb[0].mxu0
        %v2992 = vadd.f32 %v2879, %v2991
        %2993 = vmatprep.mubr.bf16.mxu0 %v1019
        %2994 = vmatmul.mubr.bf16.gmra.mrb[0].mxu0 %v1018
        %v2995 = vpop.f32.mrb[0].mxu0
        %v2996 = vadd.f32 %v2883, %v2995
        %v2997 = vpop.f32.mrb[0].mxu0
        %v2998 = vadd.f32 %v2885, %v2997
        %v2999 = vpop.f32.mrb[0].mxu0
        %v3000 = vadd.f32 %v2887, %v2999
        %v3001 = vpop.f32.mrb[0].mxu0
        %v3002 = vadd.f32 %v2889, %v3001
        %3003 = vmatprep.mubr.bf16.mxu0 %v1023
        %3004 = vmatmul.mubr.bf16.gmra.mrb[0].mxu0 %v1022
        %v3005 = vpop.f32.mrb[0].mxu0
        %v3006 = vadd.f32 %v2893, %v3005
        %v3007 = vpop.f32.mrb[0].mxu0
        %v3008 = vadd.f32 %v2895, %v3007
        %v3009 = vpop.f32.mrb[0].mxu0
        %v3010 = vadd.f32 %v2897, %v3009
        %v3011 = vpop.f32.mrb[0].mxu0
        %v3012 = vadd.f32 %v2899, %v3011
        %3013 = vdwg.mxu0
        %3014 = vmatprep.subr.bf16.mxu0 %v1831
        %3015 = vmatpush1.bf16.msra.mxu0 %v1830
        %3016 = vmatprep.subr.bf16.mxu0 %v1839
        %3017 = vmatpush1.bf16.msra.mxu0 %v1838
        %3018 = vmatprep.subr.bf16.mxu0 %v1847
        %3019 = vmatpush1.bf16.msra.mxu0 %v1846
        %3020 = vmatprep.subr.bf16.mxu0 %v1855
        %3021 = vmatpush1.bf16.msra.mxu0 %v1854
        %3022 = vmatprep.subr.bf16.mxu0 %v1863
        %3023 = vmatpush1.bf16.msra.mxu0 %v1862
        %3024 = vmatprep.subr.bf16.mxu0 %v1871
        %3025 = vmatpush1.bf16.msra.mxu0 %v1870
        %3026 = vmatprep.subr.bf16.mxu0 %v1879
        %3027 = vmatpush1.bf16.msra.mxu0 %v1878
        %3028 = vmatprep.subr.bf16.mxu0 %v1887
        %3029 = vmatpush1.bf16.msra.mxu0 %v1886
        %3030 = vmatprep.subr.bf16.mxu0 %v1895
        %3031 = vmatpush1.bf16.msra.mxu0 %v1894
        %3032 = vmatprep.subr.bf16.mxu0 %v1903
        %3033 = vmatpush1.bf16.msra.mxu0 %v1902
        %3034 = vmatprep.subr.bf16.mxu0 %v1911
        %3035 = vmatpush1.bf16.msra.mxu0 %v1910
        %3036 = vmatprep.subr.bf16.mxu0 %v1919
        %3037 = vmatpush1.bf16.msra.mxu0 %v1918
        %3038 = vmatprep.subr.bf16.mxu0 %v1927
        %3039 = vmatpush1.bf16.msra.mxu0 %v1926
        %3040 = vmatprep.subr.bf16.mxu0 %v1935
        %3041 = vmatpush1.bf16.msra.mxu0 %v1934
        %3042 = vmatprep.subr.bf16.mxu0 %v1943
        %3043 = vmatpush1.bf16.msra.mxu0 %v1942
        %3044 = vmatprep.subr.bf16.mxu0 %v1951
        %3045 = vmatpush1.bf16.msra.mxu0 %v1950
        %3046 = vmatprep.mubr.bf16.mxu0 %v993
        %3047 = vmatmul.mubr.bf16.gmra.mrb[0].mxu0 %v992
        %v3048 = vpop.f32.mrb[0].mxu0
        %v3049 = vadd.f32 0.0, %v3048
        %v3050 = vpop.f32.mrb[0].mxu0
        %v3051 = vadd.f32 0.0, %v3050
        %v3052 = vpop.f32.mrb[0].mxu0
        %v3053 = vadd.f32 0.0, %v3052
        %v3054 = vpop.f32.mrb[0].mxu0
        %v3055 = vadd.f32 0.0, %v3054
        %3056 = vmatprep.mubr.bf16.mxu0 %v997
        %3057 = vmatmul.mubr.bf16.gmra.mrb[0].mxu0 %v996
        %v3058 = vpop.f32.mrb[0].mxu0
        %v3059 = vadd.f32 0.0, %v3058
        %v3060 = vpop.f32.mrb[0].mxu0
        %v3061 = vadd.f32 0.0, %v3060
        %v3062 = vpop.f32.mrb[0].mxu0
        %v3063 = vadd.f32 0.0, %v3062
        %v3064 = vpop.f32.mrb[0].mxu0
        %v3065 = vadd.f32 0.0, %v3064
        %3066 = vmatprep.mubr.bf16.mxu0 %v1001
        %3067 = vmatmul.mubr.bf16.gmra.mrb[0].mxu0 %v1000
        %v3068 = vpop.f32.mrb[0].mxu0
        %v3069 = vadd.f32 0.0, %v3068
        %v3070 = vpop.f32.mrb[0].mxu0
        %v3071 = vadd.f32 0.0, %v3070
        %v3072 = vpop.f32.mrb[0].mxu0
        %v3073 = vadd.f32 0.0, %v3072
        %v3074 = vpop.f32.mrb[0].mxu0
        %v3075 = vadd.f32 0.0, %v3074
        %3076 = vmatprep.mubr.bf16.mxu0 %v1005
        %3077 = vmatmul.mubr.bf16.gmra.mrb[0].mxu0 %v1004
        %v3078 = vpop.f32.mrb[0].mxu0
        %v3079 = vadd.f32 0.0, %v3078
        %v3080 = vpop.f32.mrb[0].mxu0
        %v3081 = vadd.f32 0.0, %v3080
        %v3082 = vpop.f32.mrb[0].mxu0
        %v3083 = vadd.f32 0.0, %v3082
        %v3084 = vpop.f32.mrb[0].mxu0
        %v3085 = vadd.f32 0.0, %v3084
        %3086 = vmatprep.mubr.bf16.mxu0 %v1009
        %3087 = vmatmul.mubr.bf16.gmra.mrb[0].mxu0 %v1008
        %v3088 = vpop.f32.mrb[0].mxu0
        %v3089 = vadd.f32 0.0, %v3088
        %v3090 = vpop.f32.mrb[0].mxu0
        %v3091 = vadd.f32 0.0, %v3090
        %v3092 = vpop.f32.mrb[0].mxu0
        %v3093 = vadd.f32 0.0, %v3092
        %v3094 = vpop.f32.mrb[0].mxu0
        %v3095 = vadd.f32 0.0, %v3094
        %3096 = vmatprep.mubr.bf16.mxu0 %v1013
        %3097 = vmatmul.mubr.bf16.gmra.mrb[0].mxu0 %v1012
        %v3098 = vpop.f32.mrb[0].mxu0
        %v3099 = vadd.f32 0.0, %v3098
        %v3100 = vpop.f32.mrb[0].mxu0
        %v3101 = vadd.f32 0.0, %v3100
        %v3102 = vpop.f32.mrb[0].mxu0
        %v3103 = vadd.f32 0.0, %v3102
        %v3104 = vpop.f32.mrb[0].mxu0
        %v3105 = vadd.f32 0.0, %v3104
        %3106 = vmatprep.mubr.bf16.mxu0 %v1017
        %3107 = vmatmul.mubr.bf16.gmra.mrb[0].mxu0 %v1016
        %v3108 = vpop.f32.mrb[0].mxu0
        %v3109 = vadd.f32 0.0, %v3108
        %v3110 = vpop.f32.mrb[0].mxu0
        %v3111 = vadd.f32 0.0, %v3110
        %v3112 = vpop.f32.mrb[0].mxu0
        %v3113 = vadd.f32 0.0, %v3112
        %v3114 = vpop.f32.mrb[0].mxu0
        %v3115 = vadd.f32 0.0, %v3114
        %3116 = vmatprep.mubr.bf16.mxu0 %v1021
        %3117 = vmatmul.mubr.bf16.gmra.mrb[0].mxu0 %v1020
        %v3118 = vpop.f32.mrb[0].mxu0
        %v3119 = vadd.f32 0.0, %v3118
        %v3120 = vpop.f32.mrb[0].mxu0
        %v3121 = vadd.f32 0.0, %v3120
        %v3122 = vpop.f32.mrb[0].mxu0
        %v3123 = vadd.f32 0.0, %v3122
        %v3124 = vpop.f32.mrb[0].mxu0
        %v3125 = vadd.f32 0.0, %v3124
        %3126 = vdwg.mxu0
        %3127 = vmatprep.subr.bf16.mxu0 %v1959
        %3128 = vmatpush1.bf16.msra.mxu0 %v1958
        %3129 = vmatprep.subr.bf16.mxu0 %v1967
        %3130 = vmatpush1.bf16.msra.mxu0 %v1966
        %3131 = vmatprep.subr.bf16.mxu0 %v1975
        %3132 = vmatpush1.bf16.msra.mxu0 %v1974
        %3133 = vmatprep.subr.bf16.mxu0 %v1983
        %3134 = vmatpush1.bf16.msra.mxu0 %v1982
        %3135 = vmatprep.subr.bf16.mxu0 %v1991
        %3136 = vmatpush1.bf16.msra.mxu0 %v1990
        %3137 = vmatprep.subr.bf16.mxu0 %v1999
        %3138 = vmatpush1.bf16.msra.mxu0 %v1998
        %3139 = vmatprep.subr.bf16.mxu0 %v2007
        %3140 = vmatpush1.bf16.msra.mxu0 %v2006
        %3141 = vmatprep.subr.bf16.mxu0 %v2015
        %3142 = vmatpush1.bf16.msra.mxu0 %v2014
        %3143 = vmatprep.subr.bf16.mxu0 %v2023
        %3144 = vmatpush1.bf16.msra.mxu0 %v2022
        %3145 = vmatprep.subr.bf16.mxu0 %v2031
        %3146 = vmatpush1.bf16.msra.mxu0 %v2030
        %3147 = vmatprep.subr.bf16.mxu0 %v2039
        %3148 = vmatpush1.bf16.msra.mxu0 %v2038
        %3149 = vmatprep.subr.bf16.mxu0 %v2047
        %3150 = vmatpush1.bf16.msra.mxu0 %v2046
        %3151 = vmatprep.subr.bf16.mxu0 %v2055
        %3152 = vmatpush1.bf16.msra.mxu0 %v2054
        %3153 = vmatprep.subr.bf16.mxu0 %v2063
        %3154 = vmatpush1.bf16.msra.mxu0 %v2062
        %3155 = vmatprep.subr.bf16.mxu0 %v2071
        %3156 = vmatpush1.bf16.msra.mxu0 %v2070
        %3157 = vmatprep.subr.bf16.mxu0 %v2079
        %3158 = vmatpush1.bf16.msra.mxu0 %v2078
        %3159 = vmatprep.mubr.bf16.mxu0 %v995
        %3160 = vmatmul.mubr.bf16.gmra.mrb[0].mxu0 %v994
        %v3161 = vpop.f32.mrb[0].mxu0
        %v3162 = vadd.f32 %v3049, %v3161
        %v3163 = vpop.f32.mrb[0].mxu0
        %v3164 = vadd.f32 %v3051, %v3163
        %v3165 = vpop.f32.mrb[0].mxu0
        %v3166 = vadd.f32 %v3053, %v3165
        %v3167 = vpop.f32.mrb[0].mxu0
        %v3168 = vadd.f32 %v3055, %v3167
        %3169 = vmatprep.mubr.bf16.mxu0 %v999
        %3170 = vmatmul.mubr.bf16.gmra.mrb[0].mxu0 %v998
        %v3171 = vpop.f32.mrb[0].mxu0
        %v3172 = vadd.f32 %v3059, %v3171
        %v3173 = vpop.f32.mrb[0].mxu0
        %v3174 = vadd.f32 %v3061, %v3173
        %v3175 = vpop.f32.mrb[0].mxu0
        %v3176 = vadd.f32 %v3063, %v3175
        %v3177 = vpop.f32.mrb[0].mxu0
        %v3178 = vadd.f32 %v3065, %v3177
        %3179 = vmatprep.mubr.bf16.mxu0 %v1003
        %3180 = vmatmul.mubr.bf16.gmra.mrb[0].mxu0 %v1002
        %v3181 = vpop.f32.mrb[0].mxu0
        %v3182 = vadd.f32 %v3069, %v3181
        %v3183 = vpop.f32.mrb[0].mxu0
        %v3184 = vadd.f32 %v3071, %v3183
        %v3185 = vpop.f32.mrb[0].mxu0
        %v3186 = vadd.f32 %v3073, %v3185
        %v3187 = vpop.f32.mrb[0].mxu0
        %v3188 = vadd.f32 %v3075, %v3187
        %3189 = vmatprep.mubr.bf16.mxu0 %v1007
        %3190 = vmatmul.mubr.bf16.gmra.mrb[0].mxu0 %v1006
        %v3191 = vpop.f32.mrb[0].mxu0
        %v3192 = vadd.f32 %v3079, %v3191
        %v3193 = vpop.f32.mrb[0].mxu0
        %v3194 = vadd.f32 %v3081, %v3193
        %v3195 = vpop.f32.mrb[0].mxu0
        %v3196 = vadd.f32 %v3083, %v3195
        %v3197 = vpop.f32.mrb[0].mxu0
        %v3198 = vadd.f32 %v3085, %v3197
        %3199 = vmatprep.mubr.bf16.mxu0 %v1011
        %3200 = vmatmul.mubr.bf16.gmra.mrb[0].mxu0 %v1010
        %v3201 = vpop.f32.mrb[0].mxu0
        %v3202 = vadd.f32 %v3089, %v3201
        %v3203 = vpop.f32.mrb[0].mxu0
        %v3204 = vadd.f32 %v3091, %v3203
        %v3205 = vpop.f32.mrb[0].mxu0
        %v3206 = vadd.f32 %v3093, %v3205
        %v3207 = vpop.f32.mrb[0].mxu0
        %v3208 = vadd.f32 %v3095, %v3207
        %3209 = vmatprep.mubr.bf16.mxu0 %v1015
        %3210 = vmatmul.mubr.bf16.gmra.mrb[0].mxu0 %v1014
        %v3211 = vpop.f32.mrb[0].mxu0
        %v3212 = vadd.f32 %v3099, %v3211
        %v3213 = vpop.f32.mrb[0].mxu0
        %v3214 = vadd.f32 %v3101, %v3213
        %v3215 = vpop.f32.mrb[0].mxu0
        %v3216 = vadd.f32 %v3103, %v3215
        %v3217 = vpop.f32.mrb[0].mxu0
        %v3218 = vadd.f32 %v3105, %v3217
        %3219 = vmatprep.mubr.bf16.mxu0 %v1019
        %3220 = vmatmul.mubr.bf16.gmra.mrb[0].mxu0 %v1018
        %v3221 = vpop.f32.mrb[0].mxu0
        %v3222 = vadd.f32 %v3109, %v3221
        %v3223 = vpop.f32.mrb[0].mxu0
        %v3224 = vadd.f32 %v3111, %v3223
        %v3225 = vpop.f32.mrb[0].mxu0
        %v3226 = vadd.f32 %v3113, %v3225
        %v3227 = vpop.f32.mrb[0].mxu0
        %v3228 = vadd.f32 %v3115, %v3227
        %3229 = vmatprep.mubr.bf16.mxu0 %v1023
        %3230 = vmatmul.mubr.bf16.gmra.mrb[0].mxu0 %v1022
        %v3231 = vpop.f32.mrb[0].mxu0
        %v3232 = vadd.f32 %v3119, %v3231
        %v3233 = vpop.f32.mrb[0].mxu0
        %v3234 = vadd.f32 %v3121, %v3233
        %v3235 = vpop.f32.mrb[0].mxu0
        %v3236 = vadd.f32 %v3123, %v3235
        %v3237 = vpop.f32.mrb[0].mxu0
        %v3238 = vadd.f32 %v3125, %v3237
        %3239 = vdwg.mxu0
        %v3240 = vadd.f32 %v512, %v2484
        %v3241 = vadd.f32 %v513, %v2486
        %v3242 = vadd.f32 %v514, %v2710
        %v3243 = vadd.f32 %v515, %v2712
        %v3244 = vadd.f32 %v516, %v2936
        %v3245 = vadd.f32 %v517, %v2938
        %v3246 = vadd.f32 %v518, %v3162
        %v3247 = vadd.f32 %v519, %v3164
        %v3248 = vadd.f32 %v520, %v2488
        %v3249 = vadd.f32 %v521, %v2490
        %v3250 = vadd.f32 %v522, %v2714
        %v3251 = vadd.f32 %v523, %v2716
        %v3252 = vadd.f32 %v524, %v2940
        %v3253 = vadd.f32 %v525, %v2942
        %v3254 = vadd.f32 %v526, %v3166
        %v3255 = vadd.f32 %v527, %v3168
        %v3256 = vadd.f32 %v528, %v2494
        %v3257 = vadd.f32 %v529, %v2496
        %v3258 = vadd.f32 %v530, %v2720
        %v3259 = vadd.f32 %v531, %v2722
        %v3260 = vadd.f32 %v532, %v2946
        %v3261 = vadd.f32 %v533, %v2948
        %v3262 = vadd.f32 %v534, %v3172
        %v3263 = vadd.f32 %v535, %v3174
        %v3264 = vadd.f32 %v536, %v2498
        %v3265 = vadd.f32 %v537, %v2500
        %v3266 = vadd.f32 %v538, %v2724
        %v3267 = vadd.f32 %v539, %v2726
        %v3268 = vadd.f32 %v540, %v2950
        %v3269 = vadd.f32 %v541, %v2952
        %v3270 = vadd.f32 %v542, %v3176
        %v3271 = vadd.f32 %v543, %v3178
        %v3272 = vadd.f32 %v544, %v2504
        %v3273 = vadd.f32 %v545, %v2506
        %v3274 = vadd.f32 %v546, %v2730
        %v3275 = vadd.f32 %v547, %v2732
        %v3276 = vadd.f32 %v548, %v2956
        %v3277 = vadd.f32 %v549, %v2958
        %v3278 = vadd.f32 %v550, %v3182
        %v3279 = vadd.f32 %v551, %v3184
        %v3280 = vadd.f32 %v552, %v2508
        %v3281 = vadd.f32 %v553, %v2510
        %v3282 = vadd.f32 %v554, %v2734
        %v3283 = vadd.f32 %v555, %v2736
        %v3284 = vadd.f32 %v556, %v2960
        %v3285 = vadd.f32 %v557, %v2962
        %v3286 = vadd.f32 %v558, %v3186
        %v3287 = vadd.f32 %v559, %v3188
        %v3288 = vadd.f32 %v560, %v2514
        %v3289 = vadd.f32 %v561, %v2516
        %v3290 = vadd.f32 %v562, %v2740
        %v3291 = vadd.f32 %v563, %v2742
        %v3292 = vadd.f32 %v564, %v2966
        %v3293 = vadd.f32 %v565, %v2968
        %v3294 = vadd.f32 %v566, %v3192
        %v3295 = vadd.f32 %v567, %v3194
        %v3296 = vadd.f32 %v568, %v2518
        %v3297 = vadd.f32 %v569, %v2520
        %v3298 = vadd.f32 %v570, %v2744
        %v3299 = vadd.f32 %v571, %v2746
        %v3300 = vadd.f32 %v572, %v2970
        %v3301 = vadd.f32 %v573, %v2972
        %v3302 = vadd.f32 %v574, %v3196
        %v3303 = vadd.f32 %v575, %v3198
        %v3304 = vadd.f32 %v576, %v2524
        %v3305 = vadd.f32 %v577, %v2526
        %v3306 = vadd.f32 %v578, %v2750
        %v3307 = vadd.f32 %v579, %v2752
        %v3308 = vadd.f32 %v580, %v2976
        %v3309 = vadd.f32 %v581, %v2978
        %v3310 = vadd.f32 %v582, %v3202
        %v3311 = vadd.f32 %v583, %v3204
        %v3312 = vadd.f32 %v584, %v2528
        %v3313 = vadd.f32 %v585, %v2530
        %v3314 = vadd.f32 %v586, %v2754
        %v3315 = vadd.f32 %v587, %v2756
        %v3316 = vadd.f32 %v588, %v2980
        %v3317 = vadd.f32 %v589, %v2982
        %v3318 = vadd.f32 %v590, %v3206
        %v3319 = vadd.f32 %v591, %v3208
        %v3320 = vadd.f32 %v592, %v2534
        %v3321 = vadd.f32 %v593, %v2536
        %v3322 = vadd.f32 %v594, %v2760
        %v3323 = vadd.f32 %v595, %v2762
        %v3324 = vadd.f32 %v596, %v2986
        %v3325 = vadd.f32 %v597, %v2988
        %v3326 = vadd.f32 %v598, %v3212
        %v3327 = vadd.f32 %v599, %v3214
        %v3328 = vadd.f32 %v600, %v2538
        %v3329 = vadd.f32 %v601, %v2540
        %v3330 = vadd.f32 %v602, %v2764
        %v3331 = vadd.f32 %v603, %v2766
        %v3332 = vadd.f32 %v604, %v2990
        %v3333 = vadd.f32 %v605, %v2992
        %v3334 = vadd.f32 %v606, %v3216
        %v3335 = vadd.f32 %v607, %v3218
        %v3336 = vadd.f32 %v608, %v2544
        %v3337 = vadd.f32 %v609, %v2546
        %v3338 = vadd.f32 %v610, %v2770
        %v3339 = vadd.f32 %v611, %v2772
        %v3340 = vadd.f32 %v612, %v2996
        %v3341 = vadd.f32 %v613, %v2998
        %v3342 = vadd.f32 %v614, %v3222
        %v3343 = vadd.f32 %v615, %v3224
        %v3344 = vadd.f32 %v616, %v2548
        %v3345 = vadd.f32 %v617, %v2550
        %v3346 = vadd.f32 %v618, %v2774
        %v3347 = vadd.f32 %v619, %v2776
        %v3348 = vadd.f32 %v620, %v3000
        %v3349 = vadd.f32 %v621, %v3002
        %v3350 = vadd.f32 %v622, %v3226
        %v3351 = vadd.f32 %v623, %v3228
        %v3352 = vadd.f32 %v624, %v2554
        %v3353 = vadd.f32 %v625, %v2556
        %v3354 = vadd.f32 %v626, %v2780
        %v3355 = vadd.f32 %v627, %v2782
        %v3356 = vadd.f32 %v628, %v3006
        %v3357 = vadd.f32 %v629, %v3008
        %v3358 = vadd.f32 %v630, %v3232
        %v3359 = vadd.f32 %v631, %v3234
        %v3360 = vadd.f32 %v632, %v2558
        %v3361 = vadd.f32 %v633, %v2560
        %v3362 = vadd.f32 %v634, %v2784
        %v3363 = vadd.f32 %v635, %v2786
        %v3364 = vadd.f32 %v636, %v3010
        %v3365 = vadd.f32 %v637, %v3012
        %v3366 = vadd.f32 %v638, %v3236
        %v3367 = vadd.f32 %v639, %v3238
        %3368 = vst [vmem:[#allocation2] sm:$0xff] %v3240
        %3369 = vst [vmem:[#allocation2 + $0x8] sm:$0xff] %v3241
        %3370 = vst [vmem:[#allocation2 + $0x10] sm:$0xff] %v3242
        %3371 = vst [vmem:[#allocation2 + $0x18] sm:$0xff] %v3243
        %3372 = vst [vmem:[#allocation2 + $0x20] sm:$0xff] %v3244
        %3373 = vst [vmem:[#allocation2 + $0x28] sm:$0xff] %v3245
        %3374 = vst [vmem:[#allocation2 + $0x30] sm:$0xff] %v3246
        %3375 = vst [vmem:[#allocation2 + $0x38] sm:$0xff] %v3247
        %3376 = vst [vmem:[#allocation2 + $0x40] sm:$0xff] %v3248
        %3377 = vst [vmem:[#allocation2 + $0x48] sm:$0xff] %v3249
        %3378 = vst [vmem:[#allocation2 + $0x50] sm:$0xff] %v3250
        %3379 = vst [vmem:[#allocation2 + $0x58] sm:$0xff] %v3251
        %3380 = vst [vmem:[#allocation2 + $0x60] sm:$0xff] %v3252
        %3381 = vst [vmem:[#allocation2 + $0x68] sm:$0xff] %v3253
        %3382 = vst [vmem:[#allocation2 + $0x70] sm:$0xff] %v3254
        %3383 = vst [vmem:[#allocation2 + $0x78] sm:$0xff] %v3255
        %3384 = vst [vmem:[#allocation2 + $0x80] sm:$0xff] %v3256
        %3385 = vst [vmem:[#allocation2 + $0x88] sm:$0xff] %v3257
        %3386 = vst [vmem:[#allocation2 + $0x90] sm:$0xff] %v3258
        %3387 = vst [vmem:[#allocation2 + $0x98] sm:$0xff] %v3259
        %3388 = vst [vmem:[#allocation2 + $0xa0] sm:$0xff] %v3260
        %3389 = vst [vmem:[#allocation2 + $0xa8] sm:$0xff] %v3261
        %3390 = vst [vmem:[#allocation2 + $0xb0] sm:$0xff] %v3262
        %3391 = vst [vmem:[#allocation2 + $0xb8] sm:$0xff] %v3263
        %3392 = vst [vmem:[#allocation2 + $0xc0] sm:$0xff] %v3264
        %3393 = vst [vmem:[#allocation2 + $0xc8] sm:$0xff] %v3265
        %3394 = vst [vmem:[#allocation2 + $0xd0] sm:$0xff] %v3266
        %3395 = vst [vmem:[#allocation2 + $0xd8] sm:$0xff] %v3267
        %3396 = vst [vmem:[#allocation2 + $0xe0] sm:$0xff] %v3268
        %3397 = vst [vmem:[#allocation2 + $0xe8] sm:$0xff] %v3269
        %3398 = vst [vmem:[#allocation2 + $0xf0] sm:$0xff] %v3270
        %3399 = vst [vmem:[#allocation2 + $0xf8] sm:$0xff] %v3271
        %3400 = vst [vmem:[#allocation2 + $0x100] sm:$0xff] %v3272
        %3401 = vst [vmem:[#allocation2 + $0x108] sm:$0xff] %v3273
        %3402 = vst [vmem:[#allocation2 + $0x110] sm:$0xff] %v3274
        %3403 = vst [vmem:[#allocation2 + $0x118] sm:$0xff] %v3275
        %3404 = vst [vmem:[#allocation2 + $0x120] sm:$0xff] %v3276
        %3405 = vst [vmem:[#allocation2 + $0x128] sm:$0xff] %v3277
        %3406 = vst [vmem:[#allocation2 + $0x130] sm:$0xff] %v3278
        %3407 = vst [vmem:[#allocation2 + $0x138] sm:$0xff] %v3279
        %3408 = vst [vmem:[#allocation2 + $0x140] sm:$0xff] %v3280
        %3409 = vst [vmem:[#allocation2 + $0x148] sm:$0xff] %v3281
        %3410 = vst [vmem:[#allocation2 + $0x150] sm:$0xff] %v3282
        %3411 = vst [vmem:[#allocation2 + $0x158] sm:$0xff] %v3283
        %3412 = vst [vmem:[#allocation2 + $0x160] sm:$0xff] %v3284
        %3413 = vst [vmem:[#allocation2 + $0x168] sm:$0xff] %v3285
        %3414 = vst [vmem:[#allocation2 + $0x170] sm:$0xff] %v3286
        %3415 = vst [vmem:[#allocation2 + $0x178] sm:$0xff] %v3287
        %3416 = vst [vmem:[#allocation2 + $0x180] sm:$0xff] %v3288
        %3417 = vst [vmem:[#allocation2 + $0x188] sm:$0xff] %v3289
        %3418 = vst [vmem:[#allocation2 + $0x190] sm:$0xff] %v3290
        %3419 = vst [vmem:[#allocation2 + $0x198] sm:$0xff] %v3291
        %3420 = vst [vmem:[#allocation2 + $0x1a0] sm:$0xff] %v3292
        %3421 = vst [vmem:[#allocation2 + $0x1a8] sm:$0xff] %v3293
        %3422 = vst [vmem:[#allocation2 + $0x1b0] sm:$0xff] %v3294
        %3423 = vst [vmem:[#allocation2 + $0x1b8] sm:$0xff] %v3295
        %3424 = vst [vmem:[#allocation2 + $0x1c0] sm:$0xff] %v3296
        %3425 = vst [vmem:[#allocation2 + $0x1c8] sm:$0xff] %v3297
        %3426 = vst [vmem:[#allocation2 + $0x1d0] sm:$0xff] %v3298
        %3427 = vst [vmem:[#allocation2 + $0x1d8] sm:$0xff] %v3299
        %3428 = vst [vmem:[#allocation2 + $0x1e0] sm:$0xff] %v3300
        %3429 = vst [vmem:[#allocation2 + $0x1e8] sm:$0xff] %v3301
        %3430 = vst [vmem:[#allocation2 + $0x1f0] sm:$0xff] %v3302
        %3431 = vst [vmem:[#allocation2 + $0x1f8] sm:$0xff] %v3303
        %3432 = vst [vmem:[#allocation2 + $0x200] sm:$0xff] %v3304
        %3433 = vst [vmem:[#allocation2 + $0x208] sm:$0xff] %v3305
        %3434 = vst [vmem:[#allocation2 + $0x210] sm:$0xff] %v3306
        %3435 = vst [vmem:[#allocation2 + $0x218] sm:$0xff] %v3307
        %3436 = vst [vmem:[#allocation2 + $0x220] sm:$0xff] %v3308
        %3437 = vst [vmem:[#allocation2 + $0x228] sm:$0xff] %v3309
        %3438 = vst [vmem:[#allocation2 + $0x230] sm:$0xff] %v3310
        %3439 = vst [vmem:[#allocation2 + $0x238] sm:$0xff] %v3311
        %3440 = vst [vmem:[#allocation2 + $0x240] sm:$0xff] %v3312
        %3441 = vst [vmem:[#allocation2 + $0x248] sm:$0xff] %v3313
        %3442 = vst [vmem:[#allocation2 + $0x250] sm:$0xff] %v3314
        %3443 = vst [vmem:[#allocation2 + $0x258] sm:$0xff] %v3315
        %3444 = vst [vmem:[#allocation2 + $0x260] sm:$0xff] %v3316
        %3445 = vst [vmem:[#allocation2 + $0x268] sm:$0xff] %v3317
        %3446 = vst [vmem:[#allocation2 + $0x270] sm:$0xff] %v3318
        %3447 = vst [vmem:[#allocation2 + $0x278] sm:$0xff] %v3319
        %3448 = vst [vmem:[#allocation2 + $0x280] sm:$0xff] %v3320
        %3449 = vst [vmem:[#allocation2 + $0x288] sm:$0xff] %v3321
        %3450 = vst [vmem:[#allocation2 + $0x290] sm:$0xff] %v3322
        %3451 = vst [vmem:[#allocation2 + $0x298] sm:$0xff] %v3323
        %3452 = vst [vmem:[#allocation2 + $0x2a0] sm:$0xff] %v3324
        %3453 = vst [vmem:[#allocation2 + $0x2a8] sm:$0xff] %v3325
        %3454 = vst [vmem:[#allocation2 + $0x2b0] sm:$0xff] %v3326
        %3455 = vst [vmem:[#allocation2 + $0x2b8] sm:$0xff] %v3327
        %3456 = vst [vmem:[#allocation2 + $0x2c0] sm:$0xff] %v3328
        %3457 = vst [vmem:[#allocation2 + $0x2c8] sm:$0xff] %v3329
        %3458 = vst [vmem:[#allocation2 + $0x2d0] sm:$0xff] %v3330
        %3459 = vst [vmem:[#allocation2 + $0x2d8] sm:$0xff] %v3331
        %3460 = vst [vmem:[#allocation2 + $0x2e0] sm:$0xff] %v3332
        %3461 = vst [vmem:[#allocation2 + $0x2e8] sm:$0xff] %v3333
        %3462 = vst [vmem:[#allocation2 + $0x2f0] sm:$0xff] %v3334
        %3463 = vst [vmem:[#allocation2 + $0x2f8] sm:$0xff] %v3335
        %3464 = vst [vmem:[#allocation2 + $0x300] sm:$0xff] %v3336
        %3465 = vst [vmem:[#allocation2 + $0x308] sm:$0xff] %v3337
        %3466 = vst [vmem:[#allocation2 + $0x310] sm:$0xff] %v3338
        %3467 = vst [vmem:[#allocation2 + $0x318] sm:$0xff] %v3339
        %3468 = vst [vmem:[#allocation2 + $0x320] sm:$0xff] %v3340
        %3469 = vst [vmem:[#allocation2 + $0x328] sm:$0xff] %v3341
        %3470 = vst [vmem:[#allocation2 + $0x330] sm:$0xff] %v3342
        %3471 = vst [vmem:[#allocation2 + $0x338] sm:$0xff] %v3343
        %3472 = vst [vmem:[#allocation2 + $0x340] sm:$0xff] %v3344
        %3473 = vst [vmem:[#allocation2 + $0x348] sm:$0xff] %v3345
        %3474 = vst [vmem:[#allocation2 + $0x350] sm:$0xff] %v3346
        %3475 = vst [vmem:[#allocation2 + $0x358] sm:$0xff] %v3347
        %3476 = vst [vmem:[#allocation2 + $0x360] sm:$0xff] %v3348
        %3477 = vst [vmem:[#allocation2 + $0x368] sm:$0xff] %v3349
        %3478 = vst [vmem:[#allocation2 + $0x370] sm:$0xff] %v3350
        %3479 = vst [vmem:[#allocation2 + $0x378] sm:$0xff] %v3351
        %3480 = vst [vmem:[#allocation2 + $0x380] sm:$0xff] %v3352
        %3481 = vst [vmem:[#allocation2 + $0x388] sm:$0xff] %v3353
        %3482 = vst [vmem:[#allocation2 + $0x390] sm:$0xff] %v3354
        %3483 = vst [vmem:[#allocation2 + $0x398] sm:$0xff] %v3355
        %3484 = vst [vmem:[#allocation2 + $0x3a0] sm:$0xff] %v3356
        %3485 = vst [vmem:[#allocation2 + $0x3a8] sm:$0xff] %v3357
        %3486 = vst [vmem:[#allocation2 + $0x3b0] sm:$0xff] %v3358
        %3487 = vst [vmem:[#allocation2 + $0x3b8] sm:$0xff] %v3359
        %3488 = vst [vmem:[#allocation2 + $0x3c0] sm:$0xff] %v3360
        %3489 = vst [vmem:[#allocation2 + $0x3c8] sm:$0xff] %v3361
        %3490 = vst [vmem:[#allocation2 + $0x3d0] sm:$0xff] %v3362
        %3491 = vst [vmem:[#allocation2 + $0x3d8] sm:$0xff] %v3363
        %3492 = vst [vmem:[#allocation2 + $0x3e0] sm:$0xff] %v3364
        %3493 = vst [vmem:[#allocation2 + $0x3e8] sm:$0xff] %v3365
        %3494 = vst [vmem:[#allocation2 + $0x3f0] sm:$0xff] %v3366
        %3495 = vst [vmem:[#allocation2 + $0x3f8] sm:$0xff] %v3367
        // Predicated region
        $region49: #{tpu_custom_call.1} parent=31 // pred_check
          %p3496 = pneg %p348
        $region50: #{tpu_custom_call.1} parent=31 // pred_check_branch
          %3498 = sbr.rel (%p3496) target = $region52
        $region51: #{tpu_custom_call.1} parent=31 // pred_region
          %v3499 = vld [vmem:[#allocation2] sm:$0xff]
          %v3500 = vld [vmem:[#allocation2 + $0x8] sm:$0xff]
          %v3501 = vld [vmem:[#allocation2 + $0x10] sm:$0xff]
          %v3502 = vld [vmem:[#allocation2 + $0x18] sm:$0xff]
          %v3503 = vld [vmem:[#allocation2 + $0x20] sm:$0xff]
          %v3504 = vld [vmem:[#allocation2 + $0x28] sm:$0xff]
          %v3505 = vld [vmem:[#allocation2 + $0x30] sm:$0xff]
          %v3506 = vld [vmem:[#allocation2 + $0x38] sm:$0xff]
          %v3507 = vld [vmem:[#allocation2 + $0x40] sm:$0xff]
          %v3508 = vld [vmem:[#allocation2 + $0x48] sm:$0xff]
          %v3509 = vld [vmem:[#allocation2 + $0x50] sm:$0xff]
          %v3510 = vld [vmem:[#allocation2 + $0x58] sm:$0xff]
          %v3511 = vld [vmem:[#allocation2 + $0x60] sm:$0xff]
          %v3512 = vld [vmem:[#allocation2 + $0x68] sm:$0xff]
          %v3513 = vld [vmem:[#allocation2 + $0x70] sm:$0xff]
          %v3514 = vld [vmem:[#allocation2 + $0x78] sm:$0xff]
          %v3515 = vld [vmem:[#allocation2 + $0x80] sm:$0xff]
          %v3516 = vld [vmem:[#allocation2 + $0x88] sm:$0xff]
          %v3517 = vld [vmem:[#allocation2 + $0x90] sm:$0xff]
          %v3518 = vld [vmem:[#allocation2 + $0x98] sm:$0xff]
          %v3519 = vld [vmem:[#allocation2 + $0xa0] sm:$0xff]
          %v3520 = vld [vmem:[#allocation2 + $0xa8] sm:$0xff]
          %v3521 = vld [vmem:[#allocation2 + $0xb0] sm:$0xff]
          %v3522 = vld [vmem:[#allocation2 + $0xb8] sm:$0xff]
          %v3523 = vld [vmem:[#allocation2 + $0xc0] sm:$0xff]
          %v3524 = vld [vmem:[#allocation2 + $0xc8] sm:$0xff]
          %v3525 = vld [vmem:[#allocation2 + $0xd0] sm:$0xff]
          %v3526 = vld [vmem:[#allocation2 + $0xd8] sm:$0xff]
          %v3527 = vld [vmem:[#allocation2 + $0xe0] sm:$0xff]
          %v3528 = vld [vmem:[#allocation2 + $0xe8] sm:$0xff]
          %v3529 = vld [vmem:[#allocation2 + $0xf0] sm:$0xff]
          %v3530 = vld [vmem:[#allocation2 + $0xf8] sm:$0xff]
          %v3531 = vld [vmem:[#allocation2 + $0x100] sm:$0xff]
          %v3532 = vld [vmem:[#allocation2 + $0x108] sm:$0xff]
          %v3533 = vld [vmem:[#allocation2 + $0x110] sm:$0xff]
          %v3534 = vld [vmem:[#allocation2 + $0x118] sm:$0xff]
          %v3535 = vld [vmem:[#allocation2 + $0x120] sm:$0xff]
          %v3536 = vld [vmem:[#allocation2 + $0x128] sm:$0xff]
          %v3537 = vld [vmem:[#allocation2 + $0x130] sm:$0xff]
          %v3538 = vld [vmem:[#allocation2 + $0x138] sm:$0xff]
          %v3539 = vld [vmem:[#allocation2 + $0x140] sm:$0xff]
          %v3540 = vld [vmem:[#allocation2 + $0x148] sm:$0xff]
          %v3541 = vld [vmem:[#allocation2 + $0x150] sm:$0xff]
          %v3542 = vld [vmem:[#allocation2 + $0x158] sm:$0xff]
          %v3543 = vld [vmem:[#allocation2 + $0x160] sm:$0xff]
          %v3544 = vld [vmem:[#allocation2 + $0x168] sm:$0xff]
          %v3545 = vld [vmem:[#allocation2 + $0x170] sm:$0xff]
          %v3546 = vld [vmem:[#allocation2 + $0x178] sm:$0xff]
          %v3547 = vld [vmem:[#allocation2 + $0x180] sm:$0xff]
          %v3548 = vld [vmem:[#allocation2 + $0x188] sm:$0xff]
          %v3549 = vld [vmem:[#allocation2 + $0x190] sm:$0xff]
          %v3550 = vld [vmem:[#allocation2 + $0x198] sm:$0xff]
          %v3551 = vld [vmem:[#allocation2 + $0x1a0] sm:$0xff]
          %v3552 = vld [vmem:[#allocation2 + $0x1a8] sm:$0xff]
          %v3553 = vld [vmem:[#allocation2 + $0x1b0] sm:$0xff]
          %v3554 = vld [vmem:[#allocation2 + $0x1b8] sm:$0xff]
          %v3555 = vld [vmem:[#allocation2 + $0x1c0] sm:$0xff]
          %v3556 = vld [vmem:[#allocation2 + $0x1c8] sm:$0xff]
          %v3557 = vld [vmem:[#allocation2 + $0x1d0] sm:$0xff]
          %v3558 = vld [vmem:[#allocation2 + $0x1d8] sm:$0xff]
          %v3559 = vld [vmem:[#allocation2 + $0x1e0] sm:$0xff]
          %v3560 = vld [vmem:[#allocation2 + $0x1e8] sm:$0xff]
          %v3561 = vld [vmem:[#allocation2 + $0x1f0] sm:$0xff]
          %v3562 = vld [vmem:[#allocation2 + $0x1f8] sm:$0xff]
          %v3563 = vld [vmem:[#allocation2 + $0x200] sm:$0xff]
          %v3564 = vld [vmem:[#allocation2 + $0x208] sm:$0xff]
          %v3565 = vld [vmem:[#allocation2 + $0x210] sm:$0xff]
          %v3566 = vld [vmem:[#allocation2 + $0x218] sm:$0xff]
          %v3567 = vld [vmem:[#allocation2 + $0x220] sm:$0xff]
          %v3568 = vld [vmem:[#allocation2 + $0x228] sm:$0xff]
          %v3569 = vld [vmem:[#allocation2 + $0x230] sm:$0xff]
          %v3570 = vld [vmem:[#allocation2 + $0x238] sm:$0xff]
          %v3571 = vld [vmem:[#allocation2 + $0x240] sm:$0xff]
          %v3572 = vld [vmem:[#allocation2 + $0x248] sm:$0xff]
          %v3573 = vld [vmem:[#allocation2 + $0x250] sm:$0xff]
          %v3574 = vld [vmem:[#allocation2 + $0x258] sm:$0xff]
          %v3575 = vld [vmem:[#allocation2 + $0x260] sm:$0xff]
          %v3576 = vld [vmem:[#allocation2 + $0x268] sm:$0xff]
          %v3577 = vld [vmem:[#allocation2 + $0x270] sm:$0xff]
          %v3578 = vld [vmem:[#allocation2 + $0x278] sm:$0xff]
          %v3579 = vld [vmem:[#allocation2 + $0x280] sm:$0xff]
          %v3580 = vld [vmem:[#allocation2 + $0x288] sm:$0xff]
          %v3581 = vld [vmem:[#allocation2 + $0x290] sm:$0xff]
          %v3582 = vld [vmem:[#allocation2 + $0x298] sm:$0xff]
          %v3583 = vld [vmem:[#allocation2 + $0x2a0] sm:$0xff]
          %v3584 = vld [vmem:[#allocation2 + $0x2a8] sm:$0xff]
          %v3585 = vld [vmem:[#allocation2 + $0x2b0] sm:$0xff]
          %v3586 = vld [vmem:[#allocation2 + $0x2b8] sm:$0xff]
          %v3587 = vld [vmem:[#allocation2 + $0x2c0] sm:$0xff]
          %v3588 = vld [vmem:[#allocation2 + $0x2c8] sm:$0xff]
          %v3589 = vld [vmem:[#allocation2 + $0x2d0] sm:$0xff]
          %v3590 = vld [vmem:[#allocation2 + $0x2d8] sm:$0xff]
          %v3591 = vld [vmem:[#allocation2 + $0x2e0] sm:$0xff]
          %v3592 = vld [vmem:[#allocation2 + $0x2e8] sm:$0xff]
          %v3593 = vld [vmem:[#allocation2 + $0x2f0] sm:$0xff]
          %v3594 = vld [vmem:[#allocation2 + $0x2f8] sm:$0xff]
          %v3595 = vld [vmem:[#allocation2 + $0x300] sm:$0xff]
          %v3596 = vld [vmem:[#allocation2 + $0x308] sm:$0xff]
          %v3597 = vld [vmem:[#allocation2 + $0x310] sm:$0xff]
          %v3598 = vld [vmem:[#allocation2 + $0x318] sm:$0xff]
          %v3599 = vld [vmem:[#allocation2 + $0x320] sm:$0xff]
          %v3600 = vld [vmem:[#allocation2 + $0x328] sm:$0xff]
          %v3601 = vld [vmem:[#allocation2 + $0x330] sm:$0xff]
          %v3602 = vld [vmem:[#allocation2 + $0x338] sm:$0xff]
          %v3603 = vld [vmem:[#allocation2 + $0x340] sm:$0xff]
          %v3604 = vld [vmem:[#allocation2 + $0x348] sm:$0xff]
          %v3605 = vld [vmem:[#allocation2 + $0x350] sm:$0xff]
          %v3606 = vld [vmem:[#allocation2 + $0x358] sm:$0xff]
          %v3607 = vld [vmem:[#allocation2 + $0x360] sm:$0xff]
          %v3608 = vld [vmem:[#allocation2 + $0x368] sm:$0xff]
          %v3609 = vld [vmem:[#allocation2 + $0x370] sm:$0xff]
          %v3610 = vld [vmem:[#allocation2 + $0x378] sm:$0xff]
          %v3611 = vld [vmem:[#allocation2 + $0x380] sm:$0xff]
          %v3612 = vld [vmem:[#allocation2 + $0x388] sm:$0xff]
          %v3613 = vld [vmem:[#allocation2 + $0x390] sm:$0xff]
          %v3614 = vld [vmem:[#allocation2 + $0x398] sm:$0xff]
          %v3615 = vld [vmem:[#allocation2 + $0x3a0] sm:$0xff]
          %v3616 = vld [vmem:[#allocation2 + $0x3a8] sm:$0xff]
          %v3617 = vld [vmem:[#allocation2 + $0x3b0] sm:$0xff]
          %v3618 = vld [vmem:[#allocation2 + $0x3b8] sm:$0xff]
          %v3619 = vld [vmem:[#allocation2 + $0x3c0] sm:$0xff]
          %v3620 = vld [vmem:[#allocation2 + $0x3c8] sm:$0xff]
          %v3621 = vld [vmem:[#allocation2 + $0x3d0] sm:$0xff]
          %v3622 = vld [vmem:[#allocation2 + $0x3d8] sm:$0xff]
          %v3623 = vld [vmem:[#allocation2 + $0x3e0] sm:$0xff]
          %v3624 = vld [vmem:[#allocation2 + $0x3e8] sm:$0xff]
          %v3625 = vld [vmem:[#allocation2 + $0x3f0] sm:$0xff]
          %v3626 = vld [vmem:[#allocation2 + $0x3f8] sm:$0xff]
          %v3627 = vld [vmem:[#allocation8] sm:$0xff]
          %v3629 = vlaneseq
          %v3630 = vshrl.u32 %v3629, 7
          %v3631 = vsub.s32 0, %v3630
          %v3632 = vrot.slane %v3627, %v3631
          %v3633 = vlaneseq
          %v3634 = vshrl.u32 %v3633, 7
          %v3635 = vsub.s32 1, %v3634
          %v3636 = vrot.slane %v3627, %v3635
          %v3637 = vlaneseq
          %v3638 = vshrl.u32 %v3637, 7
          %v3639 = vsub.s32 2, %v3638
          %v3640 = vrot.slane %v3627, %v3639
          %v3641 = vlaneseq
          %v3642 = vshrl.u32 %v3641, 7
          %v3643 = vsub.s32 3, %v3642
          %v3644 = vrot.slane %v3627, %v3643
          %v3645 = vlaneseq
          %v3646 = vshrl.u32 %v3645, 7
          %v3647 = vsub.s32 4, %v3646
          %v3648 = vrot.slane %v3627, %v3647
          %v3649 = vlaneseq
          %v3650 = vshrl.u32 %v3649, 7
          %v3651 = vsub.s32 5, %v3650
          %v3652 = vrot.slane %v3627, %v3651
          %v3653 = vlaneseq
          %v3654 = vshrl.u32 %v3653, 7
          %v3655 = vsub.s32 6, %v3654
          %v3656 = vrot.slane %v3627, %v3655
          %v3657 = vlaneseq
          %v3658 = vshrl.u32 %v3657, 7
          %v3659 = vsub.s32 7, %v3658
          %v3660 = vrot.slane %v3627, %v3659
          %v3669 = vadd.f32 %v3499, %v3632
          %v3670 = vadd.f32 %v3500, %v3636
          %v3671 = vadd.f32 %v3501, %v3640
          %v3672 = vadd.f32 %v3502, %v3644
          %v3673 = vadd.f32 %v3503, %v3648
          %v3674 = vadd.f32 %v3504, %v3652
          %v3675 = vadd.f32 %v3505, %v3656
          %v3676 = vadd.f32 %v3506, %v3660
          %v3677 = vadd.f32 %v3507, %v3632
          %v3678 = vadd.f32 %v3508, %v3636
          %v3679 = vadd.f32 %v3509, %v3640
          %v3680 = vadd.f32 %v3510, %v3644
          %v3681 = vadd.f32 %v3511, %v3648
          %v3682 = vadd.f32 %v3512, %v3652
          %v3683 = vadd.f32 %v3513, %v3656
          %v3684 = vadd.f32 %v3514, %v3660
          %v3685 = vadd.f32 %v3515, %v3632
          %v3686 = vadd.f32 %v3516, %v3636
          %v3687 = vadd.f32 %v3517, %v3640
          %v3688 = vadd.f32 %v3518, %v3644
          %v3689 = vadd.f32 %v3519, %v3648
          %v3690 = vadd.f32 %v3520, %v3652
          %v3691 = vadd.f32 %v3521, %v3656
          %v3692 = vadd.f32 %v3522, %v3660
          %v3693 = vadd.f32 %v3523, %v3632
          %v3694 = vadd.f32 %v3524, %v3636
          %v3695 = vadd.f32 %v3525, %v3640
          %v3696 = vadd.f32 %v3526, %v3644
          %v3697 = vadd.f32 %v3527, %v3648
          %v3698 = vadd.f32 %v3528, %v3652
          %v3699 = vadd.f32 %v3529, %v3656
          %v3700 = vadd.f32 %v3530, %v3660
          %v3701 = vadd.f32 %v3531, %v3632
          %v3702 = vadd.f32 %v3532, %v3636
          %v3703 = vadd.f32 %v3533, %v3640
          %v3704 = vadd.f32 %v3534, %v3644
          %v3705 = vadd.f32 %v3535, %v3648
          %v3706 = vadd.f32 %v3536, %v3652
          %v3707 = vadd.f32 %v3537, %v3656
          %v3708 = vadd.f32 %v3538, %v3660
          %v3709 = vadd.f32 %v3539, %v3632
          %v3710 = vadd.f32 %v3540, %v3636
          %v3711 = vadd.f32 %v3541, %v3640
          %v3712 = vadd.f32 %v3542, %v3644
          %v3713 = vadd.f32 %v3543, %v3648
          %v3714 = vadd.f32 %v3544, %v3652
          %v3715 = vadd.f32 %v3545, %v3656
          %v3716 = vadd.f32 %v3546, %v3660
          %v3717 = vadd.f32 %v3547, %v3632
          %v3718 = vadd.f32 %v3548, %v3636
          %v3719 = vadd.f32 %v3549, %v3640
          %v3720 = vadd.f32 %v3550, %v3644
          %v3721 = vadd.f32 %v3551, %v3648
          %v3722 = vadd.f32 %v3552, %v3652
          %v3723 = vadd.f32 %v3553, %v3656
          %v3724 = vadd.f32 %v3554, %v3660
          %v3725 = vadd.f32 %v3555, %v3632
          %v3726 = vadd.f32 %v3556, %v3636
          %v3727 = vadd.f32 %v3557, %v3640
          %v3728 = vadd.f32 %v3558, %v3644
          %v3729 = vadd.f32 %v3559, %v3648
          %v3730 = vadd.f32 %v3560, %v3652
          %v3731 = vadd.f32 %v3561, %v3656
          %v3732 = vadd.f32 %v3562, %v3660
          %v3733 = vadd.f32 %v3563, %v3632
          %v3734 = vadd.f32 %v3564, %v3636
          %v3735 = vadd.f32 %v3565, %v3640
          %v3736 = vadd.f32 %v3566, %v3644
          %v3737 = vadd.f32 %v3567, %v3648
          %v3738 = vadd.f32 %v3568, %v3652
          %v3739 = vadd.f32 %v3569, %v3656
          %v3740 = vadd.f32 %v3570, %v3660
          %v3741 = vadd.f32 %v3571, %v3632
          %v3742 = vadd.f32 %v3572, %v3636
          %v3743 = vadd.f32 %v3573, %v3640
          %v3744 = vadd.f32 %v3574, %v3644
          %v3745 = vadd.f32 %v3575, %v3648
          %v3746 = vadd.f32 %v3576, %v3652
          %v3747 = vadd.f32 %v3577, %v3656
          %v3748 = vadd.f32 %v3578, %v3660
          %v3749 = vadd.f32 %v3579, %v3632
          %v3750 = vadd.f32 %v3580, %v3636
          %v3751 = vadd.f32 %v3581, %v3640
          %v3752 = vadd.f32 %v3582, %v3644
          %v3753 = vadd.f32 %v3583, %v3648
          %v3754 = vadd.f32 %v3584, %v3652
          %v3755 = vadd.f32 %v3585, %v3656
          %v3756 = vadd.f32 %v3586, %v3660
          %v3757 = vadd.f32 %v3587, %v3632
          %v3758 = vadd.f32 %v3588, %v3636
          %v3759 = vadd.f32 %v3589, %v3640
          %v3760 = vadd.f32 %v3590, %v3644
          %v3761 = vadd.f32 %v3591, %v3648
          %v3762 = vadd.f32 %v3592, %v3652
          %v3763 = vadd.f32 %v3593, %v3656
          %v3764 = vadd.f32 %v3594, %v3660
          %v3765 = vadd.f32 %v3595, %v3632
          %v3766 = vadd.f32 %v3596, %v3636
          %v3767 = vadd.f32 %v3597, %v3640
          %v3768 = vadd.f32 %v3598, %v3644
          %v3769 = vadd.f32 %v3599, %v3648
          %v3770 = vadd.f32 %v3600, %v3652
          %v3771 = vadd.f32 %v3601, %v3656
          %v3772 = vadd.f32 %v3602, %v3660
          %v3773 = vadd.f32 %v3603, %v3632
          %v3774 = vadd.f32 %v3604, %v3636
          %v3775 = vadd.f32 %v3605, %v3640
          %v3776 = vadd.f32 %v3606, %v3644
          %v3777 = vadd.f32 %v3607, %v3648
          %v3778 = vadd.f32 %v3608, %v3652
          %v3779 = vadd.f32 %v3609, %v3656
          %v3780 = vadd.f32 %v3610, %v3660
          %v3781 = vadd.f32 %v3611, %v3632
          %v3782 = vadd.f32 %v3612, %v3636
          %v3783 = vadd.f32 %v3613, %v3640
          %v3784 = vadd.f32 %v3614, %v3644
          %v3785 = vadd.f32 %v3615, %v3648
          %v3786 = vadd.f32 %v3616, %v3652
          %v3787 = vadd.f32 %v3617, %v3656
          %v3788 = vadd.f32 %v3618, %v3660
          %v3789 = vadd.f32 %v3619, %v3632
          %v3790 = vadd.f32 %v3620, %v3636
          %v3791 = vadd.f32 %v3621, %v3640
          %v3792 = vadd.f32 %v3622, %v3644
          %v3793 = vadd.f32 %v3623, %v3648
          %v3794 = vadd.f32 %v3624, %v3652
          %v3795 = vadd.f32 %v3625, %v3656
          %v3796 = vadd.f32 %v3626, %v3660
          %v3797 = vpack.c.bf16 %v3677, %v3669
          %v3798 = vpack.c.bf16 %v3678, %v3670
          %v3799 = vpack.c.bf16 %v3679, %v3671
          %v3800 = vpack.c.bf16 %v3680, %v3672
          %v3801 = vpack.c.bf16 %v3681, %v3673
          %v3802 = vpack.c.bf16 %v3682, %v3674
          %v3803 = vpack.c.bf16 %v3683, %v3675
          %v3804 = vpack.c.bf16 %v3684, %v3676
          %v3805 = vpack.c.bf16 %v3693, %v3685
          %v3806 = vpack.c.bf16 %v3694, %v3686
          %v3807 = vpack.c.bf16 %v3695, %v3687
          %v3808 = vpack.c.bf16 %v3696, %v3688
          %v3809 = vpack.c.bf16 %v3697, %v3689
          %v3810 = vpack.c.bf16 %v3698, %v3690
          %v3811 = vpack.c.bf16 %v3699, %v3691
          %v3812 = vpack.c.bf16 %v3700, %v3692
          %v3813 = vpack.c.bf16 %v3709, %v3701
          %v3814 = vpack.c.bf16 %v3710, %v3702
          %v3815 = vpack.c.bf16 %v3711, %v3703
          %v3816 = vpack.c.bf16 %v3712, %v3704
          %v3817 = vpack.c.bf16 %v3713, %v3705
          %v3818 = vpack.c.bf16 %v3714, %v3706
          %v3819 = vpack.c.bf16 %v3715, %v3707
          %v3820 = vpack.c.bf16 %v3716, %v3708
          %v3821 = vpack.c.bf16 %v3725, %v3717
          %v3822 = vpack.c.bf16 %v3726, %v3718
          %v3823 = vpack.c.bf16 %v3727, %v3719
          %v3824 = vpack.c.bf16 %v3728, %v3720
          %v3825 = vpack.c.bf16 %v3729, %v3721
          %v3826 = vpack.c.bf16 %v3730, %v3722
          %v3827 = vpack.c.bf16 %v3731, %v3723
          %v3828 = vpack.c.bf16 %v3732, %v3724
          %v3829 = vpack.c.bf16 %v3741, %v3733
          %v3830 = vpack.c.bf16 %v3742, %v3734
          %v3831 = vpack.c.bf16 %v3743, %v3735
          %v3832 = vpack.c.bf16 %v3744, %v3736
          %v3833 = vpack.c.bf16 %v3745, %v3737
          %v3834 = vpack.c.bf16 %v3746, %v3738
          %v3835 = vpack.c.bf16 %v3747, %v3739
          %v3836 = vpack.c.bf16 %v3748, %v3740
          %v3837 = vpack.c.bf16 %v3757, %v3749
          %v3838 = vpack.c.bf16 %v3758, %v3750
          %v3839 = vpack.c.bf16 %v3759, %v3751
          %v3840 = vpack.c.bf16 %v3760, %v3752
          %v3841 = vpack.c.bf16 %v3761, %v3753
          %v3842 = vpack.c.bf16 %v3762, %v3754
          %v3843 = vpack.c.bf16 %v3763, %v3755
          %v3844 = vpack.c.bf16 %v3764, %v3756
          %v3845 = vpack.c.bf16 %v3773, %v3765
          %v3846 = vpack.c.bf16 %v3774, %v3766
          %v3847 = vpack.c.bf16 %v3775, %v3767
          %v3848 = vpack.c.bf16 %v3776, %v3768
          %v3849 = vpack.c.bf16 %v3777, %v3769
          %v3850 = vpack.c.bf16 %v3778, %v3770
          %v3851 = vpack.c.bf16 %v3779, %v3771
          %v3852 = vpack.c.bf16 %v3780, %v3772
          %v3853 = vpack.c.bf16 %v3789, %v3781
          %v3854 = vpack.c.bf16 %v3790, %v3782
          %v3855 = vpack.c.bf16 %v3791, %v3783
          %v3856 = vpack.c.bf16 %v3792, %v3784
          %v3857 = vpack.c.bf16 %v3793, %v3785
          %v3858 = vpack.c.bf16 %v3794, %v3786
          %v3859 = vpack.c.bf16 %v3795, %v3787
          %v3860 = vpack.c.bf16 %v3796, %v3788
          %v3925 = vunpack.c.l.b16 %v3797
          %v3926 = vunpack.c.l.b16 %v3798
          %v3927 = vunpack.c.l.b16 %v3799
          %v3928 = vunpack.c.l.b16 %v3800
          %v3929 = vunpack.c.l.b16 %v3801
          %v3930 = vunpack.c.l.b16 %v3802
          %v3931 = vunpack.c.l.b16 %v3803
          %v3932 = vunpack.c.l.b16 %v3804
          %v3933 = vunpack.c.h.b16 %v3797
          %v3934 = vunpack.c.h.b16 %v3798
          %v3935 = vunpack.c.h.b16 %v3799
          %v3936 = vunpack.c.h.b16 %v3800
          %v3937 = vunpack.c.h.b16 %v3801
          %v3938 = vunpack.c.h.b16 %v3802
          %v3939 = vunpack.c.h.b16 %v3803
          %v3940 = vunpack.c.h.b16 %v3804
          %v3941 = vunpack.c.l.b16 %v3805
          %v3942 = vunpack.c.l.b16 %v3806
          %v3943 = vunpack.c.l.b16 %v3807
          %v3944 = vunpack.c.l.b16 %v3808
          %v3945 = vunpack.c.l.b16 %v3809
          %v3946 = vunpack.c.l.b16 %v3810
          %v3947 = vunpack.c.l.b16 %v3811
          %v3948 = vunpack.c.l.b16 %v3812
          %v3949 = vunpack.c.h.b16 %v3805
          %v3950 = vunpack.c.h.b16 %v3806
          %v3951 = vunpack.c.h.b16 %v3807
          %v3952 = vunpack.c.h.b16 %v3808
          %v3953 = vunpack.c.h.b16 %v3809
          %v3954 = vunpack.c.h.b16 %v3810
          %v3955 = vunpack.c.h.b16 %v3811
          %v3956 = vunpack.c.h.b16 %v3812
          %v3957 = vunpack.c.l.b16 %v3813
          %v3958 = vunpack.c.l.b16 %v3814
          %v3959 = vunpack.c.l.b16 %v3815
          %v3960 = vunpack.c.l.b16 %v3816
          %v3961 = vunpack.c.l.b16 %v3817
          %v3962 = vunpack.c.l.b16 %v3818
          %v3963 = vunpack.c.l.b16 %v3819
          %v3964 = vunpack.c.l.b16 %v3820
          %v3965 = vunpack.c.h.b16 %v3813
          %v3966 = vunpack.c.h.b16 %v3814
          %v3967 = vunpack.c.h.b16 %v3815
          %v3968 = vunpack.c.h.b16 %v3816
          %v3969 = vunpack.c.h.b16 %v3817
          %v3970 = vunpack.c.h.b16 %v3818
          %v3971 = vunpack.c.h.b16 %v3819
          %v3972 = vunpack.c.h.b16 %v3820
          %v3973 = vunpack.c.l.b16 %v3821
          %v3974 = vunpack.c.l.b16 %v3822
          %v3975 = vunpack.c.l.b16 %v3823
          %v3976 = vunpack.c.l.b16 %v3824
          %v3977 = vunpack.c.l.b16 %v3825
          %v3978 = vunpack.c.l.b16 %v3826
          %v3979 = vunpack.c.l.b16 %v3827
          %v3980 = vunpack.c.l.b16 %v3828
          %v3981 = vunpack.c.h.b16 %v3821
          %v3982 = vunpack.c.h.b16 %v3822
          %v3983 = vunpack.c.h.b16 %v3823
          %v3984 = vunpack.c.h.b16 %v3824
          %v3985 = vunpack.c.h.b16 %v3825
          %v3986 = vunpack.c.h.b16 %v3826
          %v3987 = vunpack.c.h.b16 %v3827
          %v3988 = vunpack.c.h.b16 %v3828
          %v3989 = vunpack.c.l.b16 %v3829
          %v3990 = vunpack.c.l.b16 %v3830
          %v3991 = vunpack.c.l.b16 %v3831
          %v3992 = vunpack.c.l.b16 %v3832
          %v3993 = vunpack.c.l.b16 %v3833
          %v3994 = vunpack.c.l.b16 %v3834
          %v3995 = vunpack.c.l.b16 %v3835
          %v3996 = vunpack.c.l.b16 %v3836
          %v3997 = vunpack.c.h.b16 %v3829
          %v3998 = vunpack.c.h.b16 %v3830
          %v3999 = vunpack.c.h.b16 %v3831
          %v4000 = vunpack.c.h.b16 %v3832
          %v4001 = vunpack.c.h.b16 %v3833
          %v4002 = vunpack.c.h.b16 %v3834
          %v4003 = vunpack.c.h.b16 %v3835
          %v4004 = vunpack.c.h.b16 %v3836
          %v4005 = vunpack.c.l.b16 %v3837
          %v4006 = vunpack.c.l.b16 %v3838
          %v4007 = vunpack.c.l.b16 %v3839
          %v4008 = vunpack.c.l.b16 %v3840
          %v4009 = vunpack.c.l.b16 %v3841
          %v4010 = vunpack.c.l.b16 %v3842
          %v4011 = vunpack.c.l.b16 %v3843
          %v4012 = vunpack.c.l.b16 %v3844
          %v4013 = vunpack.c.h.b16 %v3837
          %v4014 = vunpack.c.h.b16 %v3838
          %v4015 = vunpack.c.h.b16 %v3839
          %v4016 = vunpack.c.h.b16 %v3840
          %v4017 = vunpack.c.h.b16 %v3841
          %v4018 = vunpack.c.h.b16 %v3842
          %v4019 = vunpack.c.h.b16 %v3843
          %v4020 = vunpack.c.h.b16 %v3844
          %v4021 = vunpack.c.l.b16 %v3845
          %v4022 = vunpack.c.l.b16 %v3846
          %v4023 = vunpack.c.l.b16 %v3847
          %v4024 = vunpack.c.l.b16 %v3848
          %v4025 = vunpack.c.l.b16 %v3849
          %v4026 = vunpack.c.l.b16 %v3850
          %v4027 = vunpack.c.l.b16 %v3851
          %v4028 = vunpack.c.l.b16 %v3852
          %v4029 = vunpack.c.h.b16 %v3845
          %v4030 = vunpack.c.h.b16 %v3846
          %v4031 = vunpack.c.h.b16 %v3847
          %v4032 = vunpack.c.h.b16 %v3848
          %v4033 = vunpack.c.h.b16 %v3849
          %v4034 = vunpack.c.h.b16 %v3850
          %v4035 = vunpack.c.h.b16 %v3851
          %v4036 = vunpack.c.h.b16 %v3852
          %v4037 = vunpack.c.l.b16 %v3853
          %v4038 = vunpack.c.l.b16 %v3854
          %v4039 = vunpack.c.l.b16 %v3855
          %v4040 = vunpack.c.l.b16 %v3856
          %v4041 = vunpack.c.l.b16 %v3857
          %v4042 = vunpack.c.l.b16 %v3858
          %v4043 = vunpack.c.l.b16 %v3859
          %v4044 = vunpack.c.l.b16 %v3860
          %v4045 = vunpack.c.h.b16 %v3853
          %v4046 = vunpack.c.h.b16 %v3854
          %v4047 = vunpack.c.h.b16 %v3855
          %v4048 = vunpack.c.h.b16 %v3856
          %v4049 = vunpack.c.h.b16 %v3857
          %v4050 = vunpack.c.h.b16 %v3858
          %v4051 = vunpack.c.h.b16 %v3859
          %v4052 = vunpack.c.h.b16 %v3860
          %v4053 = vpack.c.b16 %v3926, %v3925
          %v4054 = vpack.c.b16 %v3928, %v3927
          %v4055 = vpack.c.b16 %v3930, %v3929
          %v4056 = vpack.c.b16 %v3932, %v3931
          %v4057 = vpack.c.b16 %v3934, %v3933
          %v4058 = vpack.c.b16 %v3936, %v3935
          %v4059 = vpack.c.b16 %v3938, %v3937
          %v4060 = vpack.c.b16 %v3940, %v3939
          %v4061 = vpack.c.b16 %v3942, %v3941
          %v4062 = vpack.c.b16 %v3944, %v3943
          %v4063 = vpack.c.b16 %v3946, %v3945
          %v4064 = vpack.c.b16 %v3948, %v3947
          %v4065 = vpack.c.b16 %v3950, %v3949
          %v4066 = vpack.c.b16 %v3952, %v3951
          %v4067 = vpack.c.b16 %v3954, %v3953
          %v4068 = vpack.c.b16 %v3956, %v3955
          %v4069 = vpack.c.b16 %v3958, %v3957
          %v4070 = vpack.c.b16 %v3960, %v3959
          %v4071 = vpack.c.b16 %v3962, %v3961
          %v4072 = vpack.c.b16 %v3964, %v3963
          %v4073 = vpack.c.b16 %v3966, %v3965
          %v4074 = vpack.c.b16 %v3968, %v3967
          %v4075 = vpack.c.b16 %v3970, %v3969
          %v4076 = vpack.c.b16 %v3972, %v3971
          %v4077 = vpack.c.b16 %v3974, %v3973
          %v4078 = vpack.c.b16 %v3976, %v3975
          %v4079 = vpack.c.b16 %v3978, %v3977
          %v4080 = vpack.c.b16 %v3980, %v3979
          %v4081 = vpack.c.b16 %v3982, %v3981
          %v4082 = vpack.c.b16 %v3984, %v3983
          %v4083 = vpack.c.b16 %v3986, %v3985
          %v4084 = vpack.c.b16 %v3988, %v3987
          %v4085 = vpack.c.b16 %v3990, %v3989
          %v4086 = vpack.c.b16 %v3992, %v3991
          %v4087 = vpack.c.b16 %v3994, %v3993
          %v4088 = vpack.c.b16 %v3996, %v3995
          %v4089 = vpack.c.b16 %v3998, %v3997
          %v4090 = vpack.c.b16 %v4000, %v3999
          %v4091 = vpack.c.b16 %v4002, %v4001
          %v4092 = vpack.c.b16 %v4004, %v4003
          %v4093 = vpack.c.b16 %v4006, %v4005
          %v4094 = vpack.c.b16 %v4008, %v4007
          %v4095 = vpack.c.b16 %v4010, %v4009
          %v4096 = vpack.c.b16 %v4012, %v4011
          %v4097 = vpack.c.b16 %v4014, %v4013
          %v4098 = vpack.c.b16 %v4016, %v4015
          %v4099 = vpack.c.b16 %v4018, %v4017
          %v4100 = vpack.c.b16 %v4020, %v4019
          %v4101 = vpack.c.b16 %v4022, %v4021
          %v4102 = vpack.c.b16 %v4024, %v4023
          %v4103 = vpack.c.b16 %v4026, %v4025
          %v4104 = vpack.c.b16 %v4028, %v4027
          %v4105 = vpack.c.b16 %v4030, %v4029
          %v4106 = vpack.c.b16 %v4032, %v4031
          %v4107 = vpack.c.b16 %v4034, %v4033
          %v4108 = vpack.c.b16 %v4036, %v4035
          %v4109 = vpack.c.b16 %v4038, %v4037
          %v4110 = vpack.c.b16 %v4040, %v4039
          %v4111 = vpack.c.b16 %v4042, %v4041
          %v4112 = vpack.c.b16 %v4044, %v4043
          %v4113 = vpack.c.b16 %v4046, %v4045
          %v4114 = vpack.c.b16 %v4048, %v4047
          %v4115 = vpack.c.b16 %v4050, %v4049
          %v4116 = vpack.c.b16 %v4052, %v4051
          %4181 = vst [vmem:[%s324] sm:$0xff] %v4053
          %4182 = vst [vmem:[%s324 + $0x8] sm:$0xff] %v4054
          %4183 = vst [vmem:[%s324 + $0x10] sm:$0xff] %v4055
          %4184 = vst [vmem:[%s324 + $0x18] sm:$0xff] %v4056
          %4185 = vst [vmem:[%s324 + $0x20] sm:$0xff] %v4057
          %4186 = vst [vmem:[%s324 + $0x28] sm:$0xff] %v4058
          %4187 = vst [vmem:[%s324 + $0x30] sm:$0xff] %v4059
          %4188 = vst [vmem:[%s324 + $0x38] sm:$0xff] %v4060
          %4189 = vst [vmem:[%s324 + $0x40] sm:$0xff] %v4061
          %4190 = vst [vmem:[%s324 + $0x48] sm:$0xff] %v4062
          %4191 = vst [vmem:[%s324 + $0x50] sm:$0xff] %v4063
          %4192 = vst [vmem:[%s324 + $0x58] sm:$0xff] %v4064
          %4193 = vst [vmem:[%s324 + $0x60] sm:$0xff] %v4065
          %4194 = vst [vmem:[%s324 + $0x68] sm:$0xff] %v4066
          %4195 = vst [vmem:[%s324 + $0x70] sm:$0xff] %v4067
          %4196 = vst [vmem:[%s324 + $0x78] sm:$0xff] %v4068
          %4197 = vst [vmem:[%s324 + $0x80] sm:$0xff] %v4069
          %4198 = vst [vmem:[%s324 + $0x88] sm:$0xff] %v4070
          %4199 = vst [vmem:[%s324 + $0x90] sm:$0xff] %v4071
          %4200 = vst [vmem:[%s324 + $0x98] sm:$0xff] %v4072
          %4201 = vst [vmem:[%s324 + $0xa0] sm:$0xff] %v4073
          %4202 = vst [vmem:[%s324 + $0xa8] sm:$0xff] %v4074
          %4203 = vst [vmem:[%s324 + $0xb0] sm:$0xff] %v4075
          %4204 = vst [vmem:[%s324 + $0xb8] sm:$0xff] %v4076
          %4205 = vst [vmem:[%s324 + $0xc0] sm:$0xff] %v4077
          %4206 = vst [vmem:[%s324 + $0xc8] sm:$0xff] %v4078
          %4207 = vst [vmem:[%s324 + $0xd0] sm:$0xff] %v4079
          %4208 = vst [vmem:[%s324 + $0xd8] sm:$0xff] %v4080
          %4209 = vst [vmem:[%s324 + $0xe0] sm:$0xff] %v4081
          %4210 = vst [vmem:[%s324 + $0xe8] sm:$0xff] %v4082
          %4211 = vst [vmem:[%s324 + $0xf0] sm:$0xff] %v4083
          %4212 = vst [vmem:[%s324 + $0xf8] sm:$0xff] %v4084
          %4213 = vst [vmem:[%s324 + $0x100] sm:$0xff] %v4085
          %4214 = vst [vmem:[%s324 + $0x108] sm:$0xff] %v4086
          %4215 = vst [vmem:[%s324 + $0x110] sm:$0xff] %v4087
          %4216 = vst [vmem:[%s324 + $0x118] sm:$0xff] %v4088
          %4217 = vst [vmem:[%s324 + $0x120] sm:$0xff] %v4089
          %4218 = vst [vmem:[%s324 + $0x128] sm:$0xff] %v4090
          %4219 = vst [vmem:[%s324 + $0x130] sm:$0xff] %v4091
          %4220 = vst [vmem:[%s324 + $0x138] sm:$0xff] %v4092
          %4221 = vst [vmem:[%s324 + $0x140] sm:$0xff] %v4093
          %4222 = vst [vmem:[%s324 + $0x148] sm:$0xff] %v4094
          %4223 = vst [vmem:[%s324 + $0x150] sm:$0xff] %v4095
          %4224 = vst [vmem:[%s324 + $0x158] sm:$0xff] %v4096
          %4225 = vst [vmem:[%s324 + $0x160] sm:$0xff] %v4097
          %4226 = vst [vmem:[%s324 + $0x168] sm:$0xff] %v4098
          %4227 = vst [vmem:[%s324 + $0x170] sm:$0xff] %v4099
          %4228 = vst [vmem:[%s324 + $0x178] sm:$0xff] %v4100
          %4229 = vst [vmem:[%s324 + $0x180] sm:$0xff] %v4101
          %4230 = vst [vmem:[%s324 + $0x188] sm:$0xff] %v4102
          %4231 = vst [vmem:[%s324 + $0x190] sm:$0xff] %v4103
          %4232 = vst [vmem:[%s324 + $0x198] sm:$0xff] %v4104
          %4233 = vst [vmem:[%s324 + $0x1a0] sm:$0xff] %v4105
          %4234 = vst [vmem:[%s324 + $0x1a8] sm:$0xff] %v4106
          %4235 = vst [vmem:[%s324 + $0x1b0] sm:$0xff] %v4107
          %4236 = vst [vmem:[%s324 + $0x1b8] sm:$0xff] %v4108
          %4237 = vst [vmem:[%s324 + $0x1c0] sm:$0xff] %v4109
          %4238 = vst [vmem:[%s324 + $0x1c8] sm:$0xff] %v4110
          %4239 = vst [vmem:[%s324 + $0x1d0] sm:$0xff] %v4111
          %4240 = vst [vmem:[%s324 + $0x1d8] sm:$0xff] %v4112
          %4241 = vst [vmem:[%s324 + $0x1e0] sm:$0xff] %v4113
          %4242 = vst [vmem:[%s324 + $0x1e8] sm:$0xff] %v4114
          %4243 = vst [vmem:[%s324 + $0x1f0] sm:$0xff] %v4115
          %4244 = vst [vmem:[%s324 + $0x1f8] sm:$0xff] %v4116
          %v4245 = vadd.f32 %v3669, %v3677
          %v4246 = vadd.f32 %v4245, %v3685
          %v4247 = vadd.f32 %v4246, %v3693
          %v4248 = vadd.f32 %v4247, %v3701
          %v4249 = vadd.f32 %v4248, %v3709
          %v4250 = vadd.f32 %v4249, %v3717
          %v4251 = vadd.f32 %v4250, %v3725
          %v4252 = vadd.f32 %v4251, %v3733
          %v4253 = vadd.f32 %v4252, %v3741
          %v4254 = vadd.f32 %v4253, %v3749
          %v4255 = vadd.f32 %v4254, %v3757
          %v4256 = vadd.f32 %v4255, %v3765
          %v4257 = vadd.f32 %v4256, %v3773
          %v4258 = vadd.f32 %v4257, %v3781
          %v4259 = vadd.f32 %v4258, %v3789
          %v4260 = vrot.slane %v4259, 4
          %v4261 = vadd.f32 %v4259, %v4260
          %v4262 = vrot.slane %v4261, 2
          %v4263 = vadd.f32 %v4261, %v4262
          %v4264 = vrot.slane %v4263, 1
          %v4265 = vadd.f32 %v4263, %v4264
          %v4266 = vadd.f32 %v3670, %v3678
          %v4267 = vadd.f32 %v4266, %v3686
          %v4268 = vadd.f32 %v4267, %v3694
          %v4269 = vadd.f32 %v4268, %v3702
          %v4270 = vadd.f32 %v4269, %v3710
          %v4271 = vadd.f32 %v4270, %v3718
          %v4272 = vadd.f32 %v4271, %v3726
          %v4273 = vadd.f32 %v4272, %v3734
          %v4274 = vadd.f32 %v4273, %v3742
          %v4275 = vadd.f32 %v4274, %v3750
          %v4276 = vadd.f32 %v4275, %v3758
          %v4277 = vadd.f32 %v4276, %v3766
          %v4278 = vadd.f32 %v4277, %v3774
          %v4279 = vadd.f32 %v4278, %v3782
          %v4280 = vadd.f32 %v4279, %v3790
          %v4281 = vrot.slane %v4280, 4
          %v4282 = vadd.f32 %v4280, %v4281
          %v4283 = vrot.slane %v4282, 2
          %v4284 = vadd.f32 %v4282, %v4283
          %v4285 = vrot.slane %v4284, 1
          %v4286 = vadd.f32 %v4284, %v4285
          %v4287 = vadd.f32 %v3671, %v3679
          %v4288 = vadd.f32 %v4287, %v3687
          %v4289 = vadd.f32 %v4288, %v3695
          %v4290 = vadd.f32 %v4289, %v3703
          %v4291 = vadd.f32 %v4290, %v3711
          %v4292 = vadd.f32 %v4291, %v3719
          %v4293 = vadd.f32 %v4292, %v3727
          %v4294 = vadd.f32 %v4293, %v3735
          %v4295 = vadd.f32 %v4294, %v3743
          %v4296 = vadd.f32 %v4295, %v3751
          %v4297 = vadd.f32 %v4296, %v3759
          %v4298 = vadd.f32 %v4297, %v3767
          %v4299 = vadd.f32 %v4298, %v3775
          %v4300 = vadd.f32 %v4299, %v3783
          %v4301 = vadd.f32 %v4300, %v3791
          %v4302 = vrot.slane %v4301, 4
          %v4303 = vadd.f32 %v4301, %v4302
          %v4304 = vrot.slane %v4303, 2
          %v4305 = vadd.f32 %v4303, %v4304
          %v4306 = vrot.slane %v4305, 1
          %v4307 = vadd.f32 %v4305, %v4306
          %v4308 = vadd.f32 %v3672, %v3680
          %v4309 = vadd.f32 %v4308, %v3688
          %v4310 = vadd.f32 %v4309, %v3696
          %v4311 = vadd.f32 %v4310, %v3704
          %v4312 = vadd.f32 %v4311, %v3712
          %v4313 = vadd.f32 %v4312, %v3720
          %v4314 = vadd.f32 %v4313, %v3728
          %v4315 = vadd.f32 %v4314, %v3736
          %v4316 = vadd.f32 %v4315, %v3744
          %v4317 = vadd.f32 %v4316, %v3752
          %v4318 = vadd.f32 %v4317, %v3760
          %v4319 = vadd.f32 %v4318, %v3768
          %v4320 = vadd.f32 %v4319, %v3776
          %v4321 = vadd.f32 %v4320, %v3784
          %v4322 = vadd.f32 %v4321, %v3792
          %v4323 = vrot.slane %v4322, 4
          %v4324 = vadd.f32 %v4322, %v4323
          %v4325 = vrot.slane %v4324, 2
          %v4326 = vadd.f32 %v4324, %v4325
          %v4327 = vrot.slane %v4326, 1
          %v4328 = vadd.f32 %v4326, %v4327
          %v4329 = vadd.f32 %v3673, %v3681
          %v4330 = vadd.f32 %v4329, %v3689
          %v4331 = vadd.f32 %v4330, %v3697
          %v4332 = vadd.f32 %v4331, %v3705
          %v4333 = vadd.f32 %v4332, %v3713
          %v4334 = vadd.f32 %v4333, %v3721
          %v4335 = vadd.f32 %v4334, %v3729
          %v4336 = vadd.f32 %v4335, %v3737
          %v4337 = vadd.f32 %v4336, %v3745
          %v4338 = vadd.f32 %v4337, %v3753
          %v4339 = vadd.f32 %v4338, %v3761
          %v4340 = vadd.f32 %v4339, %v3769
          %v4341 = vadd.f32 %v4340, %v3777
          %v4342 = vadd.f32 %v4341, %v3785
          %v4343 = vadd.f32 %v4342, %v3793
          %v4344 = vrot.slane %v4343, 4
          %v4345 = vadd.f32 %v4343, %v4344
          %v4346 = vrot.slane %v4345, 2
          %v4347 = vadd.f32 %v4345, %v4346
          %v4348 = vrot.slane %v4347, 1
          %v4349 = vadd.f32 %v4347, %v4348
          %v4350 = vadd.f32 %v3674, %v3682
          %v4351 = vadd.f32 %v4350, %v3690
          %v4352 = vadd.f32 %v4351, %v3698
          %v4353 = vadd.f32 %v4352, %v3706
          %v4354 = vadd.f32 %v4353, %v3714
          %v4355 = vadd.f32 %v4354, %v3722
          %v4356 = vadd.f32 %v4355, %v3730
          %v4357 = vadd.f32 %v4356, %v3738
          %v4358 = vadd.f32 %v4357, %v3746
          %v4359 = vadd.f32 %v4358, %v3754
          %v4360 = vadd.f32 %v4359, %v3762
          %v4361 = vadd.f32 %v4360, %v3770
          %v4362 = vadd.f32 %v4361, %v3778
          %v4363 = vadd.f32 %v4362, %v3786
          %v4364 = vadd.f32 %v4363, %v3794
          %v4365 = vrot.slane %v4364, 4
          %v4366 = vadd.f32 %v4364, %v4365
          %v4367 = vrot.slane %v4366, 2
          %v4368 = vadd.f32 %v4366, %v4367
          %v4369 = vrot.slane %v4368, 1
          %v4370 = vadd.f32 %v4368, %v4369
          %v4371 = vadd.f32 %v3675, %v3683
          %v4372 = vadd.f32 %v4371, %v3691
          %v4373 = vadd.f32 %v4372, %v3699
          %v4374 = vadd.f32 %v4373, %v3707
          %v4375 = vadd.f32 %v4374, %v3715
          %v4376 = vadd.f32 %v4375, %v3723
          %v4377 = vadd.f32 %v4376, %v3731
          %v4378 = vadd.f32 %v4377, %v3739
          %v4379 = vadd.f32 %v4378, %v3747
          %v4380 = vadd.f32 %v4379, %v3755
          %v4381 = vadd.f32 %v4380, %v3763
          %v4382 = vadd.f32 %v4381, %v3771
          %v4383 = vadd.f32 %v4382, %v3779
          %v4384 = vadd.f32 %v4383, %v3787
          %v4385 = vadd.f32 %v4384, %v3795
          %v4386 = vrot.slane %v4385, 4
          %v4387 = vadd.f32 %v4385, %v4386
          %v4388 = vrot.slane %v4387, 2
          %v4389 = vadd.f32 %v4387, %v4388
          %v4390 = vrot.slane %v4389, 1
          %v4391 = vadd.f32 %v4389, %v4390
          %v4392 = vadd.f32 %v3676, %v3684
          %v4393 = vadd.f32 %v4392, %v3692
          %v4394 = vadd.f32 %v4393, %v3700
          %v4395 = vadd.f32 %v4394, %v3708
          %v4396 = vadd.f32 %v4395, %v3716
          %v4397 = vadd.f32 %v4396, %v3724
          %v4398 = vadd.f32 %v4397, %v3732
          %v4399 = vadd.f32 %v4398, %v3740
          %v4400 = vadd.f32 %v4399, %v3748
          %v4401 = vadd.f32 %v4400, %v3756
          %v4402 = vadd.f32 %v4401, %v3764
          %v4403 = vadd.f32 %v4402, %v3772
          %v4404 = vadd.f32 %v4403, %v3780
          %v4405 = vadd.f32 %v4404, %v3788
          %v4406 = vadd.f32 %v4405, %v3796
          %v4407 = vrot.slane %v4406, 4
          %v4408 = vadd.f32 %v4406, %v4407
          %v4409 = vrot.slane %v4408, 2
          %v4410 = vadd.f32 %v4408, %v4409
          %v4411 = vrot.slane %v4410, 1
          %v4412 = vadd.f32 %v4410, %v4411
          %v4413 = vmul.f32 %v3669, %v3669
          %v4414 = vmul.f32 %v3670, %v3670
          %v4415 = vmul.f32 %v3671, %v3671
          %v4416 = vmul.f32 %v3672, %v3672
          %v4417 = vmul.f32 %v3673, %v3673
          %v4418 = vmul.f32 %v3674, %v3674
          %v4419 = vmul.f32 %v3675, %v3675
          %v4420 = vmul.f32 %v3676, %v3676
          %v4421 = vmul.f32 %v3677, %v3677
          %v4422 = vmul.f32 %v3678, %v3678
          %v4423 = vmul.f32 %v3679, %v3679
          %v4424 = vmul.f32 %v3680, %v3680
          %v4425 = vmul.f32 %v3681, %v3681
          %v4426 = vmul.f32 %v3682, %v3682
          %v4427 = vmul.f32 %v3683, %v3683
          %v4428 = vmul.f32 %v3684, %v3684
          %v4429 = vmul.f32 %v3685, %v3685
          %v4430 = vmul.f32 %v3686, %v3686
          %v4431 = vmul.f32 %v3687, %v3687
          %v4432 = vmul.f32 %v3688, %v3688
          %v4433 = vmul.f32 %v3689, %v3689
          %v4434 = vmul.f32 %v3690, %v3690
          %v4435 = vmul.f32 %v3691, %v3691
          %v4436 = vmul.f32 %v3692, %v3692
          %v4437 = vmul.f32 %v3693, %v3693
          %v4438 = vmul.f32 %v3694, %v3694
          %v4439 = vmul.f32 %v3695, %v3695
          %v4440 = vmul.f32 %v3696, %v3696
          %v4441 = vmul.f32 %v3697, %v3697
          %v4442 = vmul.f32 %v3698, %v3698
          %v4443 = vmul.f32 %v3699, %v3699
          %v4444 = vmul.f32 %v3700, %v3700
          %v4445 = vmul.f32 %v3701, %v3701
          %v4446 = vmul.f32 %v3702, %v3702
          %v4447 = vmul.f32 %v3703, %v3703
          %v4448 = vmul.f32 %v3704, %v3704
          %v4449 = vmul.f32 %v3705, %v3705
          %v4450 = vmul.f32 %v3706, %v3706
          %v4451 = vmul.f32 %v3707, %v3707
          %v4452 = vmul.f32 %v3708, %v3708
          %v4453 = vmul.f32 %v3709, %v3709
          %v4454 = vmul.f32 %v3710, %v3710
          %v4455 = vmul.f32 %v3711, %v3711
          %v4456 = vmul.f32 %v3712, %v3712
          %v4457 = vmul.f32 %v3713, %v3713
          %v4458 = vmul.f32 %v3714, %v3714
          %v4459 = vmul.f32 %v3715, %v3715
          %v4460 = vmul.f32 %v3716, %v3716
          %v4461 = vmul.f32 %v3717, %v3717
          %v4462 = vmul.f32 %v3718, %v3718
          %v4463 = vmul.f32 %v3719, %v3719
          %v4464 = vmul.f32 %v3720, %v3720
          %v4465 = vmul.f32 %v3721, %v3721
          %v4466 = vmul.f32 %v3722, %v3722
          %v4467 = vmul.f32 %v3723, %v3723
          %v4468 = vmul.f32 %v3724, %v3724
          %v4469 = vmul.f32 %v3725, %v3725
          %v4470 = vmul.f32 %v3726, %v3726
          %v4471 = vmul.f32 %v3727, %v3727
          %v4472 = vmul.f32 %v3728, %v3728
          %v4473 = vmul.f32 %v3729, %v3729
          %v4474 = vmul.f32 %v3730, %v3730
          %v4475 = vmul.f32 %v3731, %v3731
          %v4476 = vmul.f32 %v3732, %v3732
          %v4477 = vmul.f32 %v3733, %v3733
          %v4478 = vmul.f32 %v3734, %v3734
          %v4479 = vmul.f32 %v3735, %v3735
          %v4480 = vmul.f32 %v3736, %v3736
          %v4481 = vmul.f32 %v3737, %v3737
          %v4482 = vmul.f32 %v3738, %v3738
          %v4483 = vmul.f32 %v3739, %v3739
          %v4484 = vmul.f32 %v3740, %v3740
          %v4485 = vmul.f32 %v3741, %v3741
          %v4486 = vmul.f32 %v3742, %v3742
          %v4487 = vmul.f32 %v3743, %v3743
          %v4488 = vmul.f32 %v3744, %v3744
          %v4489 = vmul.f32 %v3745, %v3745
          %v4490 = vmul.f32 %v3746, %v3746
          %v4491 = vmul.f32 %v3747, %v3747
          %v4492 = vmul.f32 %v3748, %v3748
          %v4493 = vmul.f32 %v3749, %v3749
          %v4494 = vmul.f32 %v3750, %v3750
          %v4495 = vmul.f32 %v3751, %v3751
          %v4496 = vmul.f32 %v3752, %v3752
          %v4497 = vmul.f32 %v3753, %v3753
          %v4498 = vmul.f32 %v3754, %v3754
          %v4499 = vmul.f32 %v3755, %v3755
          %v4500 = vmul.f32 %v3756, %v3756
          %v4501 = vmul.f32 %v3757, %v3757
          %v4502 = vmul.f32 %v3758, %v3758
          %v4503 = vmul.f32 %v3759, %v3759
          %v4504 = vmul.f32 %v3760, %v3760
          %v4505 = vmul.f32 %v3761, %v3761
          %v4506 = vmul.f32 %v3762, %v3762
          %v4507 = vmul.f32 %v3763, %v3763
          %v4508 = vmul.f32 %v3764, %v3764
          %v4509 = vmul.f32 %v3765, %v3765
          %v4510 = vmul.f32 %v3766, %v3766
          %v4511 = vmul.f32 %v3767, %v3767
          %v4512 = vmul.f32 %v3768, %v3768
          %v4513 = vmul.f32 %v3769, %v3769
          %v4514 = vmul.f32 %v3770, %v3770
          %v4515 = vmul.f32 %v3771, %v3771
          %v4516 = vmul.f32 %v3772, %v3772
          %v4517 = vmul.f32 %v3773, %v3773
          %v4518 = vmul.f32 %v3774, %v3774
          %v4519 = vmul.f32 %v3775, %v3775
          %v4520 = vmul.f32 %v3776, %v3776
          %v4521 = vmul.f32 %v3777, %v3777
          %v4522 = vmul.f32 %v3778, %v3778
          %v4523 = vmul.f32 %v3779, %v3779
          %v4524 = vmul.f32 %v3780, %v3780
          %v4525 = vmul.f32 %v3781, %v3781
          %v4526 = vmul.f32 %v3782, %v3782
          %v4527 = vmul.f32 %v3783, %v3783
          %v4528 = vmul.f32 %v3784, %v3784
          %v4529 = vmul.f32 %v3785, %v3785
          %v4530 = vmul.f32 %v3786, %v3786
          %v4531 = vmul.f32 %v3787, %v3787
          %v4532 = vmul.f32 %v3788, %v3788
          %v4533 = vmul.f32 %v3789, %v3789
          %v4534 = vmul.f32 %v3790, %v3790
          %v4535 = vmul.f32 %v3791, %v3791
          %v4536 = vmul.f32 %v3792, %v3792
          %v4537 = vmul.f32 %v3793, %v3793
          %v4538 = vmul.f32 %v3794, %v3794
          %v4539 = vmul.f32 %v3795, %v3795
          %v4540 = vmul.f32 %v3796, %v3796
          %v4541 = vadd.f32 %v4413, %v4421
          %v4542 = vadd.f32 %v4541, %v4429
          %v4543 = vadd.f32 %v4542, %v4437
          %v4544 = vadd.f32 %v4543, %v4445
          %v4545 = vadd.f32 %v4544, %v4453
          %v4546 = vadd.f32 %v4545, %v4461
          %v4547 = vadd.f32 %v4546, %v4469
          %v4548 = vadd.f32 %v4547, %v4477
          %v4549 = vadd.f32 %v4548, %v4485
          %v4550 = vadd.f32 %v4549, %v4493
          %v4551 = vadd.f32 %v4550, %v4501
          %v4552 = vadd.f32 %v4551, %v4509
          %v4553 = vadd.f32 %v4552, %v4517
          %v4554 = vadd.f32 %v4553, %v4525
          %v4555 = vadd.f32 %v4554, %v4533
          %v4556 = vrot.slane %v4555, 4
          %v4557 = vadd.f32 %v4555, %v4556
          %v4558 = vrot.slane %v4557, 2
          %v4559 = vadd.f32 %v4557, %v4558
          %v4560 = vrot.slane %v4559, 1
          %v4561 = vadd.f32 %v4559, %v4560
          %v4562 = vadd.f32 %v4414, %v4422
          %v4563 = vadd.f32 %v4562, %v4430
          %v4564 = vadd.f32 %v4563, %v4438
          %v4565 = vadd.f32 %v4564, %v4446
          %v4566 = vadd.f32 %v4565, %v4454
          %v4567 = vadd.f32 %v4566, %v4462
          %v4568 = vadd.f32 %v4567, %v4470
          %v4569 = vadd.f32 %v4568, %v4478
          %v4570 = vadd.f32 %v4569, %v4486
          %v4571 = vadd.f32 %v4570, %v4494
          %v4572 = vadd.f32 %v4571, %v4502
          %v4573 = vadd.f32 %v4572, %v4510
          %v4574 = vadd.f32 %v4573, %v4518
          %v4575 = vadd.f32 %v4574, %v4526
          %v4576 = vadd.f32 %v4575, %v4534
          %v4577 = vrot.slane %v4576, 4
          %v4578 = vadd.f32 %v4576, %v4577
          %v4579 = vrot.slane %v4578, 2
          %v4580 = vadd.f32 %v4578, %v4579
          %v4581 = vrot.slane %v4580, 1
          %v4582 = vadd.f32 %v4580, %v4581
          %v4583 = vadd.f32 %v4415, %v4423
          %v4584 = vadd.f32 %v4583, %v4431
          %v4585 = vadd.f32 %v4584, %v4439
          %v4586 = vadd.f32 %v4585, %v4447
          %v4587 = vadd.f32 %v4586, %v4455
          %v4588 = vadd.f32 %v4587, %v4463
          %v4589 = vadd.f32 %v4588, %v4471
          %v4590 = vadd.f32 %v4589, %v4479
          %v4591 = vadd.f32 %v4590, %v4487
          %v4592 = vadd.f32 %v4591, %v4495
          %v4593 = vadd.f32 %v4592, %v4503
          %v4594 = vadd.f32 %v4593, %v4511
          %v4595 = vadd.f32 %v4594, %v4519
          %v4596 = vadd.f32 %v4595, %v4527
          %v4597 = vadd.f32 %v4596, %v4535
          %v4598 = vrot.slane %v4597, 4
          %v4599 = vadd.f32 %v4597, %v4598
          %v4600 = vrot.slane %v4599, 2
          %v4601 = vadd.f32 %v4599, %v4600
          %v4602 = vrot.slane %v4601, 1
          %v4603 = vadd.f32 %v4601, %v4602
          %v4604 = vadd.f32 %v4416, %v4424
          %v4605 = vadd.f32 %v4604, %v4432
          %v4606 = vadd.f32 %v4605, %v4440
          %v4607 = vadd.f32 %v4606, %v4448
          %v4608 = vadd.f32 %v4607, %v4456
          %v4609 = vadd.f32 %v4608, %v4464
          %v4610 = vadd.f32 %v4609, %v4472
          %v4611 = vadd.f32 %v4610, %v4480
          %v4612 = vadd.f32 %v4611, %v4488
          %v4613 = vadd.f32 %v4612, %v4496
          %v4614 = vadd.f32 %v4613, %v4504
          %v4615 = vadd.f32 %v4614, %v4512
          %v4616 = vadd.f32 %v4615, %v4520
          %v4617 = vadd.f32 %v4616, %v4528
          %v4618 = vadd.f32 %v4617, %v4536
          %v4619 = vrot.slane %v4618, 4
          %v4620 = vadd.f32 %v4618, %v4619
          %v4621 = vrot.slane %v4620, 2
          %v4622 = vadd.f32 %v4620, %v4621
          %v4623 = vrot.slane %v4622, 1
          %v4624 = vadd.f32 %v4622, %v4623
          %v4625 = vadd.f32 %v4417, %v4425
          %v4626 = vadd.f32 %v4625, %v4433
          %v4627 = vadd.f32 %v4626, %v4441
          %v4628 = vadd.f32 %v4627, %v4449
          %v4629 = vadd.f32 %v4628, %v4457
          %v4630 = vadd.f32 %v4629, %v4465
          %v4631 = vadd.f32 %v4630, %v4473
          %v4632 = vadd.f32 %v4631, %v4481
          %v4633 = vadd.f32 %v4632, %v4489
          %v4634 = vadd.f32 %v4633, %v4497
          %v4635 = vadd.f32 %v4634, %v4505
          %v4636 = vadd.f32 %v4635, %v4513
          %v4637 = vadd.f32 %v4636, %v4521
          %v4638 = vadd.f32 %v4637, %v4529
          %v4639 = vadd.f32 %v4638, %v4537
          %v4640 = vrot.slane %v4639, 4
          %v4641 = vadd.f32 %v4639, %v4640
          %v4642 = vrot.slane %v4641, 2
          %v4643 = vadd.f32 %v4641, %v4642
          %v4644 = vrot.slane %v4643, 1
          %v4645 = vadd.f32 %v4643, %v4644
          %v4646 = vadd.f32 %v4418, %v4426
          %v4647 = vadd.f32 %v4646, %v4434
          %v4648 = vadd.f32 %v4647, %v4442
          %v4649 = vadd.f32 %v4648, %v4450
          %v4650 = vadd.f32 %v4649, %v4458
          %v4651 = vadd.f32 %v4650, %v4466
          %v4652 = vadd.f32 %v4651, %v4474
          %v4653 = vadd.f32 %v4652, %v4482
          %v4654 = vadd.f32 %v4653, %v4490
          %v4655 = vadd.f32 %v4654, %v4498
          %v4656 = vadd.f32 %v4655, %v4506
          %v4657 = vadd.f32 %v4656, %v4514
          %v4658 = vadd.f32 %v4657, %v4522
          %v4659 = vadd.f32 %v4658, %v4530
          %v4660 = vadd.f32 %v4659, %v4538
          %v4661 = vrot.slane %v4660, 4
          %v4662 = vadd.f32 %v4660, %v4661
          %v4663 = vrot.slane %v4662, 2
          %v4664 = vadd.f32 %v4662, %v4663
          %v4665 = vrot.slane %v4664, 1
          %v4666 = vadd.f32 %v4664, %v4665
          %v4667 = vadd.f32 %v4419, %v4427
          %v4668 = vadd.f32 %v4667, %v4435
          %v4669 = vadd.f32 %v4668, %v4443
          %v4670 = vadd.f32 %v4669, %v4451
          %v4671 = vadd.f32 %v4670, %v4459
          %v4672 = vadd.f32 %v4671, %v4467
          %v4673 = vadd.f32 %v4672, %v4475
          %v4674 = vadd.f32 %v4673, %v4483
          %v4675 = vadd.f32 %v4674, %v4491
          %v4676 = vadd.f32 %v4675, %v4499
          %v4677 = vadd.f32 %v4676, %v4507
          %v4678 = vadd.f32 %v4677, %v4515
          %v4679 = vadd.f32 %v4678, %v4523
          %v4680 = vadd.f32 %v4679, %v4531
          %v4681 = vadd.f32 %v4680, %v4539
          %v4682 = vrot.slane %v4681, 4
          %v4683 = vadd.f32 %v4681, %v4682
          %v4684 = vrot.slane %v4683, 2
          %v4685 = vadd.f32 %v4683, %v4684
          %v4686 = vrot.slane %v4685, 1
          %v4687 = vadd.f32 %v4685, %v4686
          %v4688 = vadd.f32 %v4420, %v4428
          %v4689 = vadd.f32 %v4688, %v4436
          %v4690 = vadd.f32 %v4689, %v4444
          %v4691 = vadd.f32 %v4690, %v4452
          %v4692 = vadd.f32 %v4691, %v4460
          %v4693 = vadd.f32 %v4692, %v4468
          %v4694 = vadd.f32 %v4693, %v4476
          %v4695 = vadd.f32 %v4694, %v4484
          %v4696 = vadd.f32 %v4695, %v4492
          %v4697 = vadd.f32 %v4696, %v4500
          %v4698 = vadd.f32 %v4697, %v4508
          %v4699 = vadd.f32 %v4698, %v4516
          %v4700 = vadd.f32 %v4699, %v4524
          %v4701 = vadd.f32 %v4700, %v4532
          %v4702 = vadd.f32 %v4701, %v4540
          %v4703 = vrot.slane %v4702, 4
          %v4704 = vadd.f32 %v4702, %v4703
          %v4705 = vrot.slane %v4704, 2
          %v4706 = vadd.f32 %v4704, %v4705
          %v4707 = vrot.slane %v4706, 1
          %v4708 = vadd.f32 %v4706, %v4707
          %v4709 = vlaneseq
          %v4710 = vshrl.u32 %v4709, 7
          %vm4711 = vcmp.eq.s32.totalorder %v4710, 0
          %v4712 = vsel %vm4711, %v4265, 0.0
          %v4713 = vsel %vm4711, %v4286, 0.0
          %v4714 = vsel %vm4711, %v4307, 0.0
          %v4715 = vsel %vm4711, %v4328, 0.0
          %v4716 = vsel %vm4711, %v4349, 0.0
          %v4717 = vsel %vm4711, %v4370, 0.0
          %v4718 = vsel %vm4711, %v4391, 0.0
          %v4719 = vsel %vm4711, %v4412, 0.0
          %4720 = vst [vmem:[%s331] sm:$0xff] %v4712
          %4721 = vst [vmem:[%s331 + $0x8] sm:$0xff] %v4713
          %4722 = vst [vmem:[%s331 + $0x10] sm:$0xff] %v4714
          %4723 = vst [vmem:[%s331 + $0x18] sm:$0xff] %v4715
          %4724 = vst [vmem:[%s331 + $0x20] sm:$0xff] %v4716
          %4725 = vst [vmem:[%s331 + $0x28] sm:$0xff] %v4717
          %4726 = vst [vmem:[%s331 + $0x30] sm:$0xff] %v4718
          %4727 = vst [vmem:[%s331 + $0x38] sm:$0xff] %v4719
          %v4728 = vsel %vm4711, %v4561, 0.0
          %v4729 = vsel %vm4711, %v4582, 0.0
          %v4730 = vsel %vm4711, %v4603, 0.0
          %v4731 = vsel %vm4711, %v4624, 0.0
          %v4732 = vsel %vm4711, %v4645, 0.0
          %v4733 = vsel %vm4711, %v4666, 0.0
          %v4734 = vsel %vm4711, %v4687, 0.0
          %v4735 = vsel %vm4711, %v4708, 0.0
          %4736 = vst [vmem:[%s338] sm:$0xff] %v4728
          %4737 = vst [vmem:[%s338 + $0x8] sm:$0xff] %v4729
          %4738 = vst [vmem:[%s338 + $0x10] sm:$0xff] %v4730
          %4739 = vst [vmem:[%s338 + $0x18] sm:$0xff] %v4731
          %4740 = vst [vmem:[%s338 + $0x20] sm:$0xff] %v4732
          %4741 = vst [vmem:[%s338 + $0x28] sm:$0xff] %v4733
          %4742 = vst [vmem:[%s338 + $0x30] sm:$0xff] %v4734
          %4743 = vst [vmem:[%s338 + $0x38] sm:$0xff] %v4735
        $region52: #{tpu_custom_call.1} parent=31 // pred_fallthru
          _
        %s4744 = sand.u32 %s138, 1
        %s4745 = scalar_lea.sflag [#allocation5], %s4744
        %s4746 = sand.u32 %s138, 1
        %s4747 = smul.addr %s4746, 512
        %s4748 = scalar_lea.vmem [#allocation9], %s4747
        %s4749 = sand.u32 %s27, 1
        %s4750 = scalar_lea.sflag [#allocation11], %s4749
        %s4751 = sand.u32 %s166, 1
        %s4752 = smul.addr %s4751, 64
        %s4753 = scalar_lea.vmem [#allocation10], %s4752
        %s4754 = sand.u32 %s27, 1
        %s4755 = scalar_lea.sflag [#allocation11], %s4754
        %s4756 = sand.u32 %s194, 1
        %s4757 = smul.addr %s4756, 64
        %s4758 = scalar_lea.vmem [#allocation12], %s4757
        // Predicated region
        $region53: #{tpu_custom_call.1} parent=31 // pred_check
          %p4759 = pneg %p148
        $region54: #{tpu_custom_call.1} parent=31 // pred_check_branch
          %4761 = sbr.rel (%p4759) target = $region56
        $region55: #{tpu_custom_call.1} parent=31 // pred_region
          %s4762 = smul.u32 16, %s32
          %s4763 = smul.u32 8, %s33
          %s4765 = ssub.s32 8192, 8192
          %4766 = vsyncadd %s4745, %s4765
          %s4767 = smul.addr %s4762, 8
          %s4768 = sadd.s32 %s4763, %s4767
          %s4769 = smul.addr %s4768, 64
          %s4770 = scalar_lea.hbm %s3, %s4769
          %s4771 = sshll.u32 %s4748, 4
          %s4772 = int_to_ptr.vmem [resolvable:$true] %s4771
          %4777 = dma.vmem_to_hbm [thread:$0]  %s4772, 8192, %s4770, %s4745, 512, 512, 32
        $region56: #{tpu_custom_call.1} parent=31 // pred_fallthru
          _
        // Predicated region
        $region57: #{tpu_custom_call.1} parent=31 // pred_check
          %p4778 = pneg %p176
        $region58: #{tpu_custom_call.1} parent=31 // pred_check_branch
          %4780 = sbr.rel (%p4778) target = $region60
        $region59: #{tpu_custom_call.1} parent=31 // pred_region
          %s4781 = smul.u32 8, %s33
          %s4783 = ssub.s32 1024, 1024
          %4784 = vsyncadd %s4750, %s4783
          %s4785 = smul.addr %s32, 8
          %s4786 = sadd.s32 %s4781, %s4785
          %s4787 = smul.addr %s4786, 128
          %s4788 = scalar_lea.hbm %s4, %s4787
          %s4790 = sshll.u32 %s4753, 4
          %s4791 = int_to_ptr.vmem [resolvable:$true] %s4790
          %4793 = dma.vmem_to_hbm [thread:$0]  %s4791, 1024, %s4788, %s4750
        $region60: #{tpu_custom_call.1} parent=31 // pred_fallthru
          _
        // Predicated region
        $region61: #{tpu_custom_call.1} parent=31 // pred_check
          %p4794 = pneg %p204
        $region62: #{tpu_custom_call.1} parent=31 // pred_check_branch
          %4796 = sbr.rel (%p4794) target = $region64
        $region63: #{tpu_custom_call.1} parent=31 // pred_region
          %s4797 = smul.u32 8, %s33
          %s4799 = ssub.s32 1024, 1024
          %4800 = vsyncadd %s4755, %s4799
          %s4801 = smul.addr %s32, 8
          %s4802 = sadd.s32 %s4797, %s4801
          %s4803 = smul.addr %s4802, 128
          %s4804 = scalar_lea.hbm %s5, %s4803
          %s4806 = sshll.u32 %s4758, 4
          %s4807 = int_to_ptr.vmem [resolvable:$true] %s4806
          %4809 = dma.vmem_to_hbm [thread:$0]  %s4807, 1024, %s4804, %s4755
        $region64: #{tpu_custom_call.1} parent=31 // pred_fallthru
          _
      $region32: #{tpu_custom_call.1} parent=5 // pred_fallthru
        _
      %p4810 = scmp.le.s32.totalorder 2, %s22
      // Predicated region
      $region65: #{tpu_custom_call.1} parent=5 // pred_check
        %p4811 = pneg %p4810
      $region66: #{tpu_custom_call.1} parent=5 // pred_check_branch
        %4813 = sbr.rel (%p4811) target = $region68
      $region67: #{tpu_custom_call.1} parent=5 // pred_region
        %s4814 = ssub.s32 %s22, 2
        // Predicated region
        $region69: #{tpu_custom_call.1} parent=67 // pred_check
          %p4815 = pneg %p154
        $region70: #{tpu_custom_call.1} parent=67 // pred_check_branch
          %4817 = sbr.rel (%p4815) target = $region72
        $region71: #{tpu_custom_call.1} parent=67 // pred_region
          %s4818 = sand.u32 %s139, 1
          %s4819 = scalar_lea.sflag [#allocation5], %s4818
          %s4820 = sand.u32 %s139, 1
          %s4821 = smul.addr %s4820, 512
          %s4822 = scalar_lea.vmem [#allocation9], %s4821
          %4823 = dma.done %s4819, 8192
        $region72: #{tpu_custom_call.1} parent=67 // pred_fallthru
          _
        // Predicated region
        $region73: #{tpu_custom_call.1} parent=67 // pred_check
          %p4824 = pneg %p182
        $region74: #{tpu_custom_call.1} parent=67 // pred_check_branch
          %4826 = sbr.rel (%p4824) target = $region76
        $region75: #{tpu_custom_call.1} parent=67 // pred_region
          %s4827 = sand.u32 %s28, 1
          %s4828 = scalar_lea.sflag [#allocation11], %s4827
          %s4829 = sand.u32 %s167, 1
          %s4830 = smul.addr %s4829, 64
          %s4831 = scalar_lea.vmem [#allocation10], %s4830
          %4832 = dma.done %s4828, 1024
        $region76: #{tpu_custom_call.1} parent=67 // pred_fallthru
          _
        // Predicated region
        $region77: #{tpu_custom_call.1} parent=67 // pred_check
          %p4833 = pneg %p210
        $region78: #{tpu_custom_call.1} parent=67 // pred_check_branch
          %4835 = sbr.rel (%p4833) target = $region80
        $region79: #{tpu_custom_call.1} parent=67 // pred_region
          %s4836 = sand.u32 %s28, 1
          %s4837 = scalar_lea.sflag [#allocation11], %s4836
          %s4838 = sand.u32 %s195, 1
          %s4839 = smul.addr %s4838, 64
          %s4840 = scalar_lea.vmem [#allocation12], %s4839
          %4841 = dma.done %s4837, 1024
        $region80: #{tpu_custom_call.1} parent=67 // pred_fallthru
          _
      $region68: #{tpu_custom_call.1} parent=5 // pred_fallthru
        _
    $region6: #{tpu_custom_call.1} parent=1 // loop_footer
      %s26 = sadd.s32 1, %s22
    $region7: #{tpu_custom_call.1} parent=1 // loop_footer_branch
      %21 = sbr.rel target = $region3
    $region8: #{tpu_custom_call.1} parent=1 // loop_exit
      _
    %4842 = vsyncpa [#allocation4], 1
    %s4843 = scalar_lea.sflag [#allocation4], 1
    %4844 = vsyncpa %s4843, 1
    %4845 = vsyncpa [#allocation7], 1
    %4846 = vsyncpa [#allocation5], 1
    %s4847 = scalar_lea.sflag [#allocation5], 1
    %4848 = vsyncpa %s4847, 1
    %4849 = vsyncpa [#allocation11], 1
    %s4850 = scalar_lea.sflag [#allocation11], 1
    %4851 = vsyncpa %s4850, 1

</llo_original>
